<compile_context>
chip_gen: v7x
topology: tpu7x:2x2x1
jax: 0.10.0
libtpu: 0.0.40
codegen_flags: <defaults>
</compile_context>

<pallas_src>
import jax
import jax.numpy as jnp
from jax.experimental import pallas as pl
from jax.experimental.pallas import tpu as pltpu

# ----------------------------- configuration --------------------------------
N = 2
C_IN = 64
H_IN, W_IN = 33, 45
POOL_K = 8
PAD_H, PAD_W = 4, 2
PH = (H_IN + 2 * PAD_H - POOL_K) // POOL_K + 1   # 5
PW = (W_IN + 2 * PAD_W - POOL_K) // POOL_K + 1   # 6
HIDDEN = 128
K_FC = C_IN * PH * PW                            # 1920
UP_H, UP_W = 33, 45                              # UpsamplingBilinear2d target


def _h_range(ph):
    s = POOL_K * ph - PAD_H
    return max(0, s), min(H_IN, s + POOL_K)


def _w_range(pw):
    s = POOL_K * pw - PAD_W
    return max(0, s), min(W_IN, s + POOL_K)


# -------------------- fused pool + FC + ReLU + 1x1-conv ----------------------
def _fused_kernel(x_ref, w1_ref, b1_ref, w2_ref, b2_ref, o_ref):
    # x_ref : (1, H_IN, W_IN, C_IN) f32   -- one NHWC image
    # w1_ref: (PH, PW, C_IN, HIDDEN) bf16 -- global_fc weight, window-major
    # b1_ref: (1, HIDDEN) f32
    # w2_ref: (HIDDEN, HIDDEN) bf16       -- conv1 (1x1) weight, transposed
    # b2_ref: (1, HIDDEN) f32
    # o_ref : (1, 1, HIDDEN) f32
    inv = 1.0 / (POOL_K * POOL_K)                       # count_include_pad=True
    acc = jnp.zeros((1, HIDDEN), jnp.float32)

    for ph in range(PH):
        r0, r1 = _h_range(ph)
        # Sum the valid rows of this H-window (padded rows are zero => skipped).
        hsum = x_ref[0, r0, :, :]                       # (W_IN, C_IN)
        for r in range(r0 + 1, r1):
            hsum = hsum + x_ref[0, r, :, :]
        for pw in range(PW):
            c0, c1 = _w_range(pw)
            # Average of the 8x8 window (only valid cols contribute).
            wsum = jnp.sum(hsum[c0:c1, :], axis=0, keepdims=True) * inv  # (1, C)
            # global_fc contribution of this pooled position.
            acc = acc + jnp.dot(wsum.astype(jnp.bfloat16), w1_ref[ph, pw],
                                preferred_element_type=jnp.float32)      # (1, HIDDEN)

    h = jnp.maximum(acc + b1_ref[...], 0.0)             # ReLU(global_fc)
    y = jnp.dot(h.astype(jnp.bfloat16), w2_ref[...],
                preferred_element_type=jnp.float32) + b2_ref[...]        # conv1 (1x1)
    o_ref[0] = y.astype(o_ref.dtype)


def fused_forward(x_nhwc, w1r, b1, w2t, b2):
    out = pl.pallas_call(
        _fused_kernel,
        out_shape=jax.ShapeDtypeStruct((N, 1, HIDDEN), jnp.float32),
        grid_spec=pltpu.PrefetchScalarGridSpec(
            num_scalar_prefetch=0,
            grid=(N,),
            in_specs=[
                pl.BlockSpec((1, H_IN, W_IN, C_IN), lambda n: (n, 0, 0, 0)),
                pl.BlockSpec((PH, PW, C_IN, HIDDEN), lambda n: (0, 0, 0, 0)),
                pl.BlockSpec((1, HIDDEN), lambda n: (0, 0)),
                pl.BlockSpec((HIDDEN, HIDDEN), lambda n: (0, 0)),
                pl.BlockSpec((1, HIDDEN), lambda n: (0, 0)),
            ],
            out_specs=pl.BlockSpec((1, 1, HIDDEN), lambda n: (n, 0, 0)),
        ),
        compiler_params=pltpu.CompilerParams(
            dimension_semantics=("parallel",)),   # batch shards across TCs on v7x
    )(x_nhwc, w1r, b1, w2t, b2)
    return out.reshape(N, HIDDEN)


# ------------------------------ full forward ---------------------------------
@jax.jit
def full_image_encoder(x_nchw, kparams):
    # x1 = AvgPool2d(8, stride=8, padding=(4, 2))(x)         [in-kernel]
    # x2 = Dropout2d(p=0.5)(x1): identity in eval/inference mode.
    # TODO(synk): train-mode Dropout2d (stochastic channel masking) not implemented.
    # x3 = x2.view(-1, C*PH*PW); x4 = relu(global_fc(x3)); x5 = conv1(x4)  [in-kernel]
    x_nhwc = jnp.transpose(x_nchw, (0, 2, 3, 1))
    y = fused_forward(x_nhwc, kparams["w1r"], kparams["b1r"],
                      kparams["w2t"], kparams["b2r"])          # (N, HIDDEN)
    # out = UpsamplingBilinear2d(size=(33, 45)) of a 1x1 map == constant broadcast
    return jnp.broadcast_to(y[:, :, None, None], (N, HIDDEN, UP_H, UP_W))


# ------------------------- params & pure-JAX reference -----------------------
def init_params(key):
    """PyTorch-layout float32 parameters (nn.Linear / nn.Conv2d conventions)."""
    k1, k2, k3, k4 = jax.random.split(key, 4)
    w1 = jax.random.normal(k1, (HIDDEN, K_FC), jnp.float32) * 0.02     # Linear (out, in)
    b1 = jax.random.normal(k2, (HIDDEN,), jnp.float32) * 0.02
    w2 = jax.random.normal(k3, (HIDDEN, HIDDEN), jnp.float32) * 0.05   # Conv2d 1x1 (out, in)
    b2 = jax.random.normal(k4, (HIDDEN,), jnp.float32) * 0.02
    return {"w1": w1, "b1": b1, "w2": w2, "b2": b2}


def prepare_kernel_params(p):
    """Permute / transpose / bf16-cast the module weights for the kernel."""
    # w1[o, k] with k = c*(PH*PW) + ph*PW + pw  ->  w1r[ph, pw, c, o]
    w1_4d = p["w1"].reshape(HIDDEN, C_IN, PH, PW)
    w1r = jnp.transpose(w1_4d, (2, 3, 1, 0)).astype(jnp.bfloat16)
    return {"w1r": w1r,
            "b1r": p["b1"][None, :],
            "w2t": p["w2"].T.astype(jnp.bfloat16),
            "b2r": p["b2"][None, :]}


def reference(x_nchw, p):
    xp = jnp.pad(x_nchw, ((0, 0), (0, 0), (PAD_H, PAD_H), (PAD_W, PAD_W)))
    xp = xp[:, :, :PH * POOL_K, :PW * POOL_K]
    pooled = xp.reshape(N, C_IN, PH, POOL_K, PW, POOL_K).mean(axis=(3, 5))
    x3 = pooled.reshape(N, K_FC)                       # PyTorch (c, ph, pw) flatten
    h = jnp.maximum(x3 @ p["w1"].T + p["b1"][None, :], 0.0)
    y = h @ p["w2"].T + p["b2"][None, :]
    return jnp.broadcast_to(y[:, :, None, None], (N, HIDDEN, UP_H, UP_W))


if __name__ == "__main__":
    key = jax.random.PRNGKey(0)
    kx, kp = jax.random.split(key)
    x = jax.random.normal(kx, (N, C_IN, H_IN, W_IN), jnp.float32)
    params = init_params(kp)
    kparams = prepare_kernel_params(params)

    out = jax.block_until_ready(full_image_encoder(x, kparams))
    ref = jax.block_until_ready(reference(x, params))

    assert out.shape == (N, HIDDEN, UP_H, UP_W), out.shape
    assert out.dtype == jnp.float32
    assert jnp.allclose(out, ref, rtol=1e-2, atol=1e-2), "mismatch vs reference"
    print("KERNEL_OK")
</pallas_src>

<mosaic_0001>
module attributes {stable_mosaic.version = 11 : i64} {
  func.func @_fused_kernel(%arg0: i32, %arg1: memref<1x33x45x64xf32, #tpu.memory_space<vmem>>, %arg2: memref<5x6x64x128xbf16, #tpu.memory_space<vmem>>, %arg3: memref<1x128xf32, #tpu.memory_space<vmem>>, %arg4: memref<128x128xbf16, #tpu.memory_space<vmem>>, %arg5: memref<1x128xf32, #tpu.memory_space<vmem>>, %arg6: memref<1x1x128xf32, #tpu.memory_space<vmem>>) attributes {dimension_semantics = [#tpu.dimension_semantics<parallel>], iteration_bounds = array<i64: 2>, scalar_prefetch = 0 : i64, scratch_operands = 0 : i64, tpu.core_type = #tpu.core_type<tc>, window_params = [{transform_indices = @transform_0, window_bounds = array<i64: 1, 33, 45, 64>}, {pipeline_mode = #tpu.pipeline_mode<synchronous>, transform_indices = @transform_1, window_bounds = array<i64: 5, 6, 64, 128>}, {pipeline_mode = #tpu.pipeline_mode<synchronous>, transform_indices = @transform_2, window_bounds = array<i64: 1, 128>}, {pipeline_mode = #tpu.pipeline_mode<synchronous>, transform_indices = @transform_3, window_bounds = array<i64: 128, 128>}, {pipeline_mode = #tpu.pipeline_mode<synchronous>, transform_indices = @transform_4, window_bounds = array<i64: 1, 128>}, {transform_indices = @transform_5, window_bounds = array<i64: 1, 1, 128>}]} {
    %cst = arith.constant 0.000000e+00 : f32
    %0 = vector.broadcast %cst : f32 to vector<1x128xf32>
    %c0 = arith.constant 0 : index
    %c0_0 = arith.constant 0 : index
    %c0_1 = arith.constant 0 : index
    %c0_2 = arith.constant 0 : index
    %1 = vector.load %arg1[%c0, %c0_0, %c0_1, %c0_2] : memref<1x33x45x64xf32, #tpu.memory_space<vmem>>, vector<1x1x45x64xf32>
    %2 = vector.shape_cast %1 : vector<1x1x45x64xf32> to vector<45x64xf32>
    %c0_3 = arith.constant 0 : index
    %c1 = arith.constant 1 : index
    %c0_4 = arith.constant 0 : index
    %c0_5 = arith.constant 0 : index
    %3 = vector.load %arg1[%c0_3, %c1, %c0_4, %c0_5] : memref<1x33x45x64xf32, #tpu.memory_space<vmem>>, vector<1x1x45x64xf32>
    %4 = vector.shape_cast %3 : vector<1x1x45x64xf32> to vector<45x64xf32>
    %5 = arith.addf %2, %4 : vector<45x64xf32>
    %c0_6 = arith.constant 0 : index
    %c2 = arith.constant 2 : index
    %c0_7 = arith.constant 0 : index
    %c0_8 = arith.constant 0 : index
    %6 = vector.load %arg1[%c0_6, %c2, %c0_7, %c0_8] : memref<1x33x45x64xf32, #tpu.memory_space<vmem>>, vector<1x1x45x64xf32>
    %7 = vector.shape_cast %6 : vector<1x1x45x64xf32> to vector<45x64xf32>
    %8 = arith.addf %5, %7 : vector<45x64xf32>
    %c0_9 = arith.constant 0 : index
    %c3 = arith.constant 3 : index
    %c0_10 = arith.constant 0 : index
    %c0_11 = arith.constant 0 : index
    %9 = vector.load %arg1[%c0_9, %c3, %c0_10, %c0_11] : memref<1x33x45x64xf32, #tpu.memory_space<vmem>>, vector<1x1x45x64xf32>
    %10 = vector.shape_cast %9 : vector<1x1x45x64xf32> to vector<45x64xf32>
    %11 = arith.addf %8, %10 : vector<45x64xf32>
    %12 = vector.extract_strided_slice %11 {offsets = [0, 0], sizes = [6, 64], strides = [1, 1]} : vector<45x64xf32> to vector<6x64xf32>
    %cst_12 = arith.constant dense<0.000000e+00> : vector<64xf32>
    %13 = vector.multi_reduction <add>, %12, %cst_12 [0] : vector<6x64xf32> to vector<64xf32>
    %14 = vector.shape_cast %13 : vector<64xf32> to vector<1x64xf32>
    %cst_13 = arith.constant 1.562500e-02 : f32
    %15 = vector.broadcast %cst_13 : f32 to vector<1x64xf32>
    %16 = arith.mulf %14, %15 : vector<1x64xf32>
    %17 = arith.truncf %16 : vector<1x64xf32> to vector<1x64xbf16>
    %c0_14 = arith.constant 0 : index
    %c0_15 = arith.constant 0 : index
    %c0_16 = arith.constant 0 : index
    %c0_17 = arith.constant 0 : index
    %18 = vector.load %arg2[%c0_14, %c0_15, %c0_16, %c0_17] : memref<5x6x64x128xbf16, #tpu.memory_space<vmem>>, vector<1x1x64x128xbf16>
    %19 = vector.shape_cast %18 : vector<1x1x64x128xbf16> to vector<64x128xbf16>
    %cst_18 = arith.constant dense<0.000000e+00> : vector<1x128xf32>
    %20 = tpu.matmul %17, %19, %cst_18 {dimension_numbers = #tpu.dot_dimension_numbers<[1], [0], [0], [1], [0, 0, 1, 1], [], []>} : vector<1x64xbf16>, vector<64x128xbf16>, vector<1x128xf32> -> vector<1x128xf32>
    %21 = arith.addf %0, %20 : vector<1x128xf32>
    %22 = vector.extract_strided_slice %11 {offsets = [6, 0], sizes = [8, 64], strides = [1, 1]} : vector<45x64xf32> to vector<8x64xf32>
    %cst_19 = arith.constant dense<0.000000e+00> : vector<64xf32>
    %23 = vector.multi_reduction <add>, %22, %cst_19 [0] : vector<8x64xf32> to vector<64xf32>
    %24 = vector.shape_cast %23 : vector<64xf32> to vector<1x64xf32>
    %cst_20 = arith.constant 1.562500e-02 : f32
    %25 = vector.broadcast %cst_20 : f32 to vector<1x64xf32>
    %26 = arith.mulf %24, %25 : vector<1x64xf32>
    %27 = arith.truncf %26 : vector<1x64xf32> to vector<1x64xbf16>
    %c0_21 = arith.constant 0 : index
    %c1_22 = arith.constant 1 : index
    %c0_23 = arith.constant 0 : index
    %c0_24 = arith.constant 0 : index
    %28 = vector.load %arg2[%c0_21, %c1_22, %c0_23, %c0_24] : memref<5x6x64x128xbf16, #tpu.memory_space<vmem>>, vector<1x1x64x128xbf16>
    %29 = vector.shape_cast %28 : vector<1x1x64x128xbf16> to vector<64x128xbf16>
    %cst_25 = arith.constant dense<0.000000e+00> : vector<1x128xf32>
    %30 = tpu.matmul %27, %29, %cst_25 {dimension_numbers = #tpu.dot_dimension_numbers<[1], [0], [0], [1], [0, 0, 1, 1], [], []>} : vector<1x64xbf16>, vector<64x128xbf16>, vector<1x128xf32> -> vector<1x128xf32>
    %31 = arith.addf %21, %30 : vector<1x128xf32>
    %32 = vector.extract_strided_slice %11 {offsets = [14, 0], sizes = [8, 64], strides = [1, 1]} : vector<45x64xf32> to vector<8x64xf32>
    %cst_26 = arith.constant dense<0.000000e+00> : vector<64xf32>
    %33 = vector.multi_reduction <add>, %32, %cst_26 [0] : vector<8x64xf32> to vector<64xf32>
    %34 = vector.shape_cast %33 : vector<64xf32> to vector<1x64xf32>
    %cst_27 = arith.constant 1.562500e-02 : f32
    %35 = vector.broadcast %cst_27 : f32 to vector<1x64xf32>
    %36 = arith.mulf %34, %35 : vector<1x64xf32>
    %37 = arith.truncf %36 : vector<1x64xf32> to vector<1x64xbf16>
    %c0_28 = arith.constant 0 : index
    %c2_29 = arith.constant 2 : index
    %c0_30 = arith.constant 0 : index
    %c0_31 = arith.constant 0 : index
    %38 = vector.load %arg2[%c0_28, %c2_29, %c0_30, %c0_31] : memref<5x6x64x128xbf16, #tpu.memory_space<vmem>>, vector<1x1x64x128xbf16>
    %39 = vector.shape_cast %38 : vector<1x1x64x128xbf16> to vector<64x128xbf16>
    %cst_32 = arith.constant dense<0.000000e+00> : vector<1x128xf32>
    %40 = tpu.matmul %37, %39, %cst_32 {dimension_numbers = #tpu.dot_dimension_numbers<[1], [0], [0], [1], [0, 0, 1, 1], [], []>} : vector<1x64xbf16>, vector<64x128xbf16>, vector<1x128xf32> -> vector<1x128xf32>
    %41 = arith.addf %31, %40 : vector<1x128xf32>
    %42 = vector.extract_strided_slice %11 {offsets = [22, 0], sizes = [8, 64], strides = [1, 1]} : vector<45x64xf32> to vector<8x64xf32>
    %cst_33 = arith.constant dense<0.000000e+00> : vector<64xf32>
    %43 = vector.multi_reduction <add>, %42, %cst_33 [0] : vector<8x64xf32> to vector<64xf32>
    %44 = vector.shape_cast %43 : vector<64xf32> to vector<1x64xf32>
    %cst_34 = arith.constant 1.562500e-02 : f32
    %45 = vector.broadcast %cst_34 : f32 to vector<1x64xf32>
    %46 = arith.mulf %44, %45 : vector<1x64xf32>
    %47 = arith.truncf %46 : vector<1x64xf32> to vector<1x64xbf16>
    %c0_35 = arith.constant 0 : index
    %c3_36 = arith.constant 3 : index
    %c0_37 = arith.constant 0 : index
    %c0_38 = arith.constant 0 : index
    %48 = vector.load %arg2[%c0_35, %c3_36, %c0_37, %c0_38] : memref<5x6x64x128xbf16, #tpu.memory_space<vmem>>, vector<1x1x64x128xbf16>
    %49 = vector.shape_cast %48 : vector<1x1x64x128xbf16> to vector<64x128xbf16>
    %cst_39 = arith.constant dense<0.000000e+00> : vector<1x128xf32>
    %50 = tpu.matmul %47, %49, %cst_39 {dimension_numbers = #tpu.dot_dimension_numbers<[1], [0], [0], [1], [0, 0, 1, 1], [], []>} : vector<1x64xbf16>, vector<64x128xbf16>, vector<1x128xf32> -> vector<1x128xf32>
    %51 = arith.addf %41, %50 : vector<1x128xf32>
    %52 = vector.extract_strided_slice %11 {offsets = [30, 0], sizes = [8, 64], strides = [1, 1]} : vector<45x64xf32> to vector<8x64xf32>
    %cst_40 = arith.constant dense<0.000000e+00> : vector<64xf32>
    %53 = vector.multi_reduction <add>, %52, %cst_40 [0] : vector<8x64xf32> to vector<64xf32>
    %54 = vector.shape_cast %53 : vector<64xf32> to vector<1x64xf32>
    %cst_41 = arith.constant 1.562500e-02 : f32
    %55 = vector.broadcast %cst_41 : f32 to vector<1x64xf32>
    %56 = arith.mulf %54, %55 : vector<1x64xf32>
    %57 = arith.truncf %56 : vector<1x64xf32> to vector<1x64xbf16>
    %c0_42 = arith.constant 0 : index
    %c4 = arith.constant 4 : index
    %c0_43 = arith.constant 0 : index
    %c0_44 = arith.constant 0 : index
    %58 = vector.load %arg2[%c0_42, %c4, %c0_43, %c0_44] : memref<5x6x64x128xbf16, #tpu.memory_space<vmem>>, vector<1x1x64x128xbf16>
    %59 = vector.shape_cast %58 : vector<1x1x64x128xbf16> to vector<64x128xbf16>
    %cst_45 = arith.constant dense<0.000000e+00> : vector<1x128xf32>
    %60 = tpu.matmul %57, %59, %cst_45 {dimension_numbers = #tpu.dot_dimension_numbers<[1], [0], [0], [1], [0, 0, 1, 1], [], []>} : vector<1x64xbf16>, vector<64x128xbf16>, vector<1x128xf32> -> vector<1x128xf32>
    %61 = arith.addf %51, %60 : vector<1x128xf32>
    %62 = vector.extract_strided_slice %11 {offsets = [38, 0], sizes = [7, 64], strides = [1, 1]} : vector<45x64xf32> to vector<7x64xf32>
    %cst_46 = arith.constant dense<0.000000e+00> : vector<64xf32>
    %63 = vector.multi_reduction <add>, %62, %cst_46 [0] : vector<7x64xf32> to vector<64xf32>
    %64 = vector.shape_cast %63 : vector<64xf32> to vector<1x64xf32>
    %cst_47 = arith.constant 1.562500e-02 : f32
    %65 = vector.broadcast %cst_47 : f32 to vector<1x64xf32>
    %66 = arith.mulf %64, %65 : vector<1x64xf32>
    %67 = arith.truncf %66 : vector<1x64xf32> to vector<1x64xbf16>
    %c0_48 = arith.constant 0 : index
    %c5 = arith.constant 5 : index
    %c0_49 = arith.constant 0 : index
    %c0_50 = arith.constant 0 : index
    %68 = vector.load %arg2[%c0_48, %c5, %c0_49, %c0_50] : memref<5x6x64x128xbf16, #tpu.memory_space<vmem>>, vector<1x1x64x128xbf16>
    %69 = vector.shape_cast %68 : vector<1x1x64x128xbf16> to vector<64x128xbf16>
    %cst_51 = arith.constant dense<0.000000e+00> : vector<1x128xf32>
    %70 = tpu.matmul %67, %69, %cst_51 {dimension_numbers = #tpu.dot_dimension_numbers<[1], [0], [0], [1], [0, 0, 1, 1], [], []>} : vector<1x64xbf16>, vector<64x128xbf16>, vector<1x128xf32> -> vector<1x128xf32>
    %71 = arith.addf %61, %70 : vector<1x128xf32>
    %c0_52 = arith.constant 0 : index
    %c4_53 = arith.constant 4 : index
    %c0_54 = arith.constant 0 : index
    %c0_55 = arith.constant 0 : index
    %72 = vector.load %arg1[%c0_52, %c4_53, %c0_54, %c0_55] : memref<1x33x45x64xf32, #tpu.memory_space<vmem>>, vector<1x1x45x64xf32>
    %73 = vector.shape_cast %72 : vector<1x1x45x64xf32> to vector<45x64xf32>
    %c0_56 = arith.constant 0 : index
    %c5_57 = arith.constant 5 : index
    %c0_58 = arith.constant 0 : index
    %c0_59 = arith.constant 0 : index
    %74 = vector.load %arg1[%c0_56, %c5_57, %c0_58, %c0_59] : memref<1x33x45x64xf32, #tpu.memory_space<vmem>>, vector<1x1x45x64xf32>
    %75 = vector.shape_cast %74 : vector<1x1x45x64xf32> to vector<45x64xf32>
    %76 = arith.addf %73, %75 : vector<45x64xf32>
    %c0_60 = arith.constant 0 : index
    %c6 = arith.constant 6 : index
    %c0_61 = arith.constant 0 : index
    %c0_62 = arith.constant 0 : index
    %77 = vector.load %arg1[%c0_60, %c6, %c0_61, %c0_62] : memref<1x33x45x64xf32, #tpu.memory_space<vmem>>, vector<1x1x45x64xf32>
    %78 = vector.shape_cast %77 : vector<1x1x45x64xf32> to vector<45x64xf32>
    %79 = arith.addf %76, %78 : vector<45x64xf32>
    %c0_63 = arith.constant 0 : index
    %c7 = arith.constant 7 : index
    %c0_64 = arith.constant 0 : index
    %c0_65 = arith.constant 0 : index
    %80 = vector.load %arg1[%c0_63, %c7, %c0_64, %c0_65] : memref<1x33x45x64xf32, #tpu.memory_space<vmem>>, vector<1x1x45x64xf32>
    %81 = vector.shape_cast %80 : vector<1x1x45x64xf32> to vector<45x64xf32>
    %82 = arith.addf %79, %81 : vector<45x64xf32>
    %c0_66 = arith.constant 0 : index
    %c8 = arith.constant 8 : index
    %c0_67 = arith.constant 0 : index
    %c0_68 = arith.constant 0 : index
    %83 = vector.load %arg1[%c0_66, %c8, %c0_67, %c0_68] : memref<1x33x45x64xf32, #tpu.memory_space<vmem>>, vector<1x1x45x64xf32>
    %84 = vector.shape_cast %83 : vector<1x1x45x64xf32> to vector<45x64xf32>
    %85 = arith.addf %82, %84 : vector<45x64xf32>
    %c0_69 = arith.constant 0 : index
    %c9 = arith.constant 9 : index
    %c0_70 = arith.constant 0 : index
    %c0_71 = arith.constant 0 : index
    %86 = vector.load %arg1[%c0_69, %c9, %c0_70, %c0_71] : memref<1x33x45x64xf32, #tpu.memory_space<vmem>>, vector<1x1x45x64xf32>
    %87 = vector.shape_cast %86 : vector<1x1x45x64xf32> to vector<45x64xf32>
    %88 = arith.addf %85, %87 : vector<45x64xf32>
    %c0_72 = arith.constant 0 : index
    %c10 = arith.constant 10 : index
    %c0_73 = arith.constant 0 : index
    %c0_74 = arith.constant 0 : index
    %89 = vector.load %arg1[%c0_72, %c10, %c0_73, %c0_74] : memref<1x33x45x64xf32, #tpu.memory_space<vmem>>, vector<1x1x45x64xf32>
    %90 = vector.shape_cast %89 : vector<1x1x45x64xf32> to vector<45x64xf32>
    %91 = arith.addf %88, %90 : vector<45x64xf32>
    %c0_75 = arith.constant 0 : index
    %c11 = arith.constant 11 : index
    %c0_76 = arith.constant 0 : index
    %c0_77 = arith.constant 0 : index
    %92 = vector.load %arg1[%c0_75, %c11, %c0_76, %c0_77] : memref<1x33x45x64xf32, #tpu.memory_space<vmem>>, vector<1x1x45x64xf32>
    %93 = vector.shape_cast %92 : vector<1x1x45x64xf32> to vector<45x64xf32>
    %94 = arith.addf %91, %93 : vector<45x64xf32>
    %95 = vector.extract_strided_slice %94 {offsets = [0, 0], sizes = [6, 64], strides = [1, 1]} : vector<45x64xf32> to vector<6x64xf32>
    %cst_78 = arith.constant dense<0.000000e+00> : vector<64xf32>
    %96 = vector.multi_reduction <add>, %95, %cst_78 [0] : vector<6x64xf32> to vector<64xf32>
    %97 = vector.shape_cast %96 : vector<64xf32> to vector<1x64xf32>
    %cst_79 = arith.constant 1.562500e-02 : f32
    %98 = vector.broadcast %cst_79 : f32 to vector<1x64xf32>
    %99 = arith.mulf %97, %98 : vector<1x64xf32>
    %100 = arith.truncf %99 : vector<1x64xf32> to vector<1x64xbf16>
    %c1_80 = arith.constant 1 : index
    %c0_81 = arith.constant 0 : index
    %c0_82 = arith.constant 0 : index
    %c0_83 = arith.constant 0 : index
    %101 = vector.load %arg2[%c1_80, %c0_81, %c0_82, %c0_83] : memref<5x6x64x128xbf16, #tpu.memory_space<vmem>>, vector<1x1x64x128xbf16>
    %102 = vector.shape_cast %101 : vector<1x1x64x128xbf16> to vector<64x128xbf16>
    %cst_84 = arith.constant dense<0.000000e+00> : vector<1x128xf32>
    %103 = tpu.matmul %100, %102, %cst_84 {dimension_numbers = #tpu.dot_dimension_numbers<[1], [0], [0], [1], [0, 0, 1, 1], [], []>} : vector<1x64xbf16>, vector<64x128xbf16>, vector<1x128xf32> -> vector<1x128xf32>
    %104 = arith.addf %71, %103 : vector<1x128xf32>
    %105 = vector.extract_strided_slice %94 {offsets = [6, 0], sizes = [8, 64], strides = [1, 1]} : vector<45x64xf32> to vector<8x64xf32>
    %cst_85 = arith.constant dense<0.000000e+00> : vector<64xf32>
    %106 = vector.multi_reduction <add>, %105, %cst_85 [0] : vector<8x64xf32> to vector<64xf32>
    %107 = vector.shape_cast %106 : vector<64xf32> to vector<1x64xf32>
    %cst_86 = arith.constant 1.562500e-02 : f32
    %108 = vector.broadcast %cst_86 : f32 to vector<1x64xf32>
    %109 = arith.mulf %107, %108 : vector<1x64xf32>
    %110 = arith.truncf %109 : vector<1x64xf32> to vector<1x64xbf16>
    %c1_87 = arith.constant 1 : index
    %c1_88 = arith.constant 1 : index
    %c0_89 = arith.constant 0 : index
    %c0_90 = arith.constant 0 : index
    %111 = vector.load %arg2[%c1_87, %c1_88, %c0_89, %c0_90] : memref<5x6x64x128xbf16, #tpu.memory_space<vmem>>, vector<1x1x64x128xbf16>
    %112 = vector.shape_cast %111 : vector<1x1x64x128xbf16> to vector<64x128xbf16>
    %cst_91 = arith.constant dense<0.000000e+00> : vector<1x128xf32>
    %113 = tpu.matmul %110, %112, %cst_91 {dimension_numbers = #tpu.dot_dimension_numbers<[1], [0], [0], [1], [0, 0, 1, 1], [], []>} : vector<1x64xbf16>, vector<64x128xbf16>, vector<1x128xf32> -> vector<1x128xf32>
    %114 = arith.addf %104, %113 : vector<1x128xf32>
    %115 = vector.extract_strided_slice %94 {offsets = [14, 0], sizes = [8, 64], strides = [1, 1]} : vector<45x64xf32> to vector<8x64xf32>
    %cst_92 = arith.constant dense<0.000000e+00> : vector<64xf32>
    %116 = vector.multi_reduction <add>, %115, %cst_92 [0] : vector<8x64xf32> to vector<64xf32>
    %117 = vector.shape_cast %116 : vector<64xf32> to vector<1x64xf32>
    %cst_93 = arith.constant 1.562500e-02 : f32
    %118 = vector.broadcast %cst_93 : f32 to vector<1x64xf32>
    %119 = arith.mulf %117, %118 : vector<1x64xf32>
    %120 = arith.truncf %119 : vector<1x64xf32> to vector<1x64xbf16>
    %c1_94 = arith.constant 1 : index
    %c2_95 = arith.constant 2 : index
    %c0_96 = arith.constant 0 : index
    %c0_97 = arith.constant 0 : index
    %121 = vector.load %arg2[%c1_94, %c2_95, %c0_96, %c0_97] : memref<5x6x64x128xbf16, #tpu.memory_space<vmem>>, vector<1x1x64x128xbf16>
    %122 = vector.shape_cast %121 : vector<1x1x64x128xbf16> to vector<64x128xbf16>
    %cst_98 = arith.constant dense<0.000000e+00> : vector<1x128xf32>
    %123 = tpu.matmul %120, %122, %cst_98 {dimension_numbers = #tpu.dot_dimension_numbers<[1], [0], [0], [1], [0, 0, 1, 1], [], []>} : vector<1x64xbf16>, vector<64x128xbf16>, vector<1x128xf32> -> vector<1x128xf32>
    %124 = arith.addf %114, %123 : vector<1x128xf32>
    %125 = vector.extract_strided_slice %94 {offsets = [22, 0], sizes = [8, 64], strides = [1, 1]} : vector<45x64xf32> to vector<8x64xf32>
    %cst_99 = arith.constant dense<0.000000e+00> : vector<64xf32>
    %126 = vector.multi_reduction <add>, %125, %cst_99 [0] : vector<8x64xf32> to vector<64xf32>
    %127 = vector.shape_cast %126 : vector<64xf32> to vector<1x64xf32>
    %cst_100 = arith.constant 1.562500e-02 : f32
    %128 = vector.broadcast %cst_100 : f32 to vector<1x64xf32>
    %129 = arith.mulf %127, %128 : vector<1x64xf32>
    %130 = arith.truncf %129 : vector<1x64xf32> to vector<1x64xbf16>
    %c1_101 = arith.constant 1 : index
    %c3_102 = arith.constant 3 : index
    %c0_103 = arith.constant 0 : index
    %c0_104 = arith.constant 0 : index
    %131 = vector.load %arg2[%c1_101, %c3_102, %c0_103, %c0_104] : memref<5x6x64x128xbf16, #tpu.memory_space<vmem>>, vector<1x1x64x128xbf16>
    %132 = vector.shape_cast %131 : vector<1x1x64x128xbf16> to vector<64x128xbf16>
    %cst_105 = arith.constant dense<0.000000e+00> : vector<1x128xf32>
    %133 = tpu.matmul %130, %132, %cst_105 {dimension_numbers = #tpu.dot_dimension_numbers<[1], [0], [0], [1], [0, 0, 1, 1], [], []>} : vector<1x64xbf16>, vector<64x128xbf16>, vector<1x128xf32> -> vector<1x128xf32>
    %134 = arith.addf %124, %133 : vector<1x128xf32>
    %135 = vector.extract_strided_slice %94 {offsets = [30, 0], sizes = [8, 64], strides = [1, 1]} : vector<45x64xf32> to vector<8x64xf32>
    %cst_106 = arith.constant dense<0.000000e+00> : vector<64xf32>
    %136 = vector.multi_reduction <add>, %135, %cst_106 [0] : vector<8x64xf32> to vector<64xf32>
    %137 = vector.shape_cast %136 : vector<64xf32> to vector<1x64xf32>
    %cst_107 = arith.constant 1.562500e-02 : f32
    %138 = vector.broadcast %cst_107 : f32 to vector<1x64xf32>
    %139 = arith.mulf %137, %138 : vector<1x64xf32>
    %140 = arith.truncf %139 : vector<1x64xf32> to vector<1x64xbf16>
    %c1_108 = arith.constant 1 : index
    %c4_109 = arith.constant 4 : index
    %c0_110 = arith.constant 0 : index
    %c0_111 = arith.constant 0 : index
    %141 = vector.load %arg2[%c1_108, %c4_109, %c0_110, %c0_111] : memref<5x6x64x128xbf16, #tpu.memory_space<vmem>>, vector<1x1x64x128xbf16>
    %142 = vector.shape_cast %141 : vector<1x1x64x128xbf16> to vector<64x128xbf16>
    %cst_112 = arith.constant dense<0.000000e+00> : vector<1x128xf32>
    %143 = tpu.matmul %140, %142, %cst_112 {dimension_numbers = #tpu.dot_dimension_numbers<[1], [0], [0], [1], [0, 0, 1, 1], [], []>} : vector<1x64xbf16>, vector<64x128xbf16>, vector<1x128xf32> -> vector<1x128xf32>
    %144 = arith.addf %134, %143 : vector<1x128xf32>
    %145 = vector.extract_strided_slice %94 {offsets = [38, 0], sizes = [7, 64], strides = [1, 1]} : vector<45x64xf32> to vector<7x64xf32>
    %cst_113 = arith.constant dense<0.000000e+00> : vector<64xf32>
    %146 = vector.multi_reduction <add>, %145, %cst_113 [0] : vector<7x64xf32> to vector<64xf32>
    %147 = vector.shape_cast %146 : vector<64xf32> to vector<1x64xf32>
    %cst_114 = arith.constant 1.562500e-02 : f32
    %148 = vector.broadcast %cst_114 : f32 to vector<1x64xf32>
    %149 = arith.mulf %147, %148 : vector<1x64xf32>
    %150 = arith.truncf %149 : vector<1x64xf32> to vector<1x64xbf16>
    %c1_115 = arith.constant 1 : index
    %c5_116 = arith.constant 5 : index
    %c0_117 = arith.constant 0 : index
    %c0_118 = arith.constant 0 : index
    %151 = vector.load %arg2[%c1_115, %c5_116, %c0_117, %c0_118] : memref<5x6x64x128xbf16, #tpu.memory_space<vmem>>, vector<1x1x64x128xbf16>
    %152 = vector.shape_cast %151 : vector<1x1x64x128xbf16> to vector<64x128xbf16>
    %cst_119 = arith.constant dense<0.000000e+00> : vector<1x128xf32>
    %153 = tpu.matmul %150, %152, %cst_119 {dimension_numbers = #tpu.dot_dimension_numbers<[1], [0], [0], [1], [0, 0, 1, 1], [], []>} : vector<1x64xbf16>, vector<64x128xbf16>, vector<1x128xf32> -> vector<1x128xf32>
    %154 = arith.addf %144, %153 : vector<1x128xf32>
    %c0_120 = arith.constant 0 : index
    %c12 = arith.constant 12 : index
    %c0_121 = arith.constant 0 : index
    %c0_122 = arith.constant 0 : index
    %155 = vector.load %arg1[%c0_120, %c12, %c0_121, %c0_122] : memref<1x33x45x64xf32, #tpu.memory_space<vmem>>, vector<1x1x45x64xf32>
    %156 = vector.shape_cast %155 : vector<1x1x45x64xf32> to vector<45x64xf32>
    %c0_123 = arith.constant 0 : index
    %c13 = arith.constant 13 : index
    %c0_124 = arith.constant 0 : index
    %c0_125 = arith.constant 0 : index
    %157 = vector.load %arg1[%c0_123, %c13, %c0_124, %c0_125] : memref<1x33x45x64xf32, #tpu.memory_space<vmem>>, vector<1x1x45x64xf32>
    %158 = vector.shape_cast %157 : vector<1x1x45x64xf32> to vector<45x64xf32>
    %159 = arith.addf %156, %158 : vector<45x64xf32>
    %c0_126 = arith.constant 0 : index
    %c14 = arith.constant 14 : index
    %c0_127 = arith.constant 0 : index
    %c0_128 = arith.constant 0 : index
    %160 = vector.load %arg1[%c0_126, %c14, %c0_127, %c0_128] : memref<1x33x45x64xf32, #tpu.memory_space<vmem>>, vector<1x1x45x64xf32>
    %161 = vector.shape_cast %160 : vector<1x1x45x64xf32> to vector<45x64xf32>
    %162 = arith.addf %159, %161 : vector<45x64xf32>
    %c0_129 = arith.constant 0 : index
    %c15 = arith.constant 15 : index
    %c0_130 = arith.constant 0 : index
    %c0_131 = arith.constant 0 : index
    %163 = vector.load %arg1[%c0_129, %c15, %c0_130, %c0_131] : memref<1x33x45x64xf32, #tpu.memory_space<vmem>>, vector<1x1x45x64xf32>
    %164 = vector.shape_cast %163 : vector<1x1x45x64xf32> to vector<45x64xf32>
    %165 = arith.addf %162, %164 : vector<45x64xf32>
    %c0_132 = arith.constant 0 : index
    %c16 = arith.constant 16 : index
    %c0_133 = arith.constant 0 : index
    %c0_134 = arith.constant 0 : index
    %166 = vector.load %arg1[%c0_132, %c16, %c0_133, %c0_134] : memref<1x33x45x64xf32, #tpu.memory_space<vmem>>, vector<1x1x45x64xf32>
    %167 = vector.shape_cast %166 : vector<1x1x45x64xf32> to vector<45x64xf32>
    %168 = arith.addf %165, %167 : vector<45x64xf32>
    %c0_135 = arith.constant 0 : index
    %c17 = arith.constant 17 : index
    %c0_136 = arith.constant 0 : index
    %c0_137 = arith.constant 0 : index
    %169 = vector.load %arg1[%c0_135, %c17, %c0_136, %c0_137] : memref<1x33x45x64xf32, #tpu.memory_space<vmem>>, vector<1x1x45x64xf32>
    %170 = vector.shape_cast %169 : vector<1x1x45x64xf32> to vector<45x64xf32>
    %171 = arith.addf %168, %170 : vector<45x64xf32>
    %c0_138 = arith.constant 0 : index
    %c18 = arith.constant 18 : index
    %c0_139 = arith.constant 0 : index
    %c0_140 = arith.constant 0 : index
    %172 = vector.load %arg1[%c0_138, %c18, %c0_139, %c0_140] : memref<1x33x45x64xf32, #tpu.memory_space<vmem>>, vector<1x1x45x64xf32>
    %173 = vector.shape_cast %172 : vector<1x1x45x64xf32> to vector<45x64xf32>
    %174 = arith.addf %171, %173 : vector<45x64xf32>
    %c0_141 = arith.constant 0 : index
    %c19 = arith.constant 19 : index
    %c0_142 = arith.constant 0 : index
    %c0_143 = arith.constant 0 : index
    %175 = vector.load %arg1[%c0_141, %c19, %c0_142, %c0_143] : memref<1x33x45x64xf32, #tpu.memory_space<vmem>>, vector<1x1x45x64xf32>
    %176 = vector.shape_cast %175 : vector<1x1x45x64xf32> to vector<45x64xf32>
    %177 = arith.addf %174, %176 : vector<45x64xf32>
    %178 = vector.extract_strided_slice %177 {offsets = [0, 0], sizes = [6, 64], strides = [1, 1]} : vector<45x64xf32> to vector<6x64xf32>
    %cst_144 = arith.constant dense<0.000000e+00> : vector<64xf32>
    %179 = vector.multi_reduction <add>, %178, %cst_144 [0] : vector<6x64xf32> to vector<64xf32>
    %180 = vector.shape_cast %179 : vector<64xf32> to vector<1x64xf32>
    %cst_145 = arith.constant 1.562500e-02 : f32
    %181 = vector.broadcast %cst_145 : f32 to vector<1x64xf32>
    %182 = arith.mulf %180, %181 : vector<1x64xf32>
    %183 = arith.truncf %182 : vector<1x64xf32> to vector<1x64xbf16>
    %c2_146 = arith.constant 2 : index
    %c0_147 = arith.constant 0 : index
    %c0_148 = arith.constant 0 : index
    %c0_149 = arith.constant 0 : index
    %184 = vector.load %arg2[%c2_146, %c0_147, %c0_148, %c0_149] : memref<5x6x64x128xbf16, #tpu.memory_space<vmem>>, vector<1x1x64x128xbf16>
    %185 = vector.shape_cast %184 : vector<1x1x64x128xbf16> to vector<64x128xbf16>
    %cst_150 = arith.constant dense<0.000000e+00> : vector<1x128xf32>
    %186 = tpu.matmul %183, %185, %cst_150 {dimension_numbers = #tpu.dot_dimension_numbers<[1], [0], [0], [1], [0, 0, 1, 1], [], []>} : vector<1x64xbf16>, vector<64x128xbf16>, vector<1x128xf32> -> vector<1x128xf32>
    %187 = arith.addf %154, %186 : vector<1x128xf32>
    %188 = vector.extract_strided_slice %177 {offsets = [6, 0], sizes = [8, 64], strides = [1, 1]} : vector<45x64xf32> to vector<8x64xf32>
    %cst_151 = arith.constant dense<0.000000e+00> : vector<64xf32>
    %189 = vector.multi_reduction <add>, %188, %cst_151 [0] : vector<8x64xf32> to vector<64xf32>
    %190 = vector.shape_cast %189 : vector<64xf32> to vector<1x64xf32>
    %cst_152 = arith.constant 1.562500e-02 : f32
    %191 = vector.broadcast %cst_152 : f32 to vector<1x64xf32>
    %192 = arith.mulf %190, %191 : vector<1x64xf32>
    %193 = arith.truncf %192 : vector<1x64xf32> to vector<1x64xbf16>
    %c2_153 = arith.constant 2 : index
    %c1_154 = arith.constant 1 : index
    %c0_155 = arith.constant 0 : index
    %c0_156 = arith.constant 0 : index
    %194 = vector.load %arg2[%c2_153, %c1_154, %c0_155, %c0_156] : memref<5x6x64x128xbf16, #tpu.memory_space<vmem>>, vector<1x1x64x128xbf16>
    %195 = vector.shape_cast %194 : vector<1x1x64x128xbf16> to vector<64x128xbf16>
    %cst_157 = arith.constant dense<0.000000e+00> : vector<1x128xf32>
    %196 = tpu.matmul %193, %195, %cst_157 {dimension_numbers = #tpu.dot_dimension_numbers<[1], [0], [0], [1], [0, 0, 1, 1], [], []>} : vector<1x64xbf16>, vector<64x128xbf16>, vector<1x128xf32> -> vector<1x128xf32>
    %197 = arith.addf %187, %196 : vector<1x128xf32>
    %198 = vector.extract_strided_slice %177 {offsets = [14, 0], sizes = [8, 64], strides = [1, 1]} : vector<45x64xf32> to vector<8x64xf32>
    %cst_158 = arith.constant dense<0.000000e+00> : vector<64xf32>
    %199 = vector.multi_reduction <add>, %198, %cst_158 [0] : vector<8x64xf32> to vector<64xf32>
    %200 = vector.shape_cast %199 : vector<64xf32> to vector<1x64xf32>
    %cst_159 = arith.constant 1.562500e-02 : f32
    %201 = vector.broadcast %cst_159 : f32 to vector<1x64xf32>
    %202 = arith.mulf %200, %201 : vector<1x64xf32>
    %203 = arith.truncf %202 : vector<1x64xf32> to vector<1x64xbf16>
    %c2_160 = arith.constant 2 : index
    %c2_161 = arith.constant 2 : index
    %c0_162 = arith.constant 0 : index
    %c0_163 = arith.constant 0 : index
    %204 = vector.load %arg2[%c2_160, %c2_161, %c0_162, %c0_163] : memref<5x6x64x128xbf16, #tpu.memory_space<vmem>>, vector<1x1x64x128xbf16>
    %205 = vector.shape_cast %204 : vector<1x1x64x128xbf16> to vector<64x128xbf16>
    %cst_164 = arith.constant dense<0.000000e+00> : vector<1x128xf32>
    %206 = tpu.matmul %203, %205, %cst_164 {dimension_numbers = #tpu.dot_dimension_numbers<[1], [0], [0], [1], [0, 0, 1, 1], [], []>} : vector<1x64xbf16>, vector<64x128xbf16>, vector<1x128xf32> -> vector<1x128xf32>
    %207 = arith.addf %197, %206 : vector<1x128xf32>
    %208 = vector.extract_strided_slice %177 {offsets = [22, 0], sizes = [8, 64], strides = [1, 1]} : vector<45x64xf32> to vector<8x64xf32>
    %cst_165 = arith.constant dense<0.000000e+00> : vector<64xf32>
    %209 = vector.multi_reduction <add>, %208, %cst_165 [0] : vector<8x64xf32> to vector<64xf32>
    %210 = vector.shape_cast %209 : vector<64xf32> to vector<1x64xf32>
    %cst_166 = arith.constant 1.562500e-02 : f32
    %211 = vector.broadcast %cst_166 : f32 to vector<1x64xf32>
    %212 = arith.mulf %210, %211 : vector<1x64xf32>
    %213 = arith.truncf %212 : vector<1x64xf32> to vector<1x64xbf16>
    %c2_167 = arith.constant 2 : index
    %c3_168 = arith.constant 3 : index
    %c0_169 = arith.constant 0 : index
    %c0_170 = arith.constant 0 : index
    %214 = vector.load %arg2[%c2_167, %c3_168, %c0_169, %c0_170] : memref<5x6x64x128xbf16, #tpu.memory_space<vmem>>, vector<1x1x64x128xbf16>
    %215 = vector.shape_cast %214 : vector<1x1x64x128xbf16> to vector<64x128xbf16>
    %cst_171 = arith.constant dense<0.000000e+00> : vector<1x128xf32>
    %216 = tpu.matmul %213, %215, %cst_171 {dimension_numbers = #tpu.dot_dimension_numbers<[1], [0], [0], [1], [0, 0, 1, 1], [], []>} : vector<1x64xbf16>, vector<64x128xbf16>, vector<1x128xf32> -> vector<1x128xf32>
    %217 = arith.addf %207, %216 : vector<1x128xf32>
    %218 = vector.extract_strided_slice %177 {offsets = [30, 0], sizes = [8, 64], strides = [1, 1]} : vector<45x64xf32> to vector<8x64xf32>
    %cst_172 = arith.constant dense<0.000000e+00> : vector<64xf32>
    %219 = vector.multi_reduction <add>, %218, %cst_172 [0] : vector<8x64xf32> to vector<64xf32>
    %220 = vector.shape_cast %219 : vector<64xf32> to vector<1x64xf32>
    %cst_173 = arith.constant 1.562500e-02 : f32
    %221 = vector.broadcast %cst_173 : f32 to vector<1x64xf32>
    %222 = arith.mulf %220, %221 : vector<1x64xf32>
    %223 = arith.truncf %222 : vector<1x64xf32> to vector<1x64xbf16>
    %c2_174 = arith.constant 2 : index
    %c4_175 = arith.constant 4 : index
    %c0_176 = arith.constant 0 : index
    %c0_177 = arith.constant 0 : index
    %224 = vector.load %arg2[%c2_174, %c4_175, %c0_176, %c0_177] : memref<5x6x64x128xbf16, #tpu.memory_space<vmem>>, vector<1x1x64x128xbf16>
    %225 = vector.shape_cast %224 : vector<1x1x64x128xbf16> to vector<64x128xbf16>
    %cst_178 = arith.constant dense<0.000000e+00> : vector<1x128xf32>
    %226 = tpu.matmul %223, %225, %cst_178 {dimension_numbers = #tpu.dot_dimension_numbers<[1], [0], [0], [1], [0, 0, 1, 1], [], []>} : vector<1x64xbf16>, vector<64x128xbf16>, vector<1x128xf32> -> vector<1x128xf32>
    %227 = arith.addf %217, %226 : vector<1x128xf32>
    %228 = vector.extract_strided_slice %177 {offsets = [38, 0], sizes = [7, 64], strides = [1, 1]} : vector<45x64xf32> to vector<7x64xf32>
    %cst_179 = arith.constant dense<0.000000e+00> : vector<64xf32>
    %229 = vector.multi_reduction <add>, %228, %cst_179 [0] : vector<7x64xf32> to vector<64xf32>
    %230 = vector.shape_cast %229 : vector<64xf32> to vector<1x64xf32>
    %cst_180 = arith.constant 1.562500e-02 : f32
    %231 = vector.broadcast %cst_180 : f32 to vector<1x64xf32>
    %232 = arith.mulf %230, %231 : vector<1x64xf32>
    %233 = arith.truncf %232 : vector<1x64xf32> to vector<1x64xbf16>
    %c2_181 = arith.constant 2 : index
    %c5_182 = arith.constant 5 : index
    %c0_183 = arith.constant 0 : index
    %c0_184 = arith.constant 0 : index
    %234 = vector.load %arg2[%c2_181, %c5_182, %c0_183, %c0_184] : memref<5x6x64x128xbf16, #tpu.memory_space<vmem>>, vector<1x1x64x128xbf16>
    %235 = vector.shape_cast %234 : vector<1x1x64x128xbf16> to vector<64x128xbf16>
    %cst_185 = arith.constant dense<0.000000e+00> : vector<1x128xf32>
    %236 = tpu.matmul %233, %235, %cst_185 {dimension_numbers = #tpu.dot_dimension_numbers<[1], [0], [0], [1], [0, 0, 1, 1], [], []>} : vector<1x64xbf16>, vector<64x128xbf16>, vector<1x128xf32> -> vector<1x128xf32>
    %237 = arith.addf %227, %236 : vector<1x128xf32>
    %c0_186 = arith.constant 0 : index
    %c20 = arith.constant 20 : index
    %c0_187 = arith.constant 0 : index
    %c0_188 = arith.constant 0 : index
    %238 = vector.load %arg1[%c0_186, %c20, %c0_187, %c0_188] : memref<1x33x45x64xf32, #tpu.memory_space<vmem>>, vector<1x1x45x64xf32>
    %239 = vector.shape_cast %238 : vector<1x1x45x64xf32> to vector<45x64xf32>
    %c0_189 = arith.constant 0 : index
    %c21 = arith.constant 21 : index
    %c0_190 = arith.constant 0 : index
    %c0_191 = arith.constant 0 : index
    %240 = vector.load %arg1[%c0_189, %c21, %c0_190, %c0_191] : memref<1x33x45x64xf32, #tpu.memory_space<vmem>>, vector<1x1x45x64xf32>
    %241 = vector.shape_cast %240 : vector<1x1x45x64xf32> to vector<45x64xf32>
    %242 = arith.addf %239, %241 : vector<45x64xf32>
    %c0_192 = arith.constant 0 : index
    %c22 = arith.constant 22 : index
    %c0_193 = arith.constant 0 : index
    %c0_194 = arith.constant 0 : index
    %243 = vector.load %arg1[%c0_192, %c22, %c0_193, %c0_194] : memref<1x33x45x64xf32, #tpu.memory_space<vmem>>, vector<1x1x45x64xf32>
    %244 = vector.shape_cast %243 : vector<1x1x45x64xf32> to vector<45x64xf32>
    %245 = arith.addf %242, %244 : vector<45x64xf32>
    %c0_195 = arith.constant 0 : index
    %c23 = arith.constant 23 : index
    %c0_196 = arith.constant 0 : index
    %c0_197 = arith.constant 0 : index
    %246 = vector.load %arg1[%c0_195, %c23, %c0_196, %c0_197] : memref<1x33x45x64xf32, #tpu.memory_space<vmem>>, vector<1x1x45x64xf32>
    %247 = vector.shape_cast %246 : vector<1x1x45x64xf32> to vector<45x64xf32>
    %248 = arith.addf %245, %247 : vector<45x64xf32>
    %c0_198 = arith.constant 0 : index
    %c24 = arith.constant 24 : index
    %c0_199 = arith.constant 0 : index
    %c0_200 = arith.constant 0 : index
    %249 = vector.load %arg1[%c0_198, %c24, %c0_199, %c0_200] : memref<1x33x45x64xf32, #tpu.memory_space<vmem>>, vector<1x1x45x64xf32>
    %250 = vector.shape_cast %249 : vector<1x1x45x64xf32> to vector<45x64xf32>
    %251 = arith.addf %248, %250 : vector<45x64xf32>
    %c0_201 = arith.constant 0 : index
    %c25 = arith.constant 25 : index
    %c0_202 = arith.constant 0 : index
    %c0_203 = arith.constant 0 : index
    %252 = vector.load %arg1[%c0_201, %c25, %c0_202, %c0_203] : memref<1x33x45x64xf32, #tpu.memory_space<vmem>>, vector<1x1x45x64xf32>
    %253 = vector.shape_cast %252 : vector<1x1x45x64xf32> to vector<45x64xf32>
    %254 = arith.addf %251, %253 : vector<45x64xf32>
    %c0_204 = arith.constant 0 : index
    %c26 = arith.constant 26 : index
    %c0_205 = arith.constant 0 : index
    %c0_206 = arith.constant 0 : index
    %255 = vector.load %arg1[%c0_204, %c26, %c0_205, %c0_206] : memref<1x33x45x64xf32, #tpu.memory_space<vmem>>, vector<1x1x45x64xf32>
    %256 = vector.shape_cast %255 : vector<1x1x45x64xf32> to vector<45x64xf32>
    %257 = arith.addf %254, %256 : vector<45x64xf32>
    %c0_207 = arith.constant 0 : index
    %c27 = arith.constant 27 : index
    %c0_208 = arith.constant 0 : index
    %c0_209 = arith.constant 0 : index
    %258 = vector.load %arg1[%c0_207, %c27, %c0_208, %c0_209] : memref<1x33x45x64xf32, #tpu.memory_space<vmem>>, vector<1x1x45x64xf32>
    %259 = vector.shape_cast %258 : vector<1x1x45x64xf32> to vector<45x64xf32>
    %260 = arith.addf %257, %259 : vector<45x64xf32>
    %261 = vector.extract_strided_slice %260 {offsets = [0, 0], sizes = [6, 64], strides = [1, 1]} : vector<45x64xf32> to vector<6x64xf32>
    %cst_210 = arith.constant dense<0.000000e+00> : vector<64xf32>
    %262 = vector.multi_reduction <add>, %261, %cst_210 [0] : vector<6x64xf32> to vector<64xf32>
    %263 = vector.shape_cast %262 : vector<64xf32> to vector<1x64xf32>
    %cst_211 = arith.constant 1.562500e-02 : f32
    %264 = vector.broadcast %cst_211 : f32 to vector<1x64xf32>
    %265 = arith.mulf %263, %264 : vector<1x64xf32>
    %266 = arith.truncf %265 : vector<1x64xf32> to vector<1x64xbf16>
    %c3_212 = arith.constant 3 : index
    %c0_213 = arith.constant 0 : index
    %c0_214 = arith.constant 0 : index
    %c0_215 = arith.constant 0 : index
    %267 = vector.load %arg2[%c3_212, %c0_213, %c0_214, %c0_215] : memref<5x6x64x128xbf16, #tpu.memory_space<vmem>>, vector<1x1x64x128xbf16>
    %268 = vector.shape_cast %267 : vector<1x1x64x128xbf16> to vector<64x128xbf16>
    %cst_216 = arith.constant dense<0.000000e+00> : vector<1x128xf32>
    %269 = tpu.matmul %266, %268, %cst_216 {dimension_numbers = #tpu.dot_dimension_numbers<[1], [0], [0], [1], [0, 0, 1, 1], [], []>} : vector<1x64xbf16>, vector<64x128xbf16>, vector<1x128xf32> -> vector<1x128xf32>
    %270 = arith.addf %237, %269 : vector<1x128xf32>
    %271 = vector.extract_strided_slice %260 {offsets = [6, 0], sizes = [8, 64], strides = [1, 1]} : vector<45x64xf32> to vector<8x64xf32>
    %cst_217 = arith.constant dense<0.000000e+00> : vector<64xf32>
    %272 = vector.multi_reduction <add>, %271, %cst_217 [0] : vector<8x64xf32> to vector<64xf32>
    %273 = vector.shape_cast %272 : vector<64xf32> to vector<1x64xf32>
    %cst_218 = arith.constant 1.562500e-02 : f32
    %274 = vector.broadcast %cst_218 : f32 to vector<1x64xf32>
    %275 = arith.mulf %273, %274 : vector<1x64xf32>
    %276 = arith.truncf %275 : vector<1x64xf32> to vector<1x64xbf16>
    %c3_219 = arith.constant 3 : index
    %c1_220 = arith.constant 1 : index
    %c0_221 = arith.constant 0 : index
    %c0_222 = arith.constant 0 : index
    %277 = vector.load %arg2[%c3_219, %c1_220, %c0_221, %c0_222] : memref<5x6x64x128xbf16, #tpu.memory_space<vmem>>, vector<1x1x64x128xbf16>
    %278 = vector.shape_cast %277 : vector<1x1x64x128xbf16> to vector<64x128xbf16>
    %cst_223 = arith.constant dense<0.000000e+00> : vector<1x128xf32>
    %279 = tpu.matmul %276, %278, %cst_223 {dimension_numbers = #tpu.dot_dimension_numbers<[1], [0], [0], [1], [0, 0, 1, 1], [], []>} : vector<1x64xbf16>, vector<64x128xbf16>, vector<1x128xf32> -> vector<1x128xf32>
    %280 = arith.addf %270, %279 : vector<1x128xf32>
    %281 = vector.extract_strided_slice %260 {offsets = [14, 0], sizes = [8, 64], strides = [1, 1]} : vector<45x64xf32> to vector<8x64xf32>
    %cst_224 = arith.constant dense<0.000000e+00> : vector<64xf32>
    %282 = vector.multi_reduction <add>, %281, %cst_224 [0] : vector<8x64xf32> to vector<64xf32>
    %283 = vector.shape_cast %282 : vector<64xf32> to vector<1x64xf32>
    %cst_225 = arith.constant 1.562500e-02 : f32
    %284 = vector.broadcast %cst_225 : f32 to vector<1x64xf32>
    %285 = arith.mulf %283, %284 : vector<1x64xf32>
    %286 = arith.truncf %285 : vector<1x64xf32> to vector<1x64xbf16>
    %c3_226 = arith.constant 3 : index
    %c2_227 = arith.constant 2 : index
    %c0_228 = arith.constant 0 : index
    %c0_229 = arith.constant 0 : index
    %287 = vector.load %arg2[%c3_226, %c2_227, %c0_228, %c0_229] : memref<5x6x64x128xbf16, #tpu.memory_space<vmem>>, vector<1x1x64x128xbf16>
    %288 = vector.shape_cast %287 : vector<1x1x64x128xbf16> to vector<64x128xbf16>
    %cst_230 = arith.constant dense<0.000000e+00> : vector<1x128xf32>
    %289 = tpu.matmul %286, %288, %cst_230 {dimension_numbers = #tpu.dot_dimension_numbers<[1], [0], [0], [1], [0, 0, 1, 1], [], []>} : vector<1x64xbf16>, vector<64x128xbf16>, vector<1x128xf32> -> vector<1x128xf32>
    %290 = arith.addf %280, %289 : vector<1x128xf32>
    %291 = vector.extract_strided_slice %260 {offsets = [22, 0], sizes = [8, 64], strides = [1, 1]} : vector<45x64xf32> to vector<8x64xf32>
    %cst_231 = arith.constant dense<0.000000e+00> : vector<64xf32>
    %292 = vector.multi_reduction <add>, %291, %cst_231 [0] : vector<8x64xf32> to vector<64xf32>
    %293 = vector.shape_cast %292 : vector<64xf32> to vector<1x64xf32>
    %cst_232 = arith.constant 1.562500e-02 : f32
    %294 = vector.broadcast %cst_232 : f32 to vector<1x64xf32>
    %295 = arith.mulf %293, %294 : vector<1x64xf32>
    %296 = arith.truncf %295 : vector<1x64xf32> to vector<1x64xbf16>
    %c3_233 = arith.constant 3 : index
    %c3_234 = arith.constant 3 : index
    %c0_235 = arith.constant 0 : index
    %c0_236 = arith.constant 0 : index
    %297 = vector.load %arg2[%c3_233, %c3_234, %c0_235, %c0_236] : memref<5x6x64x128xbf16, #tpu.memory_space<vmem>>, vector<1x1x64x128xbf16>
    %298 = vector.shape_cast %297 : vector<1x1x64x128xbf16> to vector<64x128xbf16>
    %cst_237 = arith.constant dense<0.000000e+00> : vector<1x128xf32>
    %299 = tpu.matmul %296, %298, %cst_237 {dimension_numbers = #tpu.dot_dimension_numbers<[1], [0], [0], [1], [0, 0, 1, 1], [], []>} : vector<1x64xbf16>, vector<64x128xbf16>, vector<1x128xf32> -> vector<1x128xf32>
    %300 = arith.addf %290, %299 : vector<1x128xf32>
    %301 = vector.extract_strided_slice %260 {offsets = [30, 0], sizes = [8, 64], strides = [1, 1]} : vector<45x64xf32> to vector<8x64xf32>
    %cst_238 = arith.constant dense<0.000000e+00> : vector<64xf32>
    %302 = vector.multi_reduction <add>, %301, %cst_238 [0] : vector<8x64xf32> to vector<64xf32>
    %303 = vector.shape_cast %302 : vector<64xf32> to vector<1x64xf32>
    %cst_239 = arith.constant 1.562500e-02 : f32
    %304 = vector.broadcast %cst_239 : f32 to vector<1x64xf32>
    %305 = arith.mulf %303, %304 : vector<1x64xf32>
    %306 = arith.truncf %305 : vector<1x64xf32> to vector<1x64xbf16>
    %c3_240 = arith.constant 3 : index
    %c4_241 = arith.constant 4 : index
    %c0_242 = arith.constant 0 : index
    %c0_243 = arith.constant 0 : index
    %307 = vector.load %arg2[%c3_240, %c4_241, %c0_242, %c0_243] : memref<5x6x64x128xbf16, #tpu.memory_space<vmem>>, vector<1x1x64x128xbf16>
    %308 = vector.shape_cast %307 : vector<1x1x64x128xbf16> to vector<64x128xbf16>
    %cst_244 = arith.constant dense<0.000000e+00> : vector<1x128xf32>
    %309 = tpu.matmul %306, %308, %cst_244 {dimension_numbers = #tpu.dot_dimension_numbers<[1], [0], [0], [1], [0, 0, 1, 1], [], []>} : vector<1x64xbf16>, vector<64x128xbf16>, vector<1x128xf32> -> vector<1x128xf32>
    %310 = arith.addf %300, %309 : vector<1x128xf32>
    %311 = vector.extract_strided_slice %260 {offsets = [38, 0], sizes = [7, 64], strides = [1, 1]} : vector<45x64xf32> to vector<7x64xf32>
    %cst_245 = arith.constant dense<0.000000e+00> : vector<64xf32>
    %312 = vector.multi_reduction <add>, %311, %cst_245 [0] : vector<7x64xf32> to vector<64xf32>
    %313 = vector.shape_cast %312 : vector<64xf32> to vector<1x64xf32>
    %cst_246 = arith.constant 1.562500e-02 : f32
    %314 = vector.broadcast %cst_246 : f32 to vector<1x64xf32>
    %315 = arith.mulf %313, %314 : vector<1x64xf32>
    %316 = arith.truncf %315 : vector<1x64xf32> to vector<1x64xbf16>
    %c3_247 = arith.constant 3 : index
    %c5_248 = arith.constant 5 : index
    %c0_249 = arith.constant 0 : index
    %c0_250 = arith.constant 0 : index
    %317 = vector.load %arg2[%c3_247, %c5_248, %c0_249, %c0_250] : memref<5x6x64x128xbf16, #tpu.memory_space<vmem>>, vector<1x1x64x128xbf16>
    %318 = vector.shape_cast %317 : vector<1x1x64x128xbf16> to vector<64x128xbf16>
    %cst_251 = arith.constant dense<0.000000e+00> : vector<1x128xf32>
    %319 = tpu.matmul %316, %318, %cst_251 {dimension_numbers = #tpu.dot_dimension_numbers<[1], [0], [0], [1], [0, 0, 1, 1], [], []>} : vector<1x64xbf16>, vector<64x128xbf16>, vector<1x128xf32> -> vector<1x128xf32>
    %320 = arith.addf %310, %319 : vector<1x128xf32>
    %c0_252 = arith.constant 0 : index
    %c28 = arith.constant 28 : index
    %c0_253 = arith.constant 0 : index
    %c0_254 = arith.constant 0 : index
    %321 = vector.load %arg1[%c0_252, %c28, %c0_253, %c0_254] : memref<1x33x45x64xf32, #tpu.memory_space<vmem>>, vector<1x1x45x64xf32>
    %322 = vector.shape_cast %321 : vector<1x1x45x64xf32> to vector<45x64xf32>
    %c0_255 = arith.constant 0 : index
    %c29 = arith.constant 29 : index
    %c0_256 = arith.constant 0 : index
    %c0_257 = arith.constant 0 : index
    %323 = vector.load %arg1[%c0_255, %c29, %c0_256, %c0_257] : memref<1x33x45x64xf32, #tpu.memory_space<vmem>>, vector<1x1x45x64xf32>
    %324 = vector.shape_cast %323 : vector<1x1x45x64xf32> to vector<45x64xf32>
    %325 = arith.addf %322, %324 : vector<45x64xf32>
    %c0_258 = arith.constant 0 : index
    %c30 = arith.constant 30 : index
    %c0_259 = arith.constant 0 : index
    %c0_260 = arith.constant 0 : index
    %326 = vector.load %arg1[%c0_258, %c30, %c0_259, %c0_260] : memref<1x33x45x64xf32, #tpu.memory_space<vmem>>, vector<1x1x45x64xf32>
    %327 = vector.shape_cast %326 : vector<1x1x45x64xf32> to vector<45x64xf32>
    %328 = arith.addf %325, %327 : vector<45x64xf32>
    %c0_261 = arith.constant 0 : index
    %c31 = arith.constant 31 : index
    %c0_262 = arith.constant 0 : index
    %c0_263 = arith.constant 0 : index
    %329 = vector.load %arg1[%c0_261, %c31, %c0_262, %c0_263] : memref<1x33x45x64xf32, #tpu.memory_space<vmem>>, vector<1x1x45x64xf32>
    %330 = vector.shape_cast %329 : vector<1x1x45x64xf32> to vector<45x64xf32>
    %331 = arith.addf %328, %330 : vector<45x64xf32>
    %c0_264 = arith.constant 0 : index
    %c32 = arith.constant 32 : index
    %c0_265 = arith.constant 0 : index
    %c0_266 = arith.constant 0 : index
    %332 = vector.load %arg1[%c0_264, %c32, %c0_265, %c0_266] : memref<1x33x45x64xf32, #tpu.memory_space<vmem>>, vector<1x1x45x64xf32>
    %333 = vector.shape_cast %332 : vector<1x1x45x64xf32> to vector<45x64xf32>
    %334 = arith.addf %331, %333 : vector<45x64xf32>
    %335 = vector.extract_strided_slice %334 {offsets = [0, 0], sizes = [6, 64], strides = [1, 1]} : vector<45x64xf32> to vector<6x64xf32>
    %cst_267 = arith.constant dense<0.000000e+00> : vector<64xf32>
    %336 = vector.multi_reduction <add>, %335, %cst_267 [0] : vector<6x64xf32> to vector<64xf32>
    %337 = vector.shape_cast %336 : vector<64xf32> to vector<1x64xf32>
    %cst_268 = arith.constant 1.562500e-02 : f32
    %338 = vector.broadcast %cst_268 : f32 to vector<1x64xf32>
    %339 = arith.mulf %337, %338 : vector<1x64xf32>
    %340 = arith.truncf %339 : vector<1x64xf32> to vector<1x64xbf16>
    %c4_269 = arith.constant 4 : index
    %c0_270 = arith.constant 0 : index
    %c0_271 = arith.constant 0 : index
    %c0_272 = arith.constant 0 : index
    %341 = vector.load %arg2[%c4_269, %c0_270, %c0_271, %c0_272] : memref<5x6x64x128xbf16, #tpu.memory_space<vmem>>, vector<1x1x64x128xbf16>
    %342 = vector.shape_cast %341 : vector<1x1x64x128xbf16> to vector<64x128xbf16>
    %cst_273 = arith.constant dense<0.000000e+00> : vector<1x128xf32>
    %343 = tpu.matmul %340, %342, %cst_273 {dimension_numbers = #tpu.dot_dimension_numbers<[1], [0], [0], [1], [0, 0, 1, 1], [], []>} : vector<1x64xbf16>, vector<64x128xbf16>, vector<1x128xf32> -> vector<1x128xf32>
    %344 = arith.addf %320, %343 : vector<1x128xf32>
    %345 = vector.extract_strided_slice %334 {offsets = [6, 0], sizes = [8, 64], strides = [1, 1]} : vector<45x64xf32> to vector<8x64xf32>
    %cst_274 = arith.constant dense<0.000000e+00> : vector<64xf32>
    %346 = vector.multi_reduction <add>, %345, %cst_274 [0] : vector<8x64xf32> to vector<64xf32>
    %347 = vector.shape_cast %346 : vector<64xf32> to vector<1x64xf32>
    %cst_275 = arith.constant 1.562500e-02 : f32
    %348 = vector.broadcast %cst_275 : f32 to vector<1x64xf32>
    %349 = arith.mulf %347, %348 : vector<1x64xf32>
    %350 = arith.truncf %349 : vector<1x64xf32> to vector<1x64xbf16>
    %c4_276 = arith.constant 4 : index
    %c1_277 = arith.constant 1 : index
    %c0_278 = arith.constant 0 : index
    %c0_279 = arith.constant 0 : index
    %351 = vector.load %arg2[%c4_276, %c1_277, %c0_278, %c0_279] : memref<5x6x64x128xbf16, #tpu.memory_space<vmem>>, vector<1x1x64x128xbf16>
    %352 = vector.shape_cast %351 : vector<1x1x64x128xbf16> to vector<64x128xbf16>
    %cst_280 = arith.constant dense<0.000000e+00> : vector<1x128xf32>
    %353 = tpu.matmul %350, %352, %cst_280 {dimension_numbers = #tpu.dot_dimension_numbers<[1], [0], [0], [1], [0, 0, 1, 1], [], []>} : vector<1x64xbf16>, vector<64x128xbf16>, vector<1x128xf32> -> vector<1x128xf32>
    %354 = arith.addf %344, %353 : vector<1x128xf32>
    %355 = vector.extract_strided_slice %334 {offsets = [14, 0], sizes = [8, 64], strides = [1, 1]} : vector<45x64xf32> to vector<8x64xf32>
    %cst_281 = arith.constant dense<0.000000e+00> : vector<64xf32>
    %356 = vector.multi_reduction <add>, %355, %cst_281 [0] : vector<8x64xf32> to vector<64xf32>
    %357 = vector.shape_cast %356 : vector<64xf32> to vector<1x64xf32>
    %cst_282 = arith.constant 1.562500e-02 : f32
    %358 = vector.broadcast %cst_282 : f32 to vector<1x64xf32>
    %359 = arith.mulf %357, %358 : vector<1x64xf32>
    %360 = arith.truncf %359 : vector<1x64xf32> to vector<1x64xbf16>
    %c4_283 = arith.constant 4 : index
    %c2_284 = arith.constant 2 : index
    %c0_285 = arith.constant 0 : index
    %c0_286 = arith.constant 0 : index
    %361 = vector.load %arg2[%c4_283, %c2_284, %c0_285, %c0_286] : memref<5x6x64x128xbf16, #tpu.memory_space<vmem>>, vector<1x1x64x128xbf16>
    %362 = vector.shape_cast %361 : vector<1x1x64x128xbf16> to vector<64x128xbf16>
    %cst_287 = arith.constant dense<0.000000e+00> : vector<1x128xf32>
    %363 = tpu.matmul %360, %362, %cst_287 {dimension_numbers = #tpu.dot_dimension_numbers<[1], [0], [0], [1], [0, 0, 1, 1], [], []>} : vector<1x64xbf16>, vector<64x128xbf16>, vector<1x128xf32> -> vector<1x128xf32>
    %364 = arith.addf %354, %363 : vector<1x128xf32>
    %365 = vector.extract_strided_slice %334 {offsets = [22, 0], sizes = [8, 64], strides = [1, 1]} : vector<45x64xf32> to vector<8x64xf32>
    %cst_288 = arith.constant dense<0.000000e+00> : vector<64xf32>
    %366 = vector.multi_reduction <add>, %365, %cst_288 [0] : vector<8x64xf32> to vector<64xf32>
    %367 = vector.shape_cast %366 : vector<64xf32> to vector<1x64xf32>
    %cst_289 = arith.constant 1.562500e-02 : f32
    %368 = vector.broadcast %cst_289 : f32 to vector<1x64xf32>
    %369 = arith.mulf %367, %368 : vector<1x64xf32>
    %370 = arith.truncf %369 : vector<1x64xf32> to vector<1x64xbf16>
    %c4_290 = arith.constant 4 : index
    %c3_291 = arith.constant 3 : index
    %c0_292 = arith.constant 0 : index
    %c0_293 = arith.constant 0 : index
    %371 = vector.load %arg2[%c4_290, %c3_291, %c0_292, %c0_293] : memref<5x6x64x128xbf16, #tpu.memory_space<vmem>>, vector<1x1x64x128xbf16>
    %372 = vector.shape_cast %371 : vector<1x1x64x128xbf16> to vector<64x128xbf16>
    %cst_294 = arith.constant dense<0.000000e+00> : vector<1x128xf32>
    %373 = tpu.matmul %370, %372, %cst_294 {dimension_numbers = #tpu.dot_dimension_numbers<[1], [0], [0], [1], [0, 0, 1, 1], [], []>} : vector<1x64xbf16>, vector<64x128xbf16>, vector<1x128xf32> -> vector<1x128xf32>
    %374 = arith.addf %364, %373 : vector<1x128xf32>
    %375 = vector.extract_strided_slice %334 {offsets = [30, 0], sizes = [8, 64], strides = [1, 1]} : vector<45x64xf32> to vector<8x64xf32>
    %cst_295 = arith.constant dense<0.000000e+00> : vector<64xf32>
    %376 = vector.multi_reduction <add>, %375, %cst_295 [0] : vector<8x64xf32> to vector<64xf32>
    %377 = vector.shape_cast %376 : vector<64xf32> to vector<1x64xf32>
    %cst_296 = arith.constant 1.562500e-02 : f32
    %378 = vector.broadcast %cst_296 : f32 to vector<1x64xf32>
    %379 = arith.mulf %377, %378 : vector<1x64xf32>
    %380 = arith.truncf %379 : vector<1x64xf32> to vector<1x64xbf16>
    %c4_297 = arith.constant 4 : index
    %c4_298 = arith.constant 4 : index
    %c0_299 = arith.constant 0 : index
    %c0_300 = arith.constant 0 : index
    %381 = vector.load %arg2[%c4_297, %c4_298, %c0_299, %c0_300] : memref<5x6x64x128xbf16, #tpu.memory_space<vmem>>, vector<1x1x64x128xbf16>
    %382 = vector.shape_cast %381 : vector<1x1x64x128xbf16> to vector<64x128xbf16>
    %cst_301 = arith.constant dense<0.000000e+00> : vector<1x128xf32>
    %383 = tpu.matmul %380, %382, %cst_301 {dimension_numbers = #tpu.dot_dimension_numbers<[1], [0], [0], [1], [0, 0, 1, 1], [], []>} : vector<1x64xbf16>, vector<64x128xbf16>, vector<1x128xf32> -> vector<1x128xf32>
    %384 = arith.addf %374, %383 : vector<1x128xf32>
    %385 = vector.extract_strided_slice %334 {offsets = [38, 0], sizes = [7, 64], strides = [1, 1]} : vector<45x64xf32> to vector<7x64xf32>
    %cst_302 = arith.constant dense<0.000000e+00> : vector<64xf32>
    %386 = vector.multi_reduction <add>, %385, %cst_302 [0] : vector<7x64xf32> to vector<64xf32>
    %387 = vector.shape_cast %386 : vector<64xf32> to vector<1x64xf32>
    %cst_303 = arith.constant 1.562500e-02 : f32
    %388 = vector.broadcast %cst_303 : f32 to vector<1x64xf32>
    %389 = arith.mulf %387, %388 : vector<1x64xf32>
    %390 = arith.truncf %389 : vector<1x64xf32> to vector<1x64xbf16>
    %c4_304 = arith.constant 4 : index
    %c5_305 = arith.constant 5 : index
    %c0_306 = arith.constant 0 : index
    %c0_307 = arith.constant 0 : index
    %391 = vector.load %arg2[%c4_304, %c5_305, %c0_306, %c0_307] : memref<5x6x64x128xbf16, #tpu.memory_space<vmem>>, vector<1x1x64x128xbf16>
    %392 = vector.shape_cast %391 : vector<1x1x64x128xbf16> to vector<64x128xbf16>
    %cst_308 = arith.constant dense<0.000000e+00> : vector<1x128xf32>
    %393 = tpu.matmul %390, %392, %cst_308 {dimension_numbers = #tpu.dot_dimension_numbers<[1], [0], [0], [1], [0, 0, 1, 1], [], []>} : vector<1x64xbf16>, vector<64x128xbf16>, vector<1x128xf32> -> vector<1x128xf32>
    %394 = arith.addf %384, %393 : vector<1x128xf32>
    %c0_309 = arith.constant 0 : index
    %c0_310 = arith.constant 0 : index
    %395 = vector.load %arg3[%c0_309, %c0_310] : memref<1x128xf32, #tpu.memory_space<vmem>>, vector<1x128xf32>
    %396 = arith.addf %394, %395 : vector<1x128xf32>
    %cst_311 = arith.constant 0.000000e+00 : f32
    %397 = vector.broadcast %cst_311 : f32 to vector<1x128xf32>
    %398 = arith.maximumf %396, %397 : vector<1x128xf32>
    %399 = arith.truncf %398 : vector<1x128xf32> to vector<1x128xbf16>
    %c0_312 = arith.constant 0 : index
    %c0_313 = arith.constant 0 : index
    %400 = vector.load %arg4[%c0_312, %c0_313] : memref<128x128xbf16, #tpu.memory_space<vmem>>, vector<128x128xbf16>
    %cst_314 = arith.constant dense<0.000000e+00> : vector<1x128xf32>
    %401 = tpu.matmul %399, %400, %cst_314 {dimension_numbers = #tpu.dot_dimension_numbers<[1], [0], [0], [1], [0, 0, 1, 1], [], []>} : vector<1x128xbf16>, vector<128x128xbf16>, vector<1x128xf32> -> vector<1x128xf32>
    %c0_315 = arith.constant 0 : index
    %c0_316 = arith.constant 0 : index
    %402 = vector.load %arg5[%c0_315, %c0_316] : memref<1x128xf32, #tpu.memory_space<vmem>>, vector<1x128xf32>
    %403 = arith.addf %401, %402 : vector<1x128xf32>
    %c0_317 = arith.constant 0 : index
    %c0_318 = arith.constant 0 : index
    %c0_319 = arith.constant 0 : index
    %404 = vector.load %arg6[%c0_317, %c0_318, %c0_319] : memref<1x1x128xf32, #tpu.memory_space<vmem>>, vector<1x1x128xf32>
    %405 = vector.shape_cast %404 : vector<1x1x128xf32> to vector<1x128xf32>
    %406 = vector.shape_cast %403 : vector<1x128xf32> to vector<1x1x128xf32>
    tpu.vector_store %arg6[%c0_317, %c0_318, %c0_319], %406 {strides = array<i32>} : memref<1x1x128xf32, #tpu.memory_space<vmem>>, vector<1x1x128xf32>,
    return
  }
  func.func @transform_0(%arg0: i32) -> (i32, i32, i32, i32) {
    %c0_i32 = arith.constant 0 : i32
    %c0_i32_0 = arith.constant 0 : i32
    %c0_i32_1 = arith.constant 0 : i32
    %c0_i32_2 = arith.constant 0 : i32
    return %arg0, %c0_i32, %c0_i32_0, %c0_i32_1 : i32, i32, i32, i32
  }
  func.func @transform_1(%arg0: i32) -> (i32, i32, i32, i32) {
    %c0_i32 = arith.constant 0 : i32
    %c0_i32_0 = arith.constant 0 : i32
    %c0_i32_1 = arith.constant 0 : i32
    %c0_i32_2 = arith.constant 0 : i32
    %c0_i32_3 = arith.constant 0 : i32
    return %c0_i32, %c0_i32_0, %c0_i32_1, %c0_i32_2 : i32, i32, i32, i32
  }
  func.func @transform_2(%arg0: i32) -> (i32, i32) {
    %c0_i32 = arith.constant 0 : i32
    %c0_i32_0 = arith.constant 0 : i32
    %c0_i32_1 = arith.constant 0 : i32
    return %c0_i32, %c0_i32_0 : i32, i32
  }
  func.func @transform_3(%arg0: i32) -> (i32, i32) {
    %c0_i32 = arith.constant 0 : i32
    %c0_i32_0 = arith.constant 0 : i32
    %c0_i32_1 = arith.constant 0 : i32
    return %c0_i32, %c0_i32_0 : i32, i32
  }
  func.func @transform_4(%arg0: i32) -> (i32, i32) {
    %c0_i32 = arith.constant 0 : i32
    %c0_i32_0 = arith.constant 0 : i32
    %c0_i32_1 = arith.constant 0 : i32
    return %c0_i32, %c0_i32_0 : i32, i32
  }
  func.func @transform_5(%arg0: i32) -> (i32, i32, i32) {
    %c0_i32 = arith.constant 0 : i32
    %c0_i32_0 = arith.constant 0 : i32
    %c0_i32_1 = arith.constant 0 : i32
    return %arg0, %c0_i32, %c0_i32_0 : i32, i32, i32
  }
}

</mosaic_0001>

<llo_original>
// kernel: full_image_encoder.1
$region0: #{full_image_encoder.1}
  #allocation0 [shape = 'u32[]', space=smem, size = 0x4, offset = 0x4, fixed_abs, tag = 'smem constant byte address 0x4 - core index']
  #allocation1 [shape = 'u32[144,128]{1,0:T(1,128)}', space=vmem, size = 0x12000, scoped, tag = 'internal scratch']
  %s0 = inlined_call_operand.vmem [shape: f32[2,33,45,64], index: 0, kind: input, shape index: {}]
  %s1 = inlined_call_operand.vmem [shape: bf16[5,6,64,128], index: 1, kind: input, shape index: {}]
  %s2 = inlined_call_operand.vmem [shape: f32[1,128], index: 2, kind: input, shape index: {}]
  %s3 = inlined_call_operand.vmem [shape: bf16[128,128], index: 3, kind: input, shape index: {}]
  %s4 = inlined_call_operand.vmem [shape: f32[1,128], index: 4, kind: input, shape index: {}]
  %s5 = inlined_call_operand.vmem [shape: f32[2,1,128], index: 5, kind: output, shape index: {}]
  %s6 = sld [smem:[#allocation0]]
  $region53: #{full_image_encoder.1} parent=0
    _
  %s8 = ssub.s32 1, %s6
  %s9 = scalar_select 0, %s8, %s6
  loop: start=0, step=1, limit=4
  $region2: #{full_image_encoder.1} parent=0 // loop_pre_header
    _
  $region3: #{full_image_encoder.1} parent=0 // loop_header
    %s11 = sphi 0, %s15
    %p12 = scmp.ge.s32.totalorder %s11, 4
    %s21 = sphi 0, %s23
    %s24 = sphi 0, %s21
    %s25 = sphi 0, %s24
    %s41 = sphi 0, %s25
    %s45 = sphi 0, %s45
    %s47 = sphi 0, %s45
    %s48 = sphi 0, %s47
    %s62 = sphi 0, %s48
    %s66 = sphi 0, %s66
    %s68 = sphi 0, %s66
    %s69 = sphi 0, %s68
    %s83 = sphi 0, %s69
    %s87 = sphi 0, %s87
    %s89 = sphi 0, %s87
    %s90 = sphi 0, %s89
    %s104 = sphi 0, %s90
    %s108 = sphi 0, %s108
    %s110 = sphi 0, %s108
    %s111 = sphi 0, %s110
    %s125 = sphi 0, %s111
    %s131 = sphi 0, %s133
    %s134 = sphi 0, %s131
    %s135 = sphi 0, %s134
    %s151 = sphi 0, %s135
  $region4: #{full_image_encoder.1} parent=0 // loop_header_branch
    %14 = sbr.rel (%p12) target = $region8
  $region5: #{full_image_encoder.1} parent=0 // loop_body
    %s16 = ssub.s32 %s11, 1
    %s17 = ssub.s32 %s11, 2
    %s18 = sadd.s32 %s11, 1
    %s19 = ssub.s32 %s11, %s18
    %p20 = scmp.eq.s32.totalorder %s19, 0
    %s22 = sadd.s32 %s21, 1
    %s23 = scalar_select %p20, %s21, %s22
    %p26 = pneg %p20
    %p27 = scmp.eq.s32.totalorder %s11, 1
    %p28 = por %p26, %p27
    %p29 = scmp.ne.s32.totalorder %s21, %s24
    %p30 = scmp.eq.s32.totalorder %s11, 0
    %p31 = por %p29, %p30
    %p32 = scmp.ne.s32.totalorder %s21, %s24
    %p33 = scmp.eq.s32.totalorder %s16, 1
    %p34 = por %p32, %p33
    %p35 = scmp.ne.s32.totalorder %s24, %s25
    %p36 = scmp.eq.s32.totalorder %s16, 0
    %p37 = por %p35, %p36
    %p38 = scmp.ne.s32.totalorder %s24, %s25
    %p39 = scmp.eq.s32.totalorder %s17, 1
    %p40 = por %p38, %p39
    %p42 = scmp.ne.s32.totalorder %s25, %s41
    %p43 = scmp.eq.s32.totalorder %s17, 0
    %p44 = por %p42, %p43
    %s46 = sadd.s32 %s45, 1
    %p49 = scmp.eq.s32.totalorder %s11, 1
    %p50 = scmp.ne.s32.totalorder %s45, %s47
    %p51 = scmp.eq.s32.totalorder %s11, 0
    %p52 = por %p50, %p51
    %p53 = scmp.ne.s32.totalorder %s45, %s47
    %p54 = scmp.eq.s32.totalorder %s16, 1
    %p55 = por %p53, %p54
    %p56 = scmp.ne.s32.totalorder %s47, %s48
    %p57 = scmp.eq.s32.totalorder %s16, 0
    %p58 = por %p56, %p57
    %p59 = scmp.ne.s32.totalorder %s47, %s48
    %p60 = scmp.eq.s32.totalorder %s17, 1
    %p61 = por %p59, %p60
    %p63 = scmp.ne.s32.totalorder %s48, %s62
    %p64 = scmp.eq.s32.totalorder %s17, 0
    %p65 = por %p63, %p64
    %s67 = sadd.s32 %s66, 1
    %p70 = scmp.eq.s32.totalorder %s11, 1
    %p71 = scmp.ne.s32.totalorder %s66, %s68
    %p72 = scmp.eq.s32.totalorder %s11, 0
    %p73 = por %p71, %p72
    %p74 = scmp.ne.s32.totalorder %s66, %s68
    %p75 = scmp.eq.s32.totalorder %s16, 1
    %p76 = por %p74, %p75
    %p77 = scmp.ne.s32.totalorder %s68, %s69
    %p78 = scmp.eq.s32.totalorder %s16, 0
    %p79 = por %p77, %p78
    %p80 = scmp.ne.s32.totalorder %s68, %s69
    %p81 = scmp.eq.s32.totalorder %s17, 1
    %p82 = por %p80, %p81
    %p84 = scmp.ne.s32.totalorder %s69, %s83
    %p85 = scmp.eq.s32.totalorder %s17, 0
    %p86 = por %p84, %p85
    %s88 = sadd.s32 %s87, 1
    %p91 = scmp.eq.s32.totalorder %s11, 1
    %p92 = scmp.ne.s32.totalorder %s87, %s89
    %p93 = scmp.eq.s32.totalorder %s11, 0
    %p94 = por %p92, %p93
    %p95 = scmp.ne.s32.totalorder %s87, %s89
    %p96 = scmp.eq.s32.totalorder %s16, 1
    %p97 = por %p95, %p96
    %p98 = scmp.ne.s32.totalorder %s89, %s90
    %p99 = scmp.eq.s32.totalorder %s16, 0
    %p100 = por %p98, %p99
    %p101 = scmp.ne.s32.totalorder %s89, %s90
    %p102 = scmp.eq.s32.totalorder %s17, 1
    %p103 = por %p101, %p102
    %p105 = scmp.ne.s32.totalorder %s90, %s104
    %p106 = scmp.eq.s32.totalorder %s17, 0
    %p107 = por %p105, %p106
    %s109 = sadd.s32 %s108, 1
    %p112 = scmp.eq.s32.totalorder %s11, 1
    %p113 = scmp.ne.s32.totalorder %s108, %s110
    %p114 = scmp.eq.s32.totalorder %s11, 0
    %p115 = por %p113, %p114
    %p116 = scmp.ne.s32.totalorder %s108, %s110
    %p117 = scmp.eq.s32.totalorder %s16, 1
    %p118 = por %p116, %p117
    %p119 = scmp.ne.s32.totalorder %s110, %s111
    %p120 = scmp.eq.s32.totalorder %s16, 0
    %p121 = por %p119, %p120
    %p122 = scmp.ne.s32.totalorder %s110, %s111
    %p123 = scmp.eq.s32.totalorder %s17, 1
    %p124 = por %p122, %p123
    %p126 = scmp.ne.s32.totalorder %s111, %s125
    %p127 = scmp.eq.s32.totalorder %s17, 0
    %p128 = por %p126, %p127
    %s129 = ssub.s32 %s11, %s18
    %p130 = scmp.eq.s32.totalorder %s129, 0
    %s132 = sadd.s32 %s131, 1
    %s133 = scalar_select %p130, %s131, %s132
    %p136 = pneg %p130
    %p137 = scmp.eq.s32.totalorder %s11, 1
    %p138 = por %p136, %p137
    %p139 = scmp.ne.s32.totalorder %s131, %s134
    %p140 = scmp.eq.s32.totalorder %s11, 0
    %p141 = por %p139, %p140
    %p142 = scmp.ne.s32.totalorder %s131, %s134
    %p143 = scmp.eq.s32.totalorder %s16, 1
    %p144 = por %p142, %p143
    %p145 = scmp.ne.s32.totalorder %s134, %s135
    %p146 = scmp.eq.s32.totalorder %s16, 0
    %p147 = por %p145, %p146
    %p148 = scmp.ne.s32.totalorder %s134, %s135
    %p149 = scmp.eq.s32.totalorder %s17, 1
    %p150 = por %p148, %p149
    %p152 = scmp.ne.s32.totalorder %s135, %s151
    %p153 = scmp.eq.s32.totalorder %s17, 0
    %p154 = por %p152, %p153
    %p155 = scmp.le.s32.totalorder 1, %s11
    %p156 = scmp.lt.s32.totalorder %s11, 3
    %p157 = pnand %p155, %p156
    %p158 = pneg %p157
    // Predicated region
    $region9: #{full_image_encoder.1} parent=5 // pred_check
      _
    $region10: #{full_image_encoder.1} parent=5 // pred_check_branch
      %160 = sbr.rel (%p157) target = $region12
    $region11: #{full_image_encoder.1} parent=5 // pred_region
      %s161 = ssub.s32 %s11, 1
      // Predicated region
      $region13: #{full_image_encoder.1} parent=11 // pred_check
        %p162 = pneg %p58
      $region14: #{full_image_encoder.1} parent=11 // pred_check_branch
        %164 = sbr.rel (%p162) target = $region16
      $region15: #{full_image_encoder.1} parent=11 // pred_region
        _
      $region16: #{full_image_encoder.1} parent=11 // pred_fallthru
        _
      // Predicated region
      $region17: #{full_image_encoder.1} parent=11 // pred_check
        %p165 = pneg %p79
      $region18: #{full_image_encoder.1} parent=11 // pred_check_branch
        %167 = sbr.rel (%p165) target = $region20
      $region19: #{full_image_encoder.1} parent=11 // pred_region
        _
      $region20: #{full_image_encoder.1} parent=11 // pred_fallthru
        _
      // Predicated region
      $region21: #{full_image_encoder.1} parent=11 // pred_check
        %p168 = pneg %p100
      $region22: #{full_image_encoder.1} parent=11 // pred_check_branch
        %170 = sbr.rel (%p168) target = $region24
      $region23: #{full_image_encoder.1} parent=11 // pred_region
        _
      $region24: #{full_image_encoder.1} parent=11 // pred_fallthru
        _
      // Predicated region
      $region25: #{full_image_encoder.1} parent=11 // pred_check
        %p171 = pneg %p121
      $region26: #{full_image_encoder.1} parent=11 // pred_check_branch
        %173 = sbr.rel (%p171) target = $region28
      $region27: #{full_image_encoder.1} parent=11 // pred_region
        _
      $region28: #{full_image_encoder.1} parent=11 // pred_fallthru
        _
    $region12: #{full_image_encoder.1} parent=5 // pred_fallthru
      _
    %p174 = scmp.lt.s32.totalorder %s11, 2
    // Predicated region
    $region29: #{full_image_encoder.1} parent=5 // pred_check
      %p175 = pneg %p174
    $region30: #{full_image_encoder.1} parent=5 // pred_check_branch
      %177 = sbr.rel (%p175) target = $region32
    $region31: #{full_image_encoder.1} parent=5 // pred_region
      // Predicated region
      $region33: #{full_image_encoder.1} parent=31 // pred_check
        %p178 = pneg %p31
      $region34: #{full_image_encoder.1} parent=31 // pred_check_branch
        %180 = sbr.rel (%p178) target = $region36
      $region35: #{full_image_encoder.1} parent=31 // pred_region
        %p181 = scmp.lt.s32.totalorder %s11, 1
        %s182 = scalar_select %p181, %s11, 1
        %s183 = smul.addr %s182, 198
        %s184 = smul.addr %s183, 8
        %s185 = scalar_lea.vmem %s0, %s184
      $region36: #{full_image_encoder.1} parent=31 // pred_fallthru
        _
    $region32: #{full_image_encoder.1} parent=5 // pred_fallthru
      _
    %p186 = scmp.le.s32.totalorder 1, %s11
    %p187 = scmp.lt.s32.totalorder %s11, 3
    %p188 = pnand %p186, %p187
    %p189 = pneg %p188
    // Predicated region
    $region37: #{full_image_encoder.1} parent=5 // pred_check
      _
    $region38: #{full_image_encoder.1} parent=5 // pred_check_branch
      %191 = sbr.rel (%p188) target = $region40
    $region39: #{full_image_encoder.1} parent=5 // pred_region
      %s192 = ssub.s32 %s11, 1
      %p193 = scmp.lt.s32.totalorder %s16, 1
      %s194 = scalar_select %p193, %s16, 1
      %s195 = smul.addr %s194, 198
      %s196 = smul.addr %s195, 8
      %s197 = scalar_lea.vmem %s0, %s196
      %p198 = pneg %p37
      %p199 = pneg %p34
      %p200 = pneg %p58
      %p201 = pneg %p55
      %p202 = pneg %p79
      %p203 = pneg %p76
      %p204 = pneg %p100
      %p205 = pneg %p97
      %p206 = pneg %p121
      %p207 = pneg %p118
      %p208 = pneg %p147
      %p209 = pneg %p144
      %p210 = scmp.lt.s32.totalorder %s16, 1
      %s211 = scalar_select %p210, %s16, 1
      %s212 = scalar_lea.vmem %s5, %s211
      %p213 = scmp.lt.s32.totalorder %s16, 1
      %s214 = scalar_select %p213, %s16, 1
      %s215 = smul.addr %s214, 198
      %s216 = smul.addr %s215, 8
      %s217 = scalar_lea.vmem %s0, %s216
      %p218 = scmp.lt.s32.totalorder %s16, 1
      %s219 = scalar_select %p218, %s16, 1
      %s220 = scalar_lea.vmem %s5, %s219
      %v222 = vld [vmem:[%s217] sm:$0xff]
      %v223 = vld [vmem:[%s217 + $0x8] sm:$0xff]
      %v224 = vld [vmem:[%s217 + $0x10] sm:$0xff]
      %v225 = vld [vmem:[%s217 + $0x18] sm:$0xff]
      %v226 = vld [vmem:[%s217 + $0x20] sm:$0xff]
      %v227 = vld [vmem:[%s217 + $0x28] sm:$0x1f]
      %s228 = scalar_lea.vmem %s217, 48
      %v229 = vld [vmem:[%s228] sm:$0xff]
      %v230 = vld [vmem:[%s228 + $0x8] sm:$0xff]
      %v231 = vld [vmem:[%s228 + $0x10] sm:$0xff]
      %v232 = vld [vmem:[%s228 + $0x18] sm:$0xff]
      %v233 = vld [vmem:[%s228 + $0x20] sm:$0xff]
      %v234 = vld [vmem:[%s228 + $0x28] sm:$0x1f]
      %v235 = vadd.f32 %v222, %v229
      %v236 = vadd.f32 %v223, %v230
      %v237 = vadd.f32 %v224, %v231
      %v238 = vadd.f32 %v225, %v232
      %v239 = vadd.f32 %v226, %v233
      %v240 = vadd.f32 %v227, %v234
      %s241 = scalar_lea.vmem %s217, 96
      %v242 = vld [vmem:[%s241] sm:$0xff]
      %v243 = vld [vmem:[%s241 + $0x8] sm:$0xff]
      %v244 = vld [vmem:[%s241 + $0x10] sm:$0xff]
      %v245 = vld [vmem:[%s241 + $0x18] sm:$0xff]
      %v246 = vld [vmem:[%s241 + $0x20] sm:$0xff]
      %v247 = vld [vmem:[%s241 + $0x28] sm:$0x1f]
      %v248 = vadd.f32 %v235, %v242
      %v249 = vadd.f32 %v236, %v243
      %v250 = vadd.f32 %v237, %v244
      %v251 = vadd.f32 %v238, %v245
      %v252 = vadd.f32 %v239, %v246
      %v253 = vadd.f32 %v240, %v247
      %s254 = scalar_lea.vmem %s217, 144
      %v255 = vld [vmem:[%s254] sm:$0xff]
      %v256 = vld [vmem:[%s254 + $0x8] sm:$0xff]
      %v257 = vld [vmem:[%s254 + $0x10] sm:$0xff]
      %v258 = vld [vmem:[%s254 + $0x18] sm:$0xff]
      %v259 = vld [vmem:[%s254 + $0x20] sm:$0xff]
      %v260 = vld [vmem:[%s254 + $0x28] sm:$0x1f]
      %v261 = vadd.f32 %v248, %v255
      %v262 = vadd.f32 %v249, %v256
      %v263 = vadd.f32 %v250, %v257
      %v264 = vadd.f32 %v251, %v258
      %v265 = vadd.f32 %v252, %v259
      %v266 = vadd.f32 %v253, %v260
      %vm267 = vcmask 521216
      %v268 = vsel %vm267, %v261, 0.0
      %v269 = vrot.slane %v268, 4
      %v270 = vadd.f32 %v268, %v269
      %v271 = vrot.slane %v270, 2
      %v272 = vadd.f32 %v270, %v271
      %v273 = vrot.slane %v272, 1
      %v274 = vadd.f32 %v272, %v273
      %v275 = vmul.f32 %v274, 0.015625
      %v276 = vpack.c.bf16 %v275, %v275
      %v277 = vld [vmem:[%s1] sm:$0xf]
      %v278 = vld [vmem:[%s1 + $0x4] sm:$0xf]
      %v279 = vld [vmem:[%s1 + $0x8] sm:$0xf]
      %v280 = vld [vmem:[%s1 + $0xc] sm:$0xf]
      %v281 = vld [vmem:[%s1 + $0x10] sm:$0xf]
      %v282 = vld [vmem:[%s1 + $0x14] sm:$0xf]
      %v283 = vld [vmem:[%s1 + $0x18] sm:$0xf]
      %v284 = vld [vmem:[%s1 + $0x1c] sm:$0xf]
      %vm287 = vcmask 1041408
      %v288 = vrot.slane %v261, 6
      %v289 = vrot.slane %v262, 6
      %v290 = vsel %vm287, %v288, %v289
      %vm292 = vcmask 523264
      %v293 = vsel %vm292, %v290, 0.0
      %v294 = vrot.slane %v293, 4
      %v295 = vadd.f32 %v293, %v294
      %v296 = vrot.slane %v295, 2
      %v297 = vadd.f32 %v295, %v296
      %v298 = vrot.slane %v297, 1
      %v299 = vadd.f32 %v297, %v298
      %v300 = vmul.f32 %v299, 0.015625
      %v301 = vpack.c.bf16 %v300, %v300
      %s302 = scalar_lea.vmem %s1, 32
      %v303 = vld [vmem:[%s302] sm:$0xf]
      %v304 = vld [vmem:[%s302 + $0x4] sm:$0xf]
      %v305 = vld [vmem:[%s302 + $0x8] sm:$0xf]
      %v306 = vld [vmem:[%s302 + $0xc] sm:$0xf]
      %v307 = vld [vmem:[%s302 + $0x10] sm:$0xf]
      %v308 = vld [vmem:[%s302 + $0x14] sm:$0xf]
      %v309 = vld [vmem:[%s302 + $0x18] sm:$0xf]
      %v310 = vld [vmem:[%s302 + $0x1c] sm:$0xf]
      %v319 = vunpack.c.l.b16 %v303
      %v320 = vunpack.c.l.b16 %v304
      %v321 = vunpack.c.l.b16 %v305
      %v322 = vunpack.c.l.b16 %v306
      %v323 = vunpack.c.l.b16 %v307
      %v324 = vunpack.c.l.b16 %v308
      %v325 = vunpack.c.l.b16 %v309
      %v326 = vunpack.c.l.b16 %v310
      %v327 = vpack.c.b16 %v320, %v319
      %v328 = vpack.c.b16 %v322, %v321
      %v329 = vpack.c.b16 %v324, %v323
      %v330 = vpack.c.b16 %v326, %v325
      %v336 = vsel %vm292, %v301, 0
      %338 = vmatprep.subr.bf16.mxu0 0
      %339 = vmatpush1.bf16.msra.mxu0 %v327
      %340 = vmatprep.subr.bf16.mxu0 0
      %341 = vmatpush1.bf16.msra.mxu0 %v328
      %342 = vmatprep.subr.bf16.mxu0 0
      %343 = vmatpush1.bf16.msra.mxu0 %v329
      %344 = vmatprep.subr.bf16.mxu0 0
      %345 = vmatpush1.bf16.msra.mxu0 %v330
      %346 = vmatprep.subr.bf16.mxu0 0
      %347 = vmatpush1.bf16.msra.mxu0 0
      %348 = vmatprep.subr.bf16.mxu0 0
      %349 = vmatpush1.bf16.msra.mxu0 0
      %350 = vmatprep.subr.bf16.mxu0 0
      %351 = vmatpush1.bf16.msra.mxu0 0
      %352 = vmatprep.subr.bf16.mxu0 0
      %353 = vmatpush1.bf16.msra.mxu0 0
      %354 = vmatprep.subr.bf16.mxu0 0
      %355 = vmatpush1.bf16.msra.mxu0 0
      %356 = vmatprep.subr.bf16.mxu0 0
      %357 = vmatpush1.bf16.msra.mxu0 0
      %358 = vmatprep.subr.bf16.mxu0 0
      %359 = vmatpush1.bf16.msra.mxu0 0
      %360 = vmatprep.subr.bf16.mxu0 0
      %361 = vmatpush1.bf16.msra.mxu0 0
      %362 = vmatprep.subr.bf16.mxu0 0
      %363 = vmatpush1.bf16.msra.mxu0 0
      %364 = vmatprep.subr.bf16.mxu0 0
      %365 = vmatpush1.bf16.msra.mxu0 0
      %366 = vmatprep.subr.bf16.mxu0 0
      %367 = vmatpush1.bf16.msra.mxu0 0
      %368 = vmatprep.subr.bf16.mxu0 0
      %369 = vmatpush1.bf16.msra.mxu0 0
      %370 = vmatprep.mubr.bf16.mxu0 0
      %371 = vmatmul.mubr.bf16.gmra.mrb[0].mxu0 %v336
      %v372 = vpop.f32.mrb[0].mxu0
      %v373 = vadd.f32 0.0, %v372
      %v374 = vpop.f32.mrb[0].mxu0
      %v375 = vpop.f32.mrb[0].mxu0
      %v376 = vpop.f32.mrb[0].mxu0
      %377 = vdwg.mxu0
      %v386 = vunpack.c.l.b16 %v277
      %v387 = vunpack.c.l.b16 %v278
      %v388 = vunpack.c.l.b16 %v279
      %v389 = vunpack.c.l.b16 %v280
      %v390 = vunpack.c.l.b16 %v281
      %v391 = vunpack.c.l.b16 %v282
      %v392 = vunpack.c.l.b16 %v283
      %v393 = vunpack.c.l.b16 %v284
      %v394 = vpack.c.b16 %v387, %v386
      %v395 = vpack.c.b16 %v389, %v388
      %v396 = vpack.c.b16 %v391, %v390
      %v397 = vpack.c.b16 %v393, %v392
      %v403 = vsel %vm292, %v276, 0
      %405 = vmatprep.subr.bf16.mxu0 0
      %406 = vmatpush1.bf16.msra.mxu0 %v394
      %407 = vmatprep.subr.bf16.mxu0 0
      %408 = vmatpush1.bf16.msra.mxu0 %v395
      %409 = vmatprep.subr.bf16.mxu0 0
      %410 = vmatpush1.bf16.msra.mxu0 %v396
      %411 = vmatprep.subr.bf16.mxu0 0
      %412 = vmatpush1.bf16.msra.mxu0 %v397
      %413 = vmatprep.subr.bf16.mxu0 0
      %414 = vmatpush1.bf16.msra.mxu0 0
      %415 = vmatprep.subr.bf16.mxu0 0
      %416 = vmatpush1.bf16.msra.mxu0 0
      %417 = vmatprep.subr.bf16.mxu0 0
      %418 = vmatpush1.bf16.msra.mxu0 0
      %419 = vmatprep.subr.bf16.mxu0 0
      %420 = vmatpush1.bf16.msra.mxu0 0
      %421 = vmatprep.subr.bf16.mxu0 0
      %422 = vmatpush1.bf16.msra.mxu0 0
      %423 = vmatprep.subr.bf16.mxu0 0
      %424 = vmatpush1.bf16.msra.mxu0 0
      %425 = vmatprep.subr.bf16.mxu0 0
      %426 = vmatpush1.bf16.msra.mxu0 0
      %427 = vmatprep.subr.bf16.mxu0 0
      %428 = vmatpush1.bf16.msra.mxu0 0
      %429 = vmatprep.subr.bf16.mxu0 0
      %430 = vmatpush1.bf16.msra.mxu0 0
      %431 = vmatprep.subr.bf16.mxu0 0
      %432 = vmatpush1.bf16.msra.mxu0 0
      %433 = vmatprep.subr.bf16.mxu0 0
      %434 = vmatpush1.bf16.msra.mxu0 0
      %435 = vmatprep.subr.bf16.mxu0 0
      %436 = vmatpush1.bf16.msra.mxu0 0
      %437 = vmatprep.mubr.bf16.mxu0 0
      %438 = vmatmul.mubr.bf16.gmra.mrb[0].mxu0 %v403
      %v439 = vpop.f32.mrb[0].mxu0
      %v440 = vadd.f32 %v373, %v439
      %v441 = vpop.f32.mrb[0].mxu0
      %v442 = vpop.f32.mrb[0].mxu0
      %v443 = vpop.f32.mrb[0].mxu0
      %444 = vdwg.mxu0
      %v446 = vrot.slane %v263, 6
      %v447 = vsel %vm287, %v289, %v446
      %v449 = vsel %vm292, %v447, 0.0
      %v450 = vrot.slane %v449, 4
      %v451 = vadd.f32 %v449, %v450
      %v452 = vrot.slane %v451, 2
      %v453 = vadd.f32 %v451, %v452
      %v454 = vrot.slane %v453, 1
      %v455 = vadd.f32 %v453, %v454
      %v456 = vmul.f32 %v455, 0.015625
      %v457 = vpack.c.bf16 %v456, %v456
      %s458 = scalar_lea.vmem %s1, 64
      %v459 = vld [vmem:[%s458] sm:$0xf]
      %v460 = vld [vmem:[%s458 + $0x4] sm:$0xf]
      %v461 = vld [vmem:[%s458 + $0x8] sm:$0xf]
      %v462 = vld [vmem:[%s458 + $0xc] sm:$0xf]
      %v463 = vld [vmem:[%s458 + $0x10] sm:$0xf]
      %v464 = vld [vmem:[%s458 + $0x14] sm:$0xf]
      %v465 = vld [vmem:[%s458 + $0x18] sm:$0xf]
      %v466 = vld [vmem:[%s458 + $0x1c] sm:$0xf]
      %v475 = vunpack.c.l.b16 %v459
      %v476 = vunpack.c.l.b16 %v460
      %v477 = vunpack.c.l.b16 %v461
      %v478 = vunpack.c.l.b16 %v462
      %v479 = vunpack.c.l.b16 %v463
      %v480 = vunpack.c.l.b16 %v464
      %v481 = vunpack.c.l.b16 %v465
      %v482 = vunpack.c.l.b16 %v466
      %v483 = vpack.c.b16 %v476, %v475
      %v484 = vpack.c.b16 %v478, %v477
      %v485 = vpack.c.b16 %v480, %v479
      %v486 = vpack.c.b16 %v482, %v481
      %v492 = vsel %vm292, %v457, 0
      %494 = vmatprep.subr.bf16.mxu0 0
      %495 = vmatpush1.bf16.msra.mxu0 %v483
      %496 = vmatprep.subr.bf16.mxu0 0
      %497 = vmatpush1.bf16.msra.mxu0 %v484
      %498 = vmatprep.subr.bf16.mxu0 0
      %499 = vmatpush1.bf16.msra.mxu0 %v485
      %500 = vmatprep.subr.bf16.mxu0 0
      %501 = vmatpush1.bf16.msra.mxu0 %v486
      %502 = vmatprep.subr.bf16.mxu0 0
      %503 = vmatpush1.bf16.msra.mxu0 0
      %504 = vmatprep.subr.bf16.mxu0 0
      %505 = vmatpush1.bf16.msra.mxu0 0
      %506 = vmatprep.subr.bf16.mxu0 0
      %507 = vmatpush1.bf16.msra.mxu0 0
      %508 = vmatprep.subr.bf16.mxu0 0
      %509 = vmatpush1.bf16.msra.mxu0 0
      %510 = vmatprep.subr.bf16.mxu0 0
      %511 = vmatpush1.bf16.msra.mxu0 0
      %512 = vmatprep.subr.bf16.mxu0 0
      %513 = vmatpush1.bf16.msra.mxu0 0
      %514 = vmatprep.subr.bf16.mxu0 0
      %515 = vmatpush1.bf16.msra.mxu0 0
      %516 = vmatprep.subr.bf16.mxu0 0
      %517 = vmatpush1.bf16.msra.mxu0 0
      %518 = vmatprep.subr.bf16.mxu0 0
      %519 = vmatpush1.bf16.msra.mxu0 0
      %520 = vmatprep.subr.bf16.mxu0 0
      %521 = vmatpush1.bf16.msra.mxu0 0
      %522 = vmatprep.subr.bf16.mxu0 0
      %523 = vmatpush1.bf16.msra.mxu0 0
      %524 = vmatprep.subr.bf16.mxu0 0
      %525 = vmatpush1.bf16.msra.mxu0 0
      %526 = vmatprep.mubr.bf16.mxu0 0
      %527 = vmatmul.mubr.bf16.gmra.mrb[0].mxu0 %v492
      %v528 = vpop.f32.mrb[0].mxu0
      %v529 = vadd.f32 0.0, %v528
      %v530 = vpop.f32.mrb[0].mxu0
      %v531 = vpop.f32.mrb[0].mxu0
      %v532 = vpop.f32.mrb[0].mxu0
      %533 = vdwg.mxu0
      %v534 = vadd.f32 %v440, %v529
      %v536 = vrot.slane %v264, 6
      %v537 = vsel %vm287, %v446, %v536
      %v539 = vsel %vm292, %v537, 0.0
      %v540 = vrot.slane %v539, 4
      %v541 = vadd.f32 %v539, %v540
      %v542 = vrot.slane %v541, 2
      %v543 = vadd.f32 %v541, %v542
      %v544 = vrot.slane %v543, 1
      %v545 = vadd.f32 %v543, %v544
      %v546 = vmul.f32 %v545, 0.015625
      %v547 = vpack.c.bf16 %v546, %v546
      %s548 = scalar_lea.vmem %s1, 96
      %v549 = vld [vmem:[%s548] sm:$0xf]
      %v550 = vld [vmem:[%s548 + $0x4] sm:$0xf]
      %v551 = vld [vmem:[%s548 + $0x8] sm:$0xf]
      %v552 = vld [vmem:[%s548 + $0xc] sm:$0xf]
      %v553 = vld [vmem:[%s548 + $0x10] sm:$0xf]
      %v554 = vld [vmem:[%s548 + $0x14] sm:$0xf]
      %v555 = vld [vmem:[%s548 + $0x18] sm:$0xf]
      %v556 = vld [vmem:[%s548 + $0x1c] sm:$0xf]
      %v565 = vunpack.c.l.b16 %v549
      %v566 = vunpack.c.l.b16 %v550
      %v567 = vunpack.c.l.b16 %v551
      %v568 = vunpack.c.l.b16 %v552
      %v569 = vunpack.c.l.b16 %v553
      %v570 = vunpack.c.l.b16 %v554
      %v571 = vunpack.c.l.b16 %v555
      %v572 = vunpack.c.l.b16 %v556
      %v573 = vpack.c.b16 %v566, %v565
      %v574 = vpack.c.b16 %v568, %v567
      %v575 = vpack.c.b16 %v570, %v569
      %v576 = vpack.c.b16 %v572, %v571
      %v582 = vsel %vm292, %v547, 0
      %584 = vmatprep.subr.bf16.mxu0 0
      %585 = vmatpush1.bf16.msra.mxu0 %v573
      %586 = vmatprep.subr.bf16.mxu0 0
      %587 = vmatpush1.bf16.msra.mxu0 %v574
      %588 = vmatprep.subr.bf16.mxu0 0
      %589 = vmatpush1.bf16.msra.mxu0 %v575
      %590 = vmatprep.subr.bf16.mxu0 0
      %591 = vmatpush1.bf16.msra.mxu0 %v576
      %592 = vmatprep.subr.bf16.mxu0 0
      %593 = vmatpush1.bf16.msra.mxu0 0
      %594 = vmatprep.subr.bf16.mxu0 0
      %595 = vmatpush1.bf16.msra.mxu0 0
      %596 = vmatprep.subr.bf16.mxu0 0
      %597 = vmatpush1.bf16.msra.mxu0 0
      %598 = vmatprep.subr.bf16.mxu0 0
      %599 = vmatpush1.bf16.msra.mxu0 0
      %600 = vmatprep.subr.bf16.mxu0 0
      %601 = vmatpush1.bf16.msra.mxu0 0
      %602 = vmatprep.subr.bf16.mxu0 0
      %603 = vmatpush1.bf16.msra.mxu0 0
      %604 = vmatprep.subr.bf16.mxu0 0
      %605 = vmatpush1.bf16.msra.mxu0 0
      %606 = vmatprep.subr.bf16.mxu0 0
      %607 = vmatpush1.bf16.msra.mxu0 0
      %608 = vmatprep.subr.bf16.mxu0 0
      %609 = vmatpush1.bf16.msra.mxu0 0
      %610 = vmatprep.subr.bf16.mxu0 0
      %611 = vmatpush1.bf16.msra.mxu0 0
      %612 = vmatprep.subr.bf16.mxu0 0
      %613 = vmatpush1.bf16.msra.mxu0 0
      %614 = vmatprep.subr.bf16.mxu0 0
      %615 = vmatpush1.bf16.msra.mxu0 0
      %616 = vmatprep.mubr.bf16.mxu0 0
      %617 = vmatmul.mubr.bf16.gmra.mrb[0].mxu0 %v582
      %v618 = vpop.f32.mrb[0].mxu0
      %v619 = vadd.f32 0.0, %v618
      %v620 = vpop.f32.mrb[0].mxu0
      %v621 = vpop.f32.mrb[0].mxu0
      %v622 = vpop.f32.mrb[0].mxu0
      %623 = vdwg.mxu0
      %v624 = vadd.f32 %v534, %v619
      %v626 = vrot.slane %v265, 6
      %v627 = vsel %vm287, %v536, %v626
      %v629 = vsel %vm292, %v627, 0.0
      %v630 = vrot.slane %v629, 4
      %v631 = vadd.f32 %v629, %v630
      %v632 = vrot.slane %v631, 2
      %v633 = vadd.f32 %v631, %v632
      %v634 = vrot.slane %v633, 1
      %v635 = vadd.f32 %v633, %v634
      %v636 = vmul.f32 %v635, 0.015625
      %v637 = vpack.c.bf16 %v636, %v636
      %s638 = scalar_lea.vmem %s1, 128
      %v639 = vld [vmem:[%s638] sm:$0xf]
      %v640 = vld [vmem:[%s638 + $0x4] sm:$0xf]
      %v641 = vld [vmem:[%s638 + $0x8] sm:$0xf]
      %v642 = vld [vmem:[%s638 + $0xc] sm:$0xf]
      %v643 = vld [vmem:[%s638 + $0x10] sm:$0xf]
      %v644 = vld [vmem:[%s638 + $0x14] sm:$0xf]
      %v645 = vld [vmem:[%s638 + $0x18] sm:$0xf]
      %v646 = vld [vmem:[%s638 + $0x1c] sm:$0xf]
      %v655 = vunpack.c.l.b16 %v639
      %v656 = vunpack.c.l.b16 %v640
      %v657 = vunpack.c.l.b16 %v641
      %v658 = vunpack.c.l.b16 %v642
      %v659 = vunpack.c.l.b16 %v643
      %v660 = vunpack.c.l.b16 %v644
      %v661 = vunpack.c.l.b16 %v645
      %v662 = vunpack.c.l.b16 %v646
      %v663 = vpack.c.b16 %v656, %v655
      %v664 = vpack.c.b16 %v658, %v657
      %v665 = vpack.c.b16 %v660, %v659
      %v666 = vpack.c.b16 %v662, %v661
      %v672 = vsel %vm292, %v637, 0
      %674 = vmatprep.subr.bf16.mxu0 0
      %675 = vmatpush1.bf16.msra.mxu0 %v663
      %676 = vmatprep.subr.bf16.mxu0 0
      %677 = vmatpush1.bf16.msra.mxu0 %v664
      %678 = vmatprep.subr.bf16.mxu0 0
      %679 = vmatpush1.bf16.msra.mxu0 %v665
      %680 = vmatprep.subr.bf16.mxu0 0
      %681 = vmatpush1.bf16.msra.mxu0 %v666
      %682 = vmatprep.subr.bf16.mxu0 0
      %683 = vmatpush1.bf16.msra.mxu0 0
      %684 = vmatprep.subr.bf16.mxu0 0
      %685 = vmatpush1.bf16.msra.mxu0 0
      %686 = vmatprep.subr.bf16.mxu0 0
      %687 = vmatpush1.bf16.msra.mxu0 0
      %688 = vmatprep.subr.bf16.mxu0 0
      %689 = vmatpush1.bf16.msra.mxu0 0
      %690 = vmatprep.subr.bf16.mxu0 0
      %691 = vmatpush1.bf16.msra.mxu0 0
      %692 = vmatprep.subr.bf16.mxu0 0
      %693 = vmatpush1.bf16.msra.mxu0 0
      %694 = vmatprep.subr.bf16.mxu0 0
      %695 = vmatpush1.bf16.msra.mxu0 0
      %696 = vmatprep.subr.bf16.mxu0 0
      %697 = vmatpush1.bf16.msra.mxu0 0
      %698 = vmatprep.subr.bf16.mxu0 0
      %699 = vmatpush1.bf16.msra.mxu0 0
      %700 = vmatprep.subr.bf16.mxu0 0
      %701 = vmatpush1.bf16.msra.mxu0 0
      %702 = vmatprep.subr.bf16.mxu0 0
      %703 = vmatpush1.bf16.msra.mxu0 0
      %704 = vmatprep.subr.bf16.mxu0 0
      %705 = vmatpush1.bf16.msra.mxu0 0
      %706 = vmatprep.mubr.bf16.mxu0 0
      %707 = vmatmul.mubr.bf16.gmra.mrb[0].mxu0 %v672
      %v708 = vpop.f32.mrb[0].mxu0
      %v709 = vadd.f32 0.0, %v708
      %v710 = vpop.f32.mrb[0].mxu0
      %v711 = vpop.f32.mrb[0].mxu0
      %v712 = vpop.f32.mrb[0].mxu0
      %713 = vdwg.mxu0
      %v714 = vadd.f32 %v624, %v709
      %v716 = vrot.slane %v266, 6
      %v717 = vsel %vm287, %v626, %v716
      %vm719 = vcmask 522240
      %v720 = vsel %vm719, %v717, 0.0
      %v721 = vrot.slane %v720, 4
      %v722 = vadd.f32 %v720, %v721
      %v723 = vrot.slane %v722, 2
      %v724 = vadd.f32 %v722, %v723
      %v725 = vrot.slane %v724, 1
      %v726 = vadd.f32 %v724, %v725
      %v727 = vmul.f32 %v726, 0.015625
      %v728 = vpack.c.bf16 %v727, %v727
      %s729 = scalar_lea.vmem %s1, 160
      %v730 = vld [vmem:[%s729] sm:$0xf]
      %v731 = vld [vmem:[%s729 + $0x4] sm:$0xf]
      %v732 = vld [vmem:[%s729 + $0x8] sm:$0xf]
      %v733 = vld [vmem:[%s729 + $0xc] sm:$0xf]
      %v734 = vld [vmem:[%s729 + $0x10] sm:$0xf]
      %v735 = vld [vmem:[%s729 + $0x14] sm:$0xf]
      %v736 = vld [vmem:[%s729 + $0x18] sm:$0xf]
      %v737 = vld [vmem:[%s729 + $0x1c] sm:$0xf]
      %v746 = vunpack.c.l.b16 %v730
      %v747 = vunpack.c.l.b16 %v731
      %v748 = vunpack.c.l.b16 %v732
      %v749 = vunpack.c.l.b16 %v733
      %v750 = vunpack.c.l.b16 %v734
      %v751 = vunpack.c.l.b16 %v735
      %v752 = vunpack.c.l.b16 %v736
      %v753 = vunpack.c.l.b16 %v737
      %v754 = vpack.c.b16 %v747, %v746
      %v755 = vpack.c.b16 %v749, %v748
      %v756 = vpack.c.b16 %v751, %v750
      %v757 = vpack.c.b16 %v753, %v752
      %v763 = vsel %vm292, %v728, 0
      %765 = vmatprep.subr.bf16.mxu0 0
      %766 = vmatpush1.bf16.msra.mxu0 %v754
      %767 = vmatprep.subr.bf16.mxu0 0
      %768 = vmatpush1.bf16.msra.mxu0 %v755
      %769 = vmatprep.subr.bf16.mxu0 0
      %770 = vmatpush1.bf16.msra.mxu0 %v756
      %771 = vmatprep.subr.bf16.mxu0 0
      %772 = vmatpush1.bf16.msra.mxu0 %v757
      %773 = vmatprep.subr.bf16.mxu0 0
      %774 = vmatpush1.bf16.msra.mxu0 0
      %775 = vmatprep.subr.bf16.mxu0 0
      %776 = vmatpush1.bf16.msra.mxu0 0
      %777 = vmatprep.subr.bf16.mxu0 0
      %778 = vmatpush1.bf16.msra.mxu0 0
      %779 = vmatprep.subr.bf16.mxu0 0
      %780 = vmatpush1.bf16.msra.mxu0 0
      %781 = vmatprep.subr.bf16.mxu0 0
      %782 = vmatpush1.bf16.msra.mxu0 0
      %783 = vmatprep.subr.bf16.mxu0 0
      %784 = vmatpush1.bf16.msra.mxu0 0
      %785 = vmatprep.subr.bf16.mxu0 0
      %786 = vmatpush1.bf16.msra.mxu0 0
      %787 = vmatprep.subr.bf16.mxu0 0
      %788 = vmatpush1.bf16.msra.mxu0 0
      %789 = vmatprep.subr.bf16.mxu0 0
      %790 = vmatpush1.bf16.msra.mxu0 0
      %791 = vmatprep.subr.bf16.mxu0 0
      %792 = vmatpush1.bf16.msra.mxu0 0
      %793 = vmatprep.subr.bf16.mxu0 0
      %794 = vmatpush1.bf16.msra.mxu0 0
      %795 = vmatprep.subr.bf16.mxu0 0
      %796 = vmatpush1.bf16.msra.mxu0 0
      %797 = vmatprep.mubr.bf16.mxu0 0
      %798 = vmatmul.mubr.bf16.gmra.mrb[0].mxu0 %v763
      %v799 = vpop.f32.mrb[0].mxu0
      %v800 = vadd.f32 0.0, %v799
      %v801 = vpop.f32.mrb[0].mxu0
      %v802 = vpop.f32.mrb[0].mxu0
      %v803 = vpop.f32.mrb[0].mxu0
      %804 = vdwg.mxu0
      %v805 = vadd.f32 %v714, %v800
      %s806 = scalar_lea.vmem %s217, 192
      %v807 = vld [vmem:[%s806] sm:$0xff]
      %v808 = vld [vmem:[%s806 + $0x8] sm:$0xff]
      %v809 = vld [vmem:[%s806 + $0x10] sm:$0xff]
      %v810 = vld [vmem:[%s806 + $0x18] sm:$0xff]
      %v811 = vld [vmem:[%s806 + $0x20] sm:$0xff]
      %v812 = vld [vmem:[%s806 + $0x28] sm:$0x1f]
      %s813 = scalar_lea.vmem %s217, 240
      %v814 = vld [vmem:[%s813] sm:$0xff]
      %v815 = vld [vmem:[%s813 + $0x8] sm:$0xff]
      %v816 = vld [vmem:[%s813 + $0x10] sm:$0xff]
      %v817 = vld [vmem:[%s813 + $0x18] sm:$0xff]
      %v818 = vld [vmem:[%s813 + $0x20] sm:$0xff]
      %v819 = vld [vmem:[%s813 + $0x28] sm:$0x1f]
      %v820 = vadd.f32 %v807, %v814
      %v821 = vadd.f32 %v808, %v815
      %v822 = vadd.f32 %v809, %v816
      %v823 = vadd.f32 %v810, %v817
      %v824 = vadd.f32 %v811, %v818
      %v825 = vadd.f32 %v812, %v819
      %s826 = scalar_lea.vmem %s217, 288
      %v827 = vld [vmem:[%s826] sm:$0xff]
      %v828 = vld [vmem:[%s826 + $0x8] sm:$0xff]
      %v829 = vld [vmem:[%s826 + $0x10] sm:$0xff]
      %v830 = vld [vmem:[%s826 + $0x18] sm:$0xff]
      %v831 = vld [vmem:[%s826 + $0x20] sm:$0xff]
      %v832 = vld [vmem:[%s826 + $0x28] sm:$0x1f]
      %v833 = vadd.f32 %v820, %v827
      %v834 = vadd.f32 %v821, %v828
      %v835 = vadd.f32 %v822, %v829
      %v836 = vadd.f32 %v823, %v830
      %v837 = vadd.f32 %v824, %v831
      %v838 = vadd.f32 %v825, %v832
      %s839 = scalar_lea.vmem %s217, 336
      %v840 = vld [vmem:[%s839] sm:$0xff]
      %v841 = vld [vmem:[%s839 + $0x8] sm:$0xff]
      %v842 = vld [vmem:[%s839 + $0x10] sm:$0xff]
      %v843 = vld [vmem:[%s839 + $0x18] sm:$0xff]
      %v844 = vld [vmem:[%s839 + $0x20] sm:$0xff]
      %v845 = vld [vmem:[%s839 + $0x28] sm:$0x1f]
      %v846 = vadd.f32 %v833, %v840
      %v847 = vadd.f32 %v834, %v841
      %v848 = vadd.f32 %v835, %v842
      %v849 = vadd.f32 %v836, %v843
      %v850 = vadd.f32 %v837, %v844
      %v851 = vadd.f32 %v838, %v845
      %s852 = scalar_lea.vmem %s217, 384
      %v853 = vld [vmem:[%s852] sm:$0xff]
      %v854 = vld [vmem:[%s852 + $0x8] sm:$0xff]
      %v855 = vld [vmem:[%s852 + $0x10] sm:$0xff]
      %v856 = vld [vmem:[%s852 + $0x18] sm:$0xff]
      %v857 = vld [vmem:[%s852 + $0x20] sm:$0xff]
      %v858 = vld [vmem:[%s852 + $0x28] sm:$0x1f]
      %v859 = vadd.f32 %v846, %v853
      %v860 = vadd.f32 %v847, %v854
      %v861 = vadd.f32 %v848, %v855
      %v862 = vadd.f32 %v849, %v856
      %v863 = vadd.f32 %v850, %v857
      %v864 = vadd.f32 %v851, %v858
      %s865 = scalar_lea.vmem %s217, 432
      %v866 = vld [vmem:[%s865] sm:$0xff]
      %v867 = vld [vmem:[%s865 + $0x8] sm:$0xff]
      %v868 = vld [vmem:[%s865 + $0x10] sm:$0xff]
      %v869 = vld [vmem:[%s865 + $0x18] sm:$0xff]
      %v870 = vld [vmem:[%s865 + $0x20] sm:$0xff]
      %v871 = vld [vmem:[%s865 + $0x28] sm:$0x1f]
      %v872 = vadd.f32 %v859, %v866
      %v873 = vadd.f32 %v860, %v867
      %v874 = vadd.f32 %v861, %v868
      %v875 = vadd.f32 %v862, %v869
      %v876 = vadd.f32 %v863, %v870
      %v877 = vadd.f32 %v864, %v871
      %s878 = scalar_lea.vmem %s217, 480
      %v879 = vld [vmem:[%s878] sm:$0xff]
      %v880 = vld [vmem:[%s878 + $0x8] sm:$0xff]
      %v881 = vld [vmem:[%s878 + $0x10] sm:$0xff]
      %v882 = vld [vmem:[%s878 + $0x18] sm:$0xff]
      %v883 = vld [vmem:[%s878 + $0x20] sm:$0xff]
      %v884 = vld [vmem:[%s878 + $0x28] sm:$0x1f]
      %v885 = vadd.f32 %v872, %v879
      %v886 = vadd.f32 %v873, %v880
      %v887 = vadd.f32 %v874, %v881
      %v888 = vadd.f32 %v875, %v882
      %v889 = vadd.f32 %v876, %v883
      %v890 = vadd.f32 %v877, %v884
      %s891 = scalar_lea.vmem %s217, 528
      %v892 = vld [vmem:[%s891] sm:$0xff]
      %v893 = vld [vmem:[%s891 + $0x8] sm:$0xff]
      %v894 = vld [vmem:[%s891 + $0x10] sm:$0xff]
      %v895 = vld [vmem:[%s891 + $0x18] sm:$0xff]
      %v896 = vld [vmem:[%s891 + $0x20] sm:$0xff]
      %v897 = vld [vmem:[%s891 + $0x28] sm:$0x1f]
      %v898 = vadd.f32 %v885, %v892
      %v899 = vadd.f32 %v886, %v893
      %v900 = vadd.f32 %v887, %v894
      %v901 = vadd.f32 %v888, %v895
      %v902 = vadd.f32 %v889, %v896
      %v903 = vadd.f32 %v890, %v897
      %v904 = vsel %vm267, %v898, 0.0
      %v905 = vrot.slane %v904, 4
      %v906 = vadd.f32 %v904, %v905
      %v907 = vrot.slane %v906, 2
      %v908 = vadd.f32 %v906, %v907
      %v909 = vrot.slane %v908, 1
      %v910 = vadd.f32 %v908, %v909
      %v911 = vmul.f32 %v910, 0.015625
      %v912 = vpack.c.bf16 %v911, %v911
      %s913 = scalar_lea.vmem %s1, 192
      %v914 = vld [vmem:[%s913] sm:$0xf]
      %v915 = vld [vmem:[%s913 + $0x4] sm:$0xf]
      %v916 = vld [vmem:[%s913 + $0x8] sm:$0xf]
      %v917 = vld [vmem:[%s913 + $0xc] sm:$0xf]
      %v918 = vld [vmem:[%s913 + $0x10] sm:$0xf]
      %v919 = vld [vmem:[%s913 + $0x14] sm:$0xf]
      %v920 = vld [vmem:[%s913 + $0x18] sm:$0xf]
      %v921 = vld [vmem:[%s913 + $0x1c] sm:$0xf]
      %v930 = vunpack.c.l.b16 %v914
      %v931 = vunpack.c.l.b16 %v915
      %v932 = vunpack.c.l.b16 %v916
      %v933 = vunpack.c.l.b16 %v917
      %v934 = vunpack.c.l.b16 %v918
      %v935 = vunpack.c.l.b16 %v919
      %v936 = vunpack.c.l.b16 %v920
      %v937 = vunpack.c.l.b16 %v921
      %v938 = vpack.c.b16 %v931, %v930
      %v939 = vpack.c.b16 %v933, %v932
      %v940 = vpack.c.b16 %v935, %v934
      %v941 = vpack.c.b16 %v937, %v936
      %v947 = vsel %vm292, %v912, 0
      %949 = vmatprep.subr.bf16.mxu0 0
      %950 = vmatpush1.bf16.msra.mxu0 %v938
      %951 = vmatprep.subr.bf16.mxu0 0
      %952 = vmatpush1.bf16.msra.mxu0 %v939
      %953 = vmatprep.subr.bf16.mxu0 0
      %954 = vmatpush1.bf16.msra.mxu0 %v940
      %955 = vmatprep.subr.bf16.mxu0 0
      %956 = vmatpush1.bf16.msra.mxu0 %v941
      %957 = vmatprep.subr.bf16.mxu0 0
      %958 = vmatpush1.bf16.msra.mxu0 0
      %959 = vmatprep.subr.bf16.mxu0 0
      %960 = vmatpush1.bf16.msra.mxu0 0
      %961 = vmatprep.subr.bf16.mxu0 0
      %962 = vmatpush1.bf16.msra.mxu0 0
      %963 = vmatprep.subr.bf16.mxu0 0
      %964 = vmatpush1.bf16.msra.mxu0 0
      %965 = vmatprep.subr.bf16.mxu0 0
      %966 = vmatpush1.bf16.msra.mxu0 0
      %967 = vmatprep.subr.bf16.mxu0 0
      %968 = vmatpush1.bf16.msra.mxu0 0
      %969 = vmatprep.subr.bf16.mxu0 0
      %970 = vmatpush1.bf16.msra.mxu0 0
      %971 = vmatprep.subr.bf16.mxu0 0
      %972 = vmatpush1.bf16.msra.mxu0 0
      %973 = vmatprep.subr.bf16.mxu0 0
      %974 = vmatpush1.bf16.msra.mxu0 0
      %975 = vmatprep.subr.bf16.mxu0 0
      %976 = vmatpush1.bf16.msra.mxu0 0
      %977 = vmatprep.subr.bf16.mxu0 0
      %978 = vmatpush1.bf16.msra.mxu0 0
      %979 = vmatprep.subr.bf16.mxu0 0
      %980 = vmatpush1.bf16.msra.mxu0 0
      %981 = vmatprep.mubr.bf16.mxu0 0
      %982 = vmatmul.mubr.bf16.gmra.mrb[0].mxu0 %v947
      %v983 = vpop.f32.mrb[0].mxu0
      %v984 = vadd.f32 0.0, %v983
      %v985 = vpop.f32.mrb[0].mxu0
      %v986 = vpop.f32.mrb[0].mxu0
      %v987 = vpop.f32.mrb[0].mxu0
      %988 = vdwg.mxu0
      %v989 = vadd.f32 %v805, %v984
      %v992 = vrot.slane %v898, 6
      %v993 = vrot.slane %v899, 6
      %v994 = vsel %vm287, %v992, %v993
      %v996 = vsel %vm292, %v994, 0.0
      %v997 = vrot.slane %v996, 4
      %v998 = vadd.f32 %v996, %v997
      %v999 = vrot.slane %v998, 2
      %v1000 = vadd.f32 %v998, %v999
      %v1001 = vrot.slane %v1000, 1
      %v1002 = vadd.f32 %v1000, %v1001
      %v1003 = vmul.f32 %v1002, 0.015625
      %v1004 = vpack.c.bf16 %v1003, %v1003
      %s1005 = scalar_lea.vmem %s1, 224
      %v1006 = vld [vmem:[%s1005] sm:$0xf]
      %v1007 = vld [vmem:[%s1005 + $0x4] sm:$0xf]
      %v1008 = vld [vmem:[%s1005 + $0x8] sm:$0xf]
      %v1009 = vld [vmem:[%s1005 + $0xc] sm:$0xf]
      %v1010 = vld [vmem:[%s1005 + $0x10] sm:$0xf]
      %v1011 = vld [vmem:[%s1005 + $0x14] sm:$0xf]
      %v1012 = vld [vmem:[%s1005 + $0x18] sm:$0xf]
      %v1013 = vld [vmem:[%s1005 + $0x1c] sm:$0xf]
      %v1022 = vunpack.c.l.b16 %v1006
      %v1023 = vunpack.c.l.b16 %v1007
      %v1024 = vunpack.c.l.b16 %v1008
      %v1025 = vunpack.c.l.b16 %v1009
      %v1026 = vunpack.c.l.b16 %v1010
      %v1027 = vunpack.c.l.b16 %v1011
      %v1028 = vunpack.c.l.b16 %v1012
      %v1029 = vunpack.c.l.b16 %v1013
      %v1030 = vpack.c.b16 %v1023, %v1022
      %v1031 = vpack.c.b16 %v1025, %v1024
      %v1032 = vpack.c.b16 %v1027, %v1026
      %v1033 = vpack.c.b16 %v1029, %v1028
      %v1039 = vsel %vm292, %v1004, 0
      %1041 = vmatprep.subr.bf16.mxu0 0
      %1042 = vmatpush1.bf16.msra.mxu0 %v1030
      %1043 = vmatprep.subr.bf16.mxu0 0
      %1044 = vmatpush1.bf16.msra.mxu0 %v1031
      %1045 = vmatprep.subr.bf16.mxu0 0
      %1046 = vmatpush1.bf16.msra.mxu0 %v1032
      %1047 = vmatprep.subr.bf16.mxu0 0
      %1048 = vmatpush1.bf16.msra.mxu0 %v1033
      %1049 = vmatprep.subr.bf16.mxu0 0
      %1050 = vmatpush1.bf16.msra.mxu0 0
      %1051 = vmatprep.subr.bf16.mxu0 0
      %1052 = vmatpush1.bf16.msra.mxu0 0
      %1053 = vmatprep.subr.bf16.mxu0 0
      %1054 = vmatpush1.bf16.msra.mxu0 0
      %1055 = vmatprep.subr.bf16.mxu0 0
      %1056 = vmatpush1.bf16.msra.mxu0 0
      %1057 = vmatprep.subr.bf16.mxu0 0
      %1058 = vmatpush1.bf16.msra.mxu0 0
      %1059 = vmatprep.subr.bf16.mxu0 0
      %1060 = vmatpush1.bf16.msra.mxu0 0
      %1061 = vmatprep.subr.bf16.mxu0 0
      %1062 = vmatpush1.bf16.msra.mxu0 0
      %1063 = vmatprep.subr.bf16.mxu0 0
      %1064 = vmatpush1.bf16.msra.mxu0 0
      %1065 = vmatprep.subr.bf16.mxu0 0
      %1066 = vmatpush1.bf16.msra.mxu0 0
      %1067 = vmatprep.subr.bf16.mxu0 0
      %1068 = vmatpush1.bf16.msra.mxu0 0
      %1069 = vmatprep.subr.bf16.mxu0 0
      %1070 = vmatpush1.bf16.msra.mxu0 0
      %1071 = vmatprep.subr.bf16.mxu0 0
      %1072 = vmatpush1.bf16.msra.mxu0 0
      %1073 = vmatprep.mubr.bf16.mxu0 0
      %1074 = vmatmul.mubr.bf16.gmra.mrb[0].mxu0 %v1039
      %v1075 = vpop.f32.mrb[0].mxu0
      %v1076 = vadd.f32 0.0, %v1075
      %v1077 = vpop.f32.mrb[0].mxu0
      %v1078 = vpop.f32.mrb[0].mxu0
      %v1079 = vpop.f32.mrb[0].mxu0
      %1080 = vdwg.mxu0
      %v1081 = vadd.f32 %v989, %v1076
      %v1083 = vrot.slane %v900, 6
      %v1084 = vsel %vm287, %v993, %v1083
      %v1086 = vsel %vm292, %v1084, 0.0
      %v1087 = vrot.slane %v1086, 4
      %v1088 = vadd.f32 %v1086, %v1087
      %v1089 = vrot.slane %v1088, 2
      %v1090 = vadd.f32 %v1088, %v1089
      %v1091 = vrot.slane %v1090, 1
      %v1092 = vadd.f32 %v1090, %v1091
      %v1093 = vmul.f32 %v1092, 0.015625
      %v1094 = vpack.c.bf16 %v1093, %v1093
      %s1095 = scalar_lea.vmem %s1, 256
      %v1096 = vld [vmem:[%s1095] sm:$0xf]
      %v1097 = vld [vmem:[%s1095 + $0x4] sm:$0xf]
      %v1098 = vld [vmem:[%s1095 + $0x8] sm:$0xf]
      %v1099 = vld [vmem:[%s1095 + $0xc] sm:$0xf]
      %v1100 = vld [vmem:[%s1095 + $0x10] sm:$0xf]
      %v1101 = vld [vmem:[%s1095 + $0x14] sm:$0xf]
      %v1102 = vld [vmem:[%s1095 + $0x18] sm:$0xf]
      %v1103 = vld [vmem:[%s1095 + $0x1c] sm:$0xf]
      %v1112 = vunpack.c.l.b16 %v1096
      %v1113 = vunpack.c.l.b16 %v1097
      %v1114 = vunpack.c.l.b16 %v1098
      %v1115 = vunpack.c.l.b16 %v1099
      %v1116 = vunpack.c.l.b16 %v1100
      %v1117 = vunpack.c.l.b16 %v1101
      %v1118 = vunpack.c.l.b16 %v1102
      %v1119 = vunpack.c.l.b16 %v1103
      %v1120 = vpack.c.b16 %v1113, %v1112
      %v1121 = vpack.c.b16 %v1115, %v1114
      %v1122 = vpack.c.b16 %v1117, %v1116
      %v1123 = vpack.c.b16 %v1119, %v1118
      %v1129 = vsel %vm292, %v1094, 0
      %1131 = vmatprep.subr.bf16.mxu0 0
      %1132 = vmatpush1.bf16.msra.mxu0 %v1120
      %1133 = vmatprep.subr.bf16.mxu0 0
      %1134 = vmatpush1.bf16.msra.mxu0 %v1121
      %1135 = vmatprep.subr.bf16.mxu0 0
      %1136 = vmatpush1.bf16.msra.mxu0 %v1122
      %1137 = vmatprep.subr.bf16.mxu0 0
      %1138 = vmatpush1.bf16.msra.mxu0 %v1123
      %1139 = vmatprep.subr.bf16.mxu0 0
      %1140 = vmatpush1.bf16.msra.mxu0 0
      %1141 = vmatprep.subr.bf16.mxu0 0
      %1142 = vmatpush1.bf16.msra.mxu0 0
      %1143 = vmatprep.subr.bf16.mxu0 0
      %1144 = vmatpush1.bf16.msra.mxu0 0
      %1145 = vmatprep.subr.bf16.mxu0 0
      %1146 = vmatpush1.bf16.msra.mxu0 0
      %1147 = vmatprep.subr.bf16.mxu0 0
      %1148 = vmatpush1.bf16.msra.mxu0 0
      %1149 = vmatprep.subr.bf16.mxu0 0
      %1150 = vmatpush1.bf16.msra.mxu0 0
      %1151 = vmatprep.subr.bf16.mxu0 0
      %1152 = vmatpush1.bf16.msra.mxu0 0
      %1153 = vmatprep.subr.bf16.mxu0 0
      %1154 = vmatpush1.bf16.msra.mxu0 0
      %1155 = vmatprep.subr.bf16.mxu0 0
      %1156 = vmatpush1.bf16.msra.mxu0 0
      %1157 = vmatprep.subr.bf16.mxu0 0
      %1158 = vmatpush1.bf16.msra.mxu0 0
      %1159 = vmatprep.subr.bf16.mxu0 0
      %1160 = vmatpush1.bf16.msra.mxu0 0
      %1161 = vmatprep.subr.bf16.mxu0 0
      %1162 = vmatpush1.bf16.msra.mxu0 0
      %1163 = vmatprep.mubr.bf16.mxu0 0
      %1164 = vmatmul.mubr.bf16.gmra.mrb[0].mxu0 %v1129
      %v1165 = vpop.f32.mrb[0].mxu0
      %v1166 = vadd.f32 0.0, %v1165
      %v1167 = vpop.f32.mrb[0].mxu0
      %v1168 = vpop.f32.mrb[0].mxu0
      %v1169 = vpop.f32.mrb[0].mxu0
      %1170 = vdwg.mxu0
      %v1171 = vadd.f32 %v1081, %v1166
      %v1173 = vrot.slane %v901, 6
      %v1174 = vsel %vm287, %v1083, %v1173
      %v1176 = vsel %vm292, %v1174, 0.0
      %v1177 = vrot.slane %v1176, 4
      %v1178 = vadd.f32 %v1176, %v1177
      %v1179 = vrot.slane %v1178, 2
      %v1180 = vadd.f32 %v1178, %v1179
      %v1181 = vrot.slane %v1180, 1
      %v1182 = vadd.f32 %v1180, %v1181
      %v1183 = vmul.f32 %v1182, 0.015625
      %v1184 = vpack.c.bf16 %v1183, %v1183
      %s1185 = scalar_lea.vmem %s1, 288
      %v1186 = vld [vmem:[%s1185] sm:$0xf]
      %v1187 = vld [vmem:[%s1185 + $0x4] sm:$0xf]
      %v1188 = vld [vmem:[%s1185 + $0x8] sm:$0xf]
      %v1189 = vld [vmem:[%s1185 + $0xc] sm:$0xf]
      %v1190 = vld [vmem:[%s1185 + $0x10] sm:$0xf]
      %v1191 = vld [vmem:[%s1185 + $0x14] sm:$0xf]
      %v1192 = vld [vmem:[%s1185 + $0x18] sm:$0xf]
      %v1193 = vld [vmem:[%s1185 + $0x1c] sm:$0xf]
      %v1202 = vunpack.c.l.b16 %v1186
      %v1203 = vunpack.c.l.b16 %v1187
      %v1204 = vunpack.c.l.b16 %v1188
      %v1205 = vunpack.c.l.b16 %v1189
      %v1206 = vunpack.c.l.b16 %v1190
      %v1207 = vunpack.c.l.b16 %v1191
      %v1208 = vunpack.c.l.b16 %v1192
      %v1209 = vunpack.c.l.b16 %v1193
      %v1210 = vpack.c.b16 %v1203, %v1202
      %v1211 = vpack.c.b16 %v1205, %v1204
      %v1212 = vpack.c.b16 %v1207, %v1206
      %v1213 = vpack.c.b16 %v1209, %v1208
      %v1219 = vsel %vm292, %v1184, 0
      %1221 = vmatprep.subr.bf16.mxu0 0
      %1222 = vmatpush1.bf16.msra.mxu0 %v1210
      %1223 = vmatprep.subr.bf16.mxu0 0
      %1224 = vmatpush1.bf16.msra.mxu0 %v1211
      %1225 = vmatprep.subr.bf16.mxu0 0
      %1226 = vmatpush1.bf16.msra.mxu0 %v1212
      %1227 = vmatprep.subr.bf16.mxu0 0
      %1228 = vmatpush1.bf16.msra.mxu0 %v1213
      %1229 = vmatprep.subr.bf16.mxu0 0
      %1230 = vmatpush1.bf16.msra.mxu0 0
      %1231 = vmatprep.subr.bf16.mxu0 0
      %1232 = vmatpush1.bf16.msra.mxu0 0
      %1233 = vmatprep.subr.bf16.mxu0 0
      %1234 = vmatpush1.bf16.msra.mxu0 0
      %1235 = vmatprep.subr.bf16.mxu0 0
      %1236 = vmatpush1.bf16.msra.mxu0 0
      %1237 = vmatprep.subr.bf16.mxu0 0
      %1238 = vmatpush1.bf16.msra.mxu0 0
      %1239 = vmatprep.subr.bf16.mxu0 0
      %1240 = vmatpush1.bf16.msra.mxu0 0
      %1241 = vmatprep.subr.bf16.mxu0 0
      %1242 = vmatpush1.bf16.msra.mxu0 0
      %1243 = vmatprep.subr.bf16.mxu0 0
      %1244 = vmatpush1.bf16.msra.mxu0 0
      %1245 = vmatprep.subr.bf16.mxu0 0
      %1246 = vmatpush1.bf16.msra.mxu0 0
      %1247 = vmatprep.subr.bf16.mxu0 0
      %1248 = vmatpush1.bf16.msra.mxu0 0
      %1249 = vmatprep.subr.bf16.mxu0 0
      %1250 = vmatpush1.bf16.msra.mxu0 0
      %1251 = vmatprep.subr.bf16.mxu0 0
      %1252 = vmatpush1.bf16.msra.mxu0 0
      %1253 = vmatprep.mubr.bf16.mxu0 0
      %1254 = vmatmul.mubr.bf16.gmra.mrb[0].mxu0 %v1219
      %v1255 = vpop.f32.mrb[0].mxu0
      %v1256 = vadd.f32 0.0, %v1255
      %v1257 = vpop.f32.mrb[0].mxu0
      %v1258 = vpop.f32.mrb[0].mxu0
      %v1259 = vpop.f32.mrb[0].mxu0
      %1260 = vdwg.mxu0
      %v1261 = vadd.f32 %v1171, %v1256
      %v1263 = vrot.slane %v902, 6
      %v1264 = vsel %vm287, %v1173, %v1263
      %v1266 = vsel %vm292, %v1264, 0.0
      %v1267 = vrot.slane %v1266, 4
      %v1268 = vadd.f32 %v1266, %v1267
      %v1269 = vrot.slane %v1268, 2
      %v1270 = vadd.f32 %v1268, %v1269
      %v1271 = vrot.slane %v1270, 1
      %v1272 = vadd.f32 %v1270, %v1271
      %v1273 = vmul.f32 %v1272, 0.015625
      %v1274 = vpack.c.bf16 %v1273, %v1273
      %s1275 = scalar_lea.vmem %s1, 320
      %v1276 = vld [vmem:[%s1275] sm:$0xf]
      %v1277 = vld [vmem:[%s1275 + $0x4] sm:$0xf]
      %v1278 = vld [vmem:[%s1275 + $0x8] sm:$0xf]
      %v1279 = vld [vmem:[%s1275 + $0xc] sm:$0xf]
      %v1280 = vld [vmem:[%s1275 + $0x10] sm:$0xf]
      %v1281 = vld [vmem:[%s1275 + $0x14] sm:$0xf]
      %v1282 = vld [vmem:[%s1275 + $0x18] sm:$0xf]
      %v1283 = vld [vmem:[%s1275 + $0x1c] sm:$0xf]
      %v1292 = vunpack.c.l.b16 %v1276
      %v1293 = vunpack.c.l.b16 %v1277
      %v1294 = vunpack.c.l.b16 %v1278
      %v1295 = vunpack.c.l.b16 %v1279
      %v1296 = vunpack.c.l.b16 %v1280
      %v1297 = vunpack.c.l.b16 %v1281
      %v1298 = vunpack.c.l.b16 %v1282
      %v1299 = vunpack.c.l.b16 %v1283
      %v1300 = vpack.c.b16 %v1293, %v1292
      %v1301 = vpack.c.b16 %v1295, %v1294
      %v1302 = vpack.c.b16 %v1297, %v1296
      %v1303 = vpack.c.b16 %v1299, %v1298
      %v1309 = vsel %vm292, %v1274, 0
      %1311 = vmatprep.subr.bf16.mxu0 0
      %1312 = vmatpush1.bf16.msra.mxu0 %v1300
      %1313 = vmatprep.subr.bf16.mxu0 0
      %1314 = vmatpush1.bf16.msra.mxu0 %v1301
      %1315 = vmatprep.subr.bf16.mxu0 0
      %1316 = vmatpush1.bf16.msra.mxu0 %v1302
      %1317 = vmatprep.subr.bf16.mxu0 0
      %1318 = vmatpush1.bf16.msra.mxu0 %v1303
      %1319 = vmatprep.subr.bf16.mxu0 0
      %1320 = vmatpush1.bf16.msra.mxu0 0
      %1321 = vmatprep.subr.bf16.mxu0 0
      %1322 = vmatpush1.bf16.msra.mxu0 0
      %1323 = vmatprep.subr.bf16.mxu0 0
      %1324 = vmatpush1.bf16.msra.mxu0 0
      %1325 = vmatprep.subr.bf16.mxu0 0
      %1326 = vmatpush1.bf16.msra.mxu0 0
      %1327 = vmatprep.subr.bf16.mxu0 0
      %1328 = vmatpush1.bf16.msra.mxu0 0
      %1329 = vmatprep.subr.bf16.mxu0 0
      %1330 = vmatpush1.bf16.msra.mxu0 0
      %1331 = vmatprep.subr.bf16.mxu0 0
      %1332 = vmatpush1.bf16.msra.mxu0 0
      %1333 = vmatprep.subr.bf16.mxu0 0
      %1334 = vmatpush1.bf16.msra.mxu0 0
      %1335 = vmatprep.subr.bf16.mxu0 0
      %1336 = vmatpush1.bf16.msra.mxu0 0
      %1337 = vmatprep.subr.bf16.mxu0 0
      %1338 = vmatpush1.bf16.msra.mxu0 0
      %1339 = vmatprep.subr.bf16.mxu0 0
      %1340 = vmatpush1.bf16.msra.mxu0 0
      %1341 = vmatprep.subr.bf16.mxu0 0
      %1342 = vmatpush1.bf16.msra.mxu0 0
      %1343 = vmatprep.mubr.bf16.mxu0 0
      %1344 = vmatmul.mubr.bf16.gmra.mrb[0].mxu0 %v1309
      %v1345 = vpop.f32.mrb[0].mxu0
      %v1346 = vadd.f32 0.0, %v1345
      %v1347 = vpop.f32.mrb[0].mxu0
      %v1348 = vpop.f32.mrb[0].mxu0
      %v1349 = vpop.f32.mrb[0].mxu0
      %1350 = vdwg.mxu0
      %v1351 = vadd.f32 %v1261, %v1346
      %v1353 = vrot.slane %v903, 6
      %v1354 = vsel %vm287, %v1263, %v1353
      %v1356 = vsel %vm719, %v1354, 0.0
      %v1357 = vrot.slane %v1356, 4
      %v1358 = vadd.f32 %v1356, %v1357
      %v1359 = vrot.slane %v1358, 2
      %v1360 = vadd.f32 %v1358, %v1359
      %v1361 = vrot.slane %v1360, 1
      %v1362 = vadd.f32 %v1360, %v1361
      %v1363 = vmul.f32 %v1362, 0.015625
      %v1364 = vpack.c.bf16 %v1363, %v1363
      %s1365 = scalar_lea.vmem %s1, 352
      %v1366 = vld [vmem:[%s1365] sm:$0xf]
      %v1367 = vld [vmem:[%s1365 + $0x4] sm:$0xf]
      %v1368 = vld [vmem:[%s1365 + $0x8] sm:$0xf]
      %v1369 = vld [vmem:[%s1365 + $0xc] sm:$0xf]
      %v1370 = vld [vmem:[%s1365 + $0x10] sm:$0xf]
      %v1371 = vld [vmem:[%s1365 + $0x14] sm:$0xf]
      %v1372 = vld [vmem:[%s1365 + $0x18] sm:$0xf]
      %v1373 = vld [vmem:[%s1365 + $0x1c] sm:$0xf]
      %v1382 = vunpack.c.l.b16 %v1366
      %v1383 = vunpack.c.l.b16 %v1367
      %v1384 = vunpack.c.l.b16 %v1368
      %v1385 = vunpack.c.l.b16 %v1369
      %v1386 = vunpack.c.l.b16 %v1370
      %v1387 = vunpack.c.l.b16 %v1371
      %v1388 = vunpack.c.l.b16 %v1372
      %v1389 = vunpack.c.l.b16 %v1373
      %v1390 = vpack.c.b16 %v1383, %v1382
      %v1391 = vpack.c.b16 %v1385, %v1384
      %v1392 = vpack.c.b16 %v1387, %v1386
      %v1393 = vpack.c.b16 %v1389, %v1388
      %v1399 = vsel %vm292, %v1364, 0
      %1401 = vmatprep.subr.bf16.mxu0 0
      %1402 = vmatpush1.bf16.msra.mxu0 %v1390
      %1403 = vmatprep.subr.bf16.mxu0 0
      %1404 = vmatpush1.bf16.msra.mxu0 %v1391
      %1405 = vmatprep.subr.bf16.mxu0 0
      %1406 = vmatpush1.bf16.msra.mxu0 %v1392
      %1407 = vmatprep.subr.bf16.mxu0 0
      %1408 = vmatpush1.bf16.msra.mxu0 %v1393
      %1409 = vmatprep.subr.bf16.mxu0 0
      %1410 = vmatpush1.bf16.msra.mxu0 0
      %1411 = vmatprep.subr.bf16.mxu0 0
      %1412 = vmatpush1.bf16.msra.mxu0 0
      %1413 = vmatprep.subr.bf16.mxu0 0
      %1414 = vmatpush1.bf16.msra.mxu0 0
      %1415 = vmatprep.subr.bf16.mxu0 0
      %1416 = vmatpush1.bf16.msra.mxu0 0
      %1417 = vmatprep.subr.bf16.mxu0 0
      %1418 = vmatpush1.bf16.msra.mxu0 0
      %1419 = vmatprep.subr.bf16.mxu0 0
      %1420 = vmatpush1.bf16.msra.mxu0 0
      %1421 = vmatprep.subr.bf16.mxu0 0
      %1422 = vmatpush1.bf16.msra.mxu0 0
      %1423 = vmatprep.subr.bf16.mxu0 0
      %1424 = vmatpush1.bf16.msra.mxu0 0
      %1425 = vmatprep.subr.bf16.mxu0 0
      %1426 = vmatpush1.bf16.msra.mxu0 0
      %1427 = vmatprep.subr.bf16.mxu0 0
      %1428 = vmatpush1.bf16.msra.mxu0 0
      %1429 = vmatprep.subr.bf16.mxu0 0
      %1430 = vmatpush1.bf16.msra.mxu0 0
      %1431 = vmatprep.subr.bf16.mxu0 0
      %1432 = vmatpush1.bf16.msra.mxu0 0
      %1433 = vmatprep.mubr.bf16.mxu0 0
      %1434 = vmatmul.mubr.bf16.gmra.mrb[0].mxu0 %v1399
      %v1435 = vpop.f32.mrb[0].mxu0
      %v1436 = vadd.f32 0.0, %v1435
      %v1437 = vpop.f32.mrb[0].mxu0
      %v1438 = vpop.f32.mrb[0].mxu0
      %v1439 = vpop.f32.mrb[0].mxu0
      %1440 = vdwg.mxu0
      %v1441 = vadd.f32 %v1351, %v1436
      %s1442 = scalar_lea.vmem %s217, 576
      %v1443 = vld [vmem:[%s1442] sm:$0xff]
      %v1444 = vld [vmem:[%s1442 + $0x8] sm:$0xff]
      %v1445 = vld [vmem:[%s1442 + $0x10] sm:$0xff]
      %v1446 = vld [vmem:[%s1442 + $0x18] sm:$0xff]
      %v1447 = vld [vmem:[%s1442 + $0x20] sm:$0xff]
      %v1448 = vld [vmem:[%s1442 + $0x28] sm:$0x1f]
      %s1449 = scalar_lea.vmem %s217, 624
      %v1450 = vld [vmem:[%s1449] sm:$0xff]
      %v1451 = vld [vmem:[%s1449 + $0x8] sm:$0xff]
      %v1452 = vld [vmem:[%s1449 + $0x10] sm:$0xff]
      %v1453 = vld [vmem:[%s1449 + $0x18] sm:$0xff]
      %v1454 = vld [vmem:[%s1449 + $0x20] sm:$0xff]
      %v1455 = vld [vmem:[%s1449 + $0x28] sm:$0x1f]
      %v1456 = vadd.f32 %v1443, %v1450
      %v1457 = vadd.f32 %v1444, %v1451
      %v1458 = vadd.f32 %v1445, %v1452
      %v1459 = vadd.f32 %v1446, %v1453
      %v1460 = vadd.f32 %v1447, %v1454
      %v1461 = vadd.f32 %v1448, %v1455
      %s1462 = scalar_lea.vmem %s217, 672
      %v1463 = vld [vmem:[%s1462] sm:$0xff]
      %v1464 = vld [vmem:[%s1462 + $0x8] sm:$0xff]
      %v1465 = vld [vmem:[%s1462 + $0x10] sm:$0xff]
      %v1466 = vld [vmem:[%s1462 + $0x18] sm:$0xff]
      %v1467 = vld [vmem:[%s1462 + $0x20] sm:$0xff]
      %v1468 = vld [vmem:[%s1462 + $0x28] sm:$0x1f]
      %v1469 = vadd.f32 %v1456, %v1463
      %v1470 = vadd.f32 %v1457, %v1464
      %v1471 = vadd.f32 %v1458, %v1465
      %v1472 = vadd.f32 %v1459, %v1466
      %v1473 = vadd.f32 %v1460, %v1467
      %v1474 = vadd.f32 %v1461, %v1468
      %s1475 = scalar_lea.vmem %s217, 720
      %v1476 = vld [vmem:[%s1475] sm:$0xff]
      %v1477 = vld [vmem:[%s1475 + $0x8] sm:$0xff]
      %v1478 = vld [vmem:[%s1475 + $0x10] sm:$0xff]
      %v1479 = vld [vmem:[%s1475 + $0x18] sm:$0xff]
      %v1480 = vld [vmem:[%s1475 + $0x20] sm:$0xff]
      %v1481 = vld [vmem:[%s1475 + $0x28] sm:$0x1f]
      %v1482 = vadd.f32 %v1469, %v1476
      %v1483 = vadd.f32 %v1470, %v1477
      %v1484 = vadd.f32 %v1471, %v1478
      %v1485 = vadd.f32 %v1472, %v1479
      %v1486 = vadd.f32 %v1473, %v1480
      %v1487 = vadd.f32 %v1474, %v1481
      %s1488 = scalar_lea.vmem %s217, 768
      %v1489 = vld [vmem:[%s1488] sm:$0xff]
      %v1490 = vld [vmem:[%s1488 + $0x8] sm:$0xff]
      %v1491 = vld [vmem:[%s1488 + $0x10] sm:$0xff]
      %v1492 = vld [vmem:[%s1488 + $0x18] sm:$0xff]
      %v1493 = vld [vmem:[%s1488 + $0x20] sm:$0xff]
      %v1494 = vld [vmem:[%s1488 + $0x28] sm:$0x1f]
      %v1495 = vadd.f32 %v1482, %v1489
      %v1496 = vadd.f32 %v1483, %v1490
      %v1497 = vadd.f32 %v1484, %v1491
      %v1498 = vadd.f32 %v1485, %v1492
      %v1499 = vadd.f32 %v1486, %v1493
      %v1500 = vadd.f32 %v1487, %v1494
      %s1501 = scalar_lea.vmem %s217, 816
      %v1502 = vld [vmem:[%s1501] sm:$0xff]
      %v1503 = vld [vmem:[%s1501 + $0x8] sm:$0xff]
      %v1504 = vld [vmem:[%s1501 + $0x10] sm:$0xff]
      %v1505 = vld [vmem:[%s1501 + $0x18] sm:$0xff]
      %v1506 = vld [vmem:[%s1501 + $0x20] sm:$0xff]
      %v1507 = vld [vmem:[%s1501 + $0x28] sm:$0x1f]
      %v1508 = vadd.f32 %v1495, %v1502
      %v1509 = vadd.f32 %v1496, %v1503
      %v1510 = vadd.f32 %v1497, %v1504
      %v1511 = vadd.f32 %v1498, %v1505
      %v1512 = vadd.f32 %v1499, %v1506
      %v1513 = vadd.f32 %v1500, %v1507
      %s1514 = scalar_lea.vmem %s217, 864
      %v1515 = vld [vmem:[%s1514] sm:$0xff]
      %v1516 = vld [vmem:[%s1514 + $0x8] sm:$0xff]
      %v1517 = vld [vmem:[%s1514 + $0x10] sm:$0xff]
      %v1518 = vld [vmem:[%s1514 + $0x18] sm:$0xff]
      %v1519 = vld [vmem:[%s1514 + $0x20] sm:$0xff]
      %v1520 = vld [vmem:[%s1514 + $0x28] sm:$0x1f]
      %v1521 = vadd.f32 %v1508, %v1515
      %v1522 = vadd.f32 %v1509, %v1516
      %v1523 = vadd.f32 %v1510, %v1517
      %v1524 = vadd.f32 %v1511, %v1518
      %v1525 = vadd.f32 %v1512, %v1519
      %v1526 = vadd.f32 %v1513, %v1520
      %s1527 = scalar_lea.vmem %s217, 912
      %v1528 = vld [vmem:[%s1527] sm:$0xff]
      %v1529 = vld [vmem:[%s1527 + $0x8] sm:$0xff]
      %v1530 = vld [vmem:[%s1527 + $0x10] sm:$0xff]
      %v1531 = vld [vmem:[%s1527 + $0x18] sm:$0xff]
      %v1532 = vld [vmem:[%s1527 + $0x20] sm:$0xff]
      %v1533 = vld [vmem:[%s1527 + $0x28] sm:$0x1f]
      %v1534 = vadd.f32 %v1521, %v1528
      %v1535 = vadd.f32 %v1522, %v1529
      %v1536 = vadd.f32 %v1523, %v1530
      %v1537 = vadd.f32 %v1524, %v1531
      %v1538 = vadd.f32 %v1525, %v1532
      %v1539 = vadd.f32 %v1526, %v1533
      %v1540 = vsel %vm267, %v1534, 0.0
      %v1541 = vrot.slane %v1540, 4
      %v1542 = vadd.f32 %v1540, %v1541
      %v1543 = vrot.slane %v1542, 2
      %v1544 = vadd.f32 %v1542, %v1543
      %v1545 = vrot.slane %v1544, 1
      %v1546 = vadd.f32 %v1544, %v1545
      %v1547 = vmul.f32 %v1546, 0.015625
      %v1548 = vpack.c.bf16 %v1547, %v1547
      %s1549 = scalar_lea.vmem %s1, 384
      %v1550 = vld [vmem:[%s1549] sm:$0xf]
      %v1551 = vld [vmem:[%s1549 + $0x4] sm:$0xf]
      %v1552 = vld [vmem:[%s1549 + $0x8] sm:$0xf]
      %v1553 = vld [vmem:[%s1549 + $0xc] sm:$0xf]
      %v1554 = vld [vmem:[%s1549 + $0x10] sm:$0xf]
      %v1555 = vld [vmem:[%s1549 + $0x14] sm:$0xf]
      %v1556 = vld [vmem:[%s1549 + $0x18] sm:$0xf]
      %v1557 = vld [vmem:[%s1549 + $0x1c] sm:$0xf]
      %v1566 = vunpack.c.l.b16 %v1550
      %v1567 = vunpack.c.l.b16 %v1551
      %v1568 = vunpack.c.l.b16 %v1552
      %v1569 = vunpack.c.l.b16 %v1553
      %v1570 = vunpack.c.l.b16 %v1554
      %v1571 = vunpack.c.l.b16 %v1555
      %v1572 = vunpack.c.l.b16 %v1556
      %v1573 = vunpack.c.l.b16 %v1557
      %v1574 = vpack.c.b16 %v1567, %v1566
      %v1575 = vpack.c.b16 %v1569, %v1568
      %v1576 = vpack.c.b16 %v1571, %v1570
      %v1577 = vpack.c.b16 %v1573, %v1572
      %v1583 = vsel %vm292, %v1548, 0
      %1585 = vmatprep.subr.bf16.mxu0 0
      %1586 = vmatpush1.bf16.msra.mxu0 %v1574
      %1587 = vmatprep.subr.bf16.mxu0 0
      %1588 = vmatpush1.bf16.msra.mxu0 %v1575
      %1589 = vmatprep.subr.bf16.mxu0 0
      %1590 = vmatpush1.bf16.msra.mxu0 %v1576
      %1591 = vmatprep.subr.bf16.mxu0 0
      %1592 = vmatpush1.bf16.msra.mxu0 %v1577
      %1593 = vmatprep.subr.bf16.mxu0 0
      %1594 = vmatpush1.bf16.msra.mxu0 0
      %1595 = vmatprep.subr.bf16.mxu0 0
      %1596 = vmatpush1.bf16.msra.mxu0 0
      %1597 = vmatprep.subr.bf16.mxu0 0
      %1598 = vmatpush1.bf16.msra.mxu0 0
      %1599 = vmatprep.subr.bf16.mxu0 0
      %1600 = vmatpush1.bf16.msra.mxu0 0
      %1601 = vmatprep.subr.bf16.mxu0 0
      %1602 = vmatpush1.bf16.msra.mxu0 0
      %1603 = vmatprep.subr.bf16.mxu0 0
      %1604 = vmatpush1.bf16.msra.mxu0 0
      %1605 = vmatprep.subr.bf16.mxu0 0
      %1606 = vmatpush1.bf16.msra.mxu0 0
      %1607 = vmatprep.subr.bf16.mxu0 0
      %1608 = vmatpush1.bf16.msra.mxu0 0
      %1609 = vmatprep.subr.bf16.mxu0 0
      %1610 = vmatpush1.bf16.msra.mxu0 0
      %1611 = vmatprep.subr.bf16.mxu0 0
      %1612 = vmatpush1.bf16.msra.mxu0 0
      %1613 = vmatprep.subr.bf16.mxu0 0
      %1614 = vmatpush1.bf16.msra.mxu0 0
      %1615 = vmatprep.subr.bf16.mxu0 0
      %1616 = vmatpush1.bf16.msra.mxu0 0
      %1617 = vmatprep.mubr.bf16.mxu0 0
      %1618 = vmatmul.mubr.bf16.gmra.mrb[0].mxu0 %v1583
      %v1619 = vpop.f32.mrb[0].mxu0
      %v1620 = vadd.f32 0.0, %v1619
      %v1621 = vpop.f32.mrb[0].mxu0
      %v1622 = vpop.f32.mrb[0].mxu0
      %v1623 = vpop.f32.mrb[0].mxu0
      %1624 = vdwg.mxu0
      %v1625 = vadd.f32 %v1441, %v1620
      %v1628 = vrot.slane %v1534, 6
      %v1629 = vrot.slane %v1535, 6
      %v1630 = vsel %vm287, %v1628, %v1629
      %v1632 = vsel %vm292, %v1630, 0.0
      %v1633 = vrot.slane %v1632, 4
      %v1634 = vadd.f32 %v1632, %v1633
      %v1635 = vrot.slane %v1634, 2
      %v1636 = vadd.f32 %v1634, %v1635
      %v1637 = vrot.slane %v1636, 1
      %v1638 = vadd.f32 %v1636, %v1637
      %v1639 = vmul.f32 %v1638, 0.015625
      %v1640 = vpack.c.bf16 %v1639, %v1639
      %s1641 = scalar_lea.vmem %s1, 416
      %v1642 = vld [vmem:[%s1641] sm:$0xf]
      %v1643 = vld [vmem:[%s1641 + $0x4] sm:$0xf]
      %v1644 = vld [vmem:[%s1641 + $0x8] sm:$0xf]
      %v1645 = vld [vmem:[%s1641 + $0xc] sm:$0xf]
      %v1646 = vld [vmem:[%s1641 + $0x10] sm:$0xf]
      %v1647 = vld [vmem:[%s1641 + $0x14] sm:$0xf]
      %v1648 = vld [vmem:[%s1641 + $0x18] sm:$0xf]
      %v1649 = vld [vmem:[%s1641 + $0x1c] sm:$0xf]
      %v1658 = vunpack.c.l.b16 %v1642
      %v1659 = vunpack.c.l.b16 %v1643
      %v1660 = vunpack.c.l.b16 %v1644
      %v1661 = vunpack.c.l.b16 %v1645
      %v1662 = vunpack.c.l.b16 %v1646
      %v1663 = vunpack.c.l.b16 %v1647
      %v1664 = vunpack.c.l.b16 %v1648
      %v1665 = vunpack.c.l.b16 %v1649
      %v1666 = vpack.c.b16 %v1659, %v1658
      %v1667 = vpack.c.b16 %v1661, %v1660
      %v1668 = vpack.c.b16 %v1663, %v1662
      %v1669 = vpack.c.b16 %v1665, %v1664
      %v1675 = vsel %vm292, %v1640, 0
      %1677 = vmatprep.subr.bf16.mxu0 0
      %1678 = vmatpush1.bf16.msra.mxu0 %v1666
      %1679 = vmatprep.subr.bf16.mxu0 0
      %1680 = vmatpush1.bf16.msra.mxu0 %v1667
      %1681 = vmatprep.subr.bf16.mxu0 0
      %1682 = vmatpush1.bf16.msra.mxu0 %v1668
      %1683 = vmatprep.subr.bf16.mxu0 0
      %1684 = vmatpush1.bf16.msra.mxu0 %v1669
      %1685 = vmatprep.subr.bf16.mxu0 0
      %1686 = vmatpush1.bf16.msra.mxu0 0
      %1687 = vmatprep.subr.bf16.mxu0 0
      %1688 = vmatpush1.bf16.msra.mxu0 0
      %1689 = vmatprep.subr.bf16.mxu0 0
      %1690 = vmatpush1.bf16.msra.mxu0 0
      %1691 = vmatprep.subr.bf16.mxu0 0
      %1692 = vmatpush1.bf16.msra.mxu0 0
      %1693 = vmatprep.subr.bf16.mxu0 0
      %1694 = vmatpush1.bf16.msra.mxu0 0
      %1695 = vmatprep.subr.bf16.mxu0 0
      %1696 = vmatpush1.bf16.msra.mxu0 0
      %1697 = vmatprep.subr.bf16.mxu0 0
      %1698 = vmatpush1.bf16.msra.mxu0 0
      %1699 = vmatprep.subr.bf16.mxu0 0
      %1700 = vmatpush1.bf16.msra.mxu0 0
      %1701 = vmatprep.subr.bf16.mxu0 0
      %1702 = vmatpush1.bf16.msra.mxu0 0
      %1703 = vmatprep.subr.bf16.mxu0 0
      %1704 = vmatpush1.bf16.msra.mxu0 0
      %1705 = vmatprep.subr.bf16.mxu0 0
      %1706 = vmatpush1.bf16.msra.mxu0 0
      %1707 = vmatprep.subr.bf16.mxu0 0
      %1708 = vmatpush1.bf16.msra.mxu0 0
      %1709 = vmatprep.mubr.bf16.mxu0 0
      %1710 = vmatmul.mubr.bf16.gmra.mrb[0].mxu0 %v1675
      %v1711 = vpop.f32.mrb[0].mxu0
      %v1712 = vadd.f32 0.0, %v1711
      %v1713 = vpop.f32.mrb[0].mxu0
      %v1714 = vpop.f32.mrb[0].mxu0
      %v1715 = vpop.f32.mrb[0].mxu0
      %1716 = vdwg.mxu0
      %v1717 = vadd.f32 %v1625, %v1712
      %v1719 = vrot.slane %v1536, 6
      %v1720 = vsel %vm287, %v1629, %v1719
      %v1722 = vsel %vm292, %v1720, 0.0
      %v1723 = vrot.slane %v1722, 4
      %v1724 = vadd.f32 %v1722, %v1723
      %v1725 = vrot.slane %v1724, 2
      %v1726 = vadd.f32 %v1724, %v1725
      %v1727 = vrot.slane %v1726, 1
      %v1728 = vadd.f32 %v1726, %v1727
      %v1729 = vmul.f32 %v1728, 0.015625
      %v1730 = vpack.c.bf16 %v1729, %v1729
      %s1731 = scalar_lea.vmem %s1, 448
      %v1732 = vld [vmem:[%s1731] sm:$0xf]
      %v1733 = vld [vmem:[%s1731 + $0x4] sm:$0xf]
      %v1734 = vld [vmem:[%s1731 + $0x8] sm:$0xf]
      %v1735 = vld [vmem:[%s1731 + $0xc] sm:$0xf]
      %v1736 = vld [vmem:[%s1731 + $0x10] sm:$0xf]
      %v1737 = vld [vmem:[%s1731 + $0x14] sm:$0xf]
      %v1738 = vld [vmem:[%s1731 + $0x18] sm:$0xf]
      %v1739 = vld [vmem:[%s1731 + $0x1c] sm:$0xf]
      %v1748 = vunpack.c.l.b16 %v1732
      %v1749 = vunpack.c.l.b16 %v1733
      %v1750 = vunpack.c.l.b16 %v1734
      %v1751 = vunpack.c.l.b16 %v1735
      %v1752 = vunpack.c.l.b16 %v1736
      %v1753 = vunpack.c.l.b16 %v1737
      %v1754 = vunpack.c.l.b16 %v1738
      %v1755 = vunpack.c.l.b16 %v1739
      %v1756 = vpack.c.b16 %v1749, %v1748
      %v1757 = vpack.c.b16 %v1751, %v1750
      %v1758 = vpack.c.b16 %v1753, %v1752
      %v1759 = vpack.c.b16 %v1755, %v1754
      %v1765 = vsel %vm292, %v1730, 0
      %1767 = vmatprep.subr.bf16.mxu0 0
      %1768 = vmatpush1.bf16.msra.mxu0 %v1756
      %1769 = vmatprep.subr.bf16.mxu0 0
      %1770 = vmatpush1.bf16.msra.mxu0 %v1757
      %1771 = vmatprep.subr.bf16.mxu0 0
      %1772 = vmatpush1.bf16.msra.mxu0 %v1758
      %1773 = vmatprep.subr.bf16.mxu0 0
      %1774 = vmatpush1.bf16.msra.mxu0 %v1759
      %1775 = vmatprep.subr.bf16.mxu0 0
      %1776 = vmatpush1.bf16.msra.mxu0 0
      %1777 = vmatprep.subr.bf16.mxu0 0
      %1778 = vmatpush1.bf16.msra.mxu0 0
      %1779 = vmatprep.subr.bf16.mxu0 0
      %1780 = vmatpush1.bf16.msra.mxu0 0
      %1781 = vmatprep.subr.bf16.mxu0 0
      %1782 = vmatpush1.bf16.msra.mxu0 0
      %1783 = vmatprep.subr.bf16.mxu0 0
      %1784 = vmatpush1.bf16.msra.mxu0 0
      %1785 = vmatprep.subr.bf16.mxu0 0
      %1786 = vmatpush1.bf16.msra.mxu0 0
      %1787 = vmatprep.subr.bf16.mxu0 0
      %1788 = vmatpush1.bf16.msra.mxu0 0
      %1789 = vmatprep.subr.bf16.mxu0 0
      %1790 = vmatpush1.bf16.msra.mxu0 0
      %1791 = vmatprep.subr.bf16.mxu0 0
      %1792 = vmatpush1.bf16.msra.mxu0 0
      %1793 = vmatprep.subr.bf16.mxu0 0
      %1794 = vmatpush1.bf16.msra.mxu0 0
      %1795 = vmatprep.subr.bf16.mxu0 0
      %1796 = vmatpush1.bf16.msra.mxu0 0
      %1797 = vmatprep.subr.bf16.mxu0 0
      %1798 = vmatpush1.bf16.msra.mxu0 0
      %1799 = vmatprep.mubr.bf16.mxu0 0
      %1800 = vmatmul.mubr.bf16.gmra.mrb[0].mxu0 %v1765
      %v1801 = vpop.f32.mrb[0].mxu0
      %v1802 = vadd.f32 0.0, %v1801
      %v1803 = vpop.f32.mrb[0].mxu0
      %v1804 = vpop.f32.mrb[0].mxu0
      %v1805 = vpop.f32.mrb[0].mxu0
      %1806 = vdwg.mxu0
      %v1807 = vadd.f32 %v1717, %v1802
      %v1809 = vrot.slane %v1537, 6
      %v1810 = vsel %vm287, %v1719, %v1809
      %v1812 = vsel %vm292, %v1810, 0.0
      %v1813 = vrot.slane %v1812, 4
      %v1814 = vadd.f32 %v1812, %v1813
      %v1815 = vrot.slane %v1814, 2
      %v1816 = vadd.f32 %v1814, %v1815
      %v1817 = vrot.slane %v1816, 1
      %v1818 = vadd.f32 %v1816, %v1817
      %v1819 = vmul.f32 %v1818, 0.015625
      %v1820 = vpack.c.bf16 %v1819, %v1819
      %s1821 = scalar_lea.vmem %s1, 480
      %v1822 = vld [vmem:[%s1821] sm:$0xf]
      %v1823 = vld [vmem:[%s1821 + $0x4] sm:$0xf]
      %v1824 = vld [vmem:[%s1821 + $0x8] sm:$0xf]
      %v1825 = vld [vmem:[%s1821 + $0xc] sm:$0xf]
      %v1826 = vld [vmem:[%s1821 + $0x10] sm:$0xf]
      %v1827 = vld [vmem:[%s1821 + $0x14] sm:$0xf]
      %v1828 = vld [vmem:[%s1821 + $0x18] sm:$0xf]
      %v1829 = vld [vmem:[%s1821 + $0x1c] sm:$0xf]
      %v1838 = vunpack.c.l.b16 %v1822
      %v1839 = vunpack.c.l.b16 %v1823
      %v1840 = vunpack.c.l.b16 %v1824
      %v1841 = vunpack.c.l.b16 %v1825
      %v1842 = vunpack.c.l.b16 %v1826
      %v1843 = vunpack.c.l.b16 %v1827
      %v1844 = vunpack.c.l.b16 %v1828
      %v1845 = vunpack.c.l.b16 %v1829
      %v1846 = vpack.c.b16 %v1839, %v1838
      %v1847 = vpack.c.b16 %v1841, %v1840
      %v1848 = vpack.c.b16 %v1843, %v1842
      %v1849 = vpack.c.b16 %v1845, %v1844
      %v1855 = vsel %vm292, %v1820, 0
      %1857 = vmatprep.subr.bf16.mxu0 0
      %1858 = vmatpush1.bf16.msra.mxu0 %v1846
      %1859 = vmatprep.subr.bf16.mxu0 0
      %1860 = vmatpush1.bf16.msra.mxu0 %v1847
      %1861 = vmatprep.subr.bf16.mxu0 0
      %1862 = vmatpush1.bf16.msra.mxu0 %v1848
      %1863 = vmatprep.subr.bf16.mxu0 0
      %1864 = vmatpush1.bf16.msra.mxu0 %v1849
      %1865 = vmatprep.subr.bf16.mxu0 0
      %1866 = vmatpush1.bf16.msra.mxu0 0
      %1867 = vmatprep.subr.bf16.mxu0 0
      %1868 = vmatpush1.bf16.msra.mxu0 0
      %1869 = vmatprep.subr.bf16.mxu0 0
      %1870 = vmatpush1.bf16.msra.mxu0 0
      %1871 = vmatprep.subr.bf16.mxu0 0
      %1872 = vmatpush1.bf16.msra.mxu0 0
      %1873 = vmatprep.subr.bf16.mxu0 0
      %1874 = vmatpush1.bf16.msra.mxu0 0
      %1875 = vmatprep.subr.bf16.mxu0 0
      %1876 = vmatpush1.bf16.msra.mxu0 0
      %1877 = vmatprep.subr.bf16.mxu0 0
      %1878 = vmatpush1.bf16.msra.mxu0 0
      %1879 = vmatprep.subr.bf16.mxu0 0
      %1880 = vmatpush1.bf16.msra.mxu0 0
      %1881 = vmatprep.subr.bf16.mxu0 0
      %1882 = vmatpush1.bf16.msra.mxu0 0
      %1883 = vmatprep.subr.bf16.mxu0 0
      %1884 = vmatpush1.bf16.msra.mxu0 0
      %1885 = vmatprep.subr.bf16.mxu0 0
      %1886 = vmatpush1.bf16.msra.mxu0 0
      %1887 = vmatprep.subr.bf16.mxu0 0
      %1888 = vmatpush1.bf16.msra.mxu0 0
      %1889 = vmatprep.mubr.bf16.mxu0 0
      %1890 = vmatmul.mubr.bf16.gmra.mrb[0].mxu0 %v1855
      %v1891 = vpop.f32.mrb[0].mxu0
      %v1892 = vadd.f32 0.0, %v1891
      %v1893 = vpop.f32.mrb[0].mxu0
      %v1894 = vpop.f32.mrb[0].mxu0
      %v1895 = vpop.f32.mrb[0].mxu0
      %1896 = vdwg.mxu0
      %v1897 = vadd.f32 %v1807, %v1892
      %v1899 = vrot.slane %v1538, 6
      %v1900 = vsel %vm287, %v1809, %v1899
      %v1902 = vsel %vm292, %v1900, 0.0
      %v1903 = vrot.slane %v1902, 4
      %v1904 = vadd.f32 %v1902, %v1903
      %v1905 = vrot.slane %v1904, 2
      %v1906 = vadd.f32 %v1904, %v1905
      %v1907 = vrot.slane %v1906, 1
      %v1908 = vadd.f32 %v1906, %v1907
      %v1909 = vmul.f32 %v1908, 0.015625
      %v1910 = vpack.c.bf16 %v1909, %v1909
      %s1911 = scalar_lea.vmem %s1, 512
      %v1912 = vld [vmem:[%s1911] sm:$0xf]
      %v1913 = vld [vmem:[%s1911 + $0x4] sm:$0xf]
      %v1914 = vld [vmem:[%s1911 + $0x8] sm:$0xf]
      %v1915 = vld [vmem:[%s1911 + $0xc] sm:$0xf]
      %v1916 = vld [vmem:[%s1911 + $0x10] sm:$0xf]
      %v1917 = vld [vmem:[%s1911 + $0x14] sm:$0xf]
      %v1918 = vld [vmem:[%s1911 + $0x18] sm:$0xf]
      %v1919 = vld [vmem:[%s1911 + $0x1c] sm:$0xf]
      %v1928 = vunpack.c.l.b16 %v1912
      %v1929 = vunpack.c.l.b16 %v1913
      %v1930 = vunpack.c.l.b16 %v1914
      %v1931 = vunpack.c.l.b16 %v1915
      %v1932 = vunpack.c.l.b16 %v1916
      %v1933 = vunpack.c.l.b16 %v1917
      %v1934 = vunpack.c.l.b16 %v1918
      %v1935 = vunpack.c.l.b16 %v1919
      %v1936 = vpack.c.b16 %v1929, %v1928
      %v1937 = vpack.c.b16 %v1931, %v1930
      %v1938 = vpack.c.b16 %v1933, %v1932
      %v1939 = vpack.c.b16 %v1935, %v1934
      %v1945 = vsel %vm292, %v1910, 0
      %1947 = vmatprep.subr.bf16.mxu0 0
      %1948 = vmatpush1.bf16.msra.mxu0 %v1936
      %1949 = vmatprep.subr.bf16.mxu0 0
      %1950 = vmatpush1.bf16.msra.mxu0 %v1937
      %1951 = vmatprep.subr.bf16.mxu0 0
      %1952 = vmatpush1.bf16.msra.mxu0 %v1938
      %1953 = vmatprep.subr.bf16.mxu0 0
      %1954 = vmatpush1.bf16.msra.mxu0 %v1939
      %1955 = vmatprep.subr.bf16.mxu0 0
      %1956 = vmatpush1.bf16.msra.mxu0 0
      %1957 = vmatprep.subr.bf16.mxu0 0
      %1958 = vmatpush1.bf16.msra.mxu0 0
      %1959 = vmatprep.subr.bf16.mxu0 0
      %1960 = vmatpush1.bf16.msra.mxu0 0
      %1961 = vmatprep.subr.bf16.mxu0 0
      %1962 = vmatpush1.bf16.msra.mxu0 0
      %1963 = vmatprep.subr.bf16.mxu0 0
      %1964 = vmatpush1.bf16.msra.mxu0 0
      %1965 = vmatprep.subr.bf16.mxu0 0
      %1966 = vmatpush1.bf16.msra.mxu0 0
      %1967 = vmatprep.subr.bf16.mxu0 0
      %1968 = vmatpush1.bf16.msra.mxu0 0
      %1969 = vmatprep.subr.bf16.mxu0 0
      %1970 = vmatpush1.bf16.msra.mxu0 0
      %1971 = vmatprep.subr.bf16.mxu0 0
      %1972 = vmatpush1.bf16.msra.mxu0 0
      %1973 = vmatprep.subr.bf16.mxu0 0
      %1974 = vmatpush1.bf16.msra.mxu0 0
      %1975 = vmatprep.subr.bf16.mxu0 0
      %1976 = vmatpush1.bf16.msra.mxu0 0
      %1977 = vmatprep.subr.bf16.mxu0 0
      %1978 = vmatpush1.bf16.msra.mxu0 0
      %1979 = vmatprep.mubr.bf16.mxu0 0
      %1980 = vmatmul.mubr.bf16.gmra.mrb[0].mxu0 %v1945
      %v1981 = vpop.f32.mrb[0].mxu0
      %v1982 = vadd.f32 0.0, %v1981
      %v1983 = vpop.f32.mrb[0].mxu0
      %v1984 = vpop.f32.mrb[0].mxu0
      %v1985 = vpop.f32.mrb[0].mxu0
      %1986 = vdwg.mxu0
      %v1987 = vadd.f32 %v1897, %v1982
      %v1989 = vrot.slane %v1539, 6
      %v1990 = vsel %vm287, %v1899, %v1989
      %v1992 = vsel %vm719, %v1990, 0.0
      %v1993 = vrot.slane %v1992, 4
      %v1994 = vadd.f32 %v1992, %v1993
      %v1995 = vrot.slane %v1994, 2
      %v1996 = vadd.f32 %v1994, %v1995
      %v1997 = vrot.slane %v1996, 1
      %v1998 = vadd.f32 %v1996, %v1997
      %v1999 = vmul.f32 %v1998, 0.015625
      %v2000 = vpack.c.bf16 %v1999, %v1999
      %s2001 = scalar_lea.vmem %s1, 544
      %v2002 = vld [vmem:[%s2001] sm:$0xf]
      %v2003 = vld [vmem:[%s2001 + $0x4] sm:$0xf]
      %v2004 = vld [vmem:[%s2001 + $0x8] sm:$0xf]
      %v2005 = vld [vmem:[%s2001 + $0xc] sm:$0xf]
      %v2006 = vld [vmem:[%s2001 + $0x10] sm:$0xf]
      %v2007 = vld [vmem:[%s2001 + $0x14] sm:$0xf]
      %v2008 = vld [vmem:[%s2001 + $0x18] sm:$0xf]
      %v2009 = vld [vmem:[%s2001 + $0x1c] sm:$0xf]
      %v2018 = vunpack.c.l.b16 %v2002
      %v2019 = vunpack.c.l.b16 %v2003
      %v2020 = vunpack.c.l.b16 %v2004
      %v2021 = vunpack.c.l.b16 %v2005
      %v2022 = vunpack.c.l.b16 %v2006
      %v2023 = vunpack.c.l.b16 %v2007
      %v2024 = vunpack.c.l.b16 %v2008
      %v2025 = vunpack.c.l.b16 %v2009
      %v2026 = vpack.c.b16 %v2019, %v2018
      %v2027 = vpack.c.b16 %v2021, %v2020
      %v2028 = vpack.c.b16 %v2023, %v2022
      %v2029 = vpack.c.b16 %v2025, %v2024
      %v2035 = vsel %vm292, %v2000, 0
      %2037 = vmatprep.subr.bf16.mxu0 0
      %2038 = vmatpush1.bf16.msra.mxu0 %v2026
      %2039 = vmatprep.subr.bf16.mxu0 0
      %2040 = vmatpush1.bf16.msra.mxu0 %v2027
      %2041 = vmatprep.subr.bf16.mxu0 0
      %2042 = vmatpush1.bf16.msra.mxu0 %v2028
      %2043 = vmatprep.subr.bf16.mxu0 0
      %2044 = vmatpush1.bf16.msra.mxu0 %v2029
      %2045 = vmatprep.subr.bf16.mxu0 0
      %2046 = vmatpush1.bf16.msra.mxu0 0
      %2047 = vmatprep.subr.bf16.mxu0 0
      %2048 = vmatpush1.bf16.msra.mxu0 0
      %2049 = vmatprep.subr.bf16.mxu0 0
      %2050 = vmatpush1.bf16.msra.mxu0 0
      %2051 = vmatprep.subr.bf16.mxu0 0
      %2052 = vmatpush1.bf16.msra.mxu0 0
      %2053 = vmatprep.subr.bf16.mxu0 0
      %2054 = vmatpush1.bf16.msra.mxu0 0
      %2055 = vmatprep.subr.bf16.mxu0 0
      %2056 = vmatpush1.bf16.msra.mxu0 0
      %2057 = vmatprep.subr.bf16.mxu0 0
      %2058 = vmatpush1.bf16.msra.mxu0 0
      %2059 = vmatprep.subr.bf16.mxu0 0
      %2060 = vmatpush1.bf16.msra.mxu0 0
      %2061 = vmatprep.subr.bf16.mxu0 0
      %2062 = vmatpush1.bf16.msra.mxu0 0
      %2063 = vmatprep.subr.bf16.mxu0 0
      %2064 = vmatpush1.bf16.msra.mxu0 0
      %2065 = vmatprep.subr.bf16.mxu0 0
      %2066 = vmatpush1.bf16.msra.mxu0 0
      %2067 = vmatprep.subr.bf16.mxu0 0
      %2068 = vmatpush1.bf16.msra.mxu0 0
      %2069 = vmatprep.mubr.bf16.mxu0 0
      %2070 = vmatmul.mubr.bf16.gmra.mrb[0].mxu0 %v2035
      %v2071 = vpop.f32.mrb[0].mxu0
      %v2072 = vadd.f32 0.0, %v2071
      %v2073 = vpop.f32.mrb[0].mxu0
      %v2074 = vpop.f32.mrb[0].mxu0
      %v2075 = vpop.f32.mrb[0].mxu0
      %2076 = vdwg.mxu0
      %v2077 = vadd.f32 %v1987, %v2072
      %s2078 = scalar_lea.vmem %s217, 960
      %v2079 = vld [vmem:[%s2078] sm:$0xff]
      %v2080 = vld [vmem:[%s2078 + $0x8] sm:$0xff]
      %v2081 = vld [vmem:[%s2078 + $0x10] sm:$0xff]
      %v2082 = vld [vmem:[%s2078 + $0x18] sm:$0xff]
      %v2083 = vld [vmem:[%s2078 + $0x20] sm:$0xff]
      %v2084 = vld [vmem:[%s2078 + $0x28] sm:$0x1f]
      %s2085 = scalar_lea.vmem %s217, 1008
      %v2086 = vld [vmem:[%s2085] sm:$0xff]
      %v2087 = vld [vmem:[%s2085 + $0x8] sm:$0xff]
      %v2088 = vld [vmem:[%s2085 + $0x10] sm:$0xff]
      %v2089 = vld [vmem:[%s2085 + $0x18] sm:$0xff]
      %v2090 = vld [vmem:[%s2085 + $0x20] sm:$0xff]
      %v2091 = vld [vmem:[%s2085 + $0x28] sm:$0x1f]
      %v2092 = vadd.f32 %v2079, %v2086
      %v2093 = vadd.f32 %v2080, %v2087
      %v2094 = vadd.f32 %v2081, %v2088
      %v2095 = vadd.f32 %v2082, %v2089
      %v2096 = vadd.f32 %v2083, %v2090
      %v2097 = vadd.f32 %v2084, %v2091
      %s2098 = scalar_lea.vmem %s217, 1056
      %v2099 = vld [vmem:[%s2098] sm:$0xff]
      %v2100 = vld [vmem:[%s2098 + $0x8] sm:$0xff]
      %v2101 = vld [vmem:[%s2098 + $0x10] sm:$0xff]
      %v2102 = vld [vmem:[%s2098 + $0x18] sm:$0xff]
      %v2103 = vld [vmem:[%s2098 + $0x20] sm:$0xff]
      %v2104 = vld [vmem:[%s2098 + $0x28] sm:$0x1f]
      %v2105 = vadd.f32 %v2092, %v2099
      %v2106 = vadd.f32 %v2093, %v2100
      %v2107 = vadd.f32 %v2094, %v2101
      %v2108 = vadd.f32 %v2095, %v2102
      %v2109 = vadd.f32 %v2096, %v2103
      %v2110 = vadd.f32 %v2097, %v2104
      %s2111 = scalar_lea.vmem %s217, 1104
      %v2112 = vld [vmem:[%s2111] sm:$0xff]
      %v2113 = vld [vmem:[%s2111 + $0x8] sm:$0xff]
      %v2114 = vld [vmem:[%s2111 + $0x10] sm:$0xff]
      %v2115 = vld [vmem:[%s2111 + $0x18] sm:$0xff]
      %v2116 = vld [vmem:[%s2111 + $0x20] sm:$0xff]
      %v2117 = vld [vmem:[%s2111 + $0x28] sm:$0x1f]
      %v2118 = vadd.f32 %v2105, %v2112
      %v2119 = vadd.f32 %v2106, %v2113
      %v2120 = vadd.f32 %v2107, %v2114
      %v2121 = vadd.f32 %v2108, %v2115
      %v2122 = vadd.f32 %v2109, %v2116
      %v2123 = vadd.f32 %v2110, %v2117
      %s2124 = scalar_lea.vmem %s217, 1152
      %v2125 = vld [vmem:[%s2124] sm:$0xff]
      %v2126 = vld [vmem:[%s2124 + $0x8] sm:$0xff]
      %v2127 = vld [vmem:[%s2124 + $0x10] sm:$0xff]
      %v2128 = vld [vmem:[%s2124 + $0x18] sm:$0xff]
      %v2129 = vld [vmem:[%s2124 + $0x20] sm:$0xff]
      %v2130 = vld [vmem:[%s2124 + $0x28] sm:$0x1f]
      %v2131 = vadd.f32 %v2118, %v2125
      %v2132 = vadd.f32 %v2119, %v2126
      %v2133 = vadd.f32 %v2120, %v2127
      %v2134 = vadd.f32 %v2121, %v2128
      %v2135 = vadd.f32 %v2122, %v2129
      %v2136 = vadd.f32 %v2123, %v2130
      %s2137 = scalar_lea.vmem %s217, 1200
      %v2138 = vld [vmem:[%s2137] sm:$0xff]
      %v2139 = vld [vmem:[%s2137 + $0x8] sm:$0xff]
      %v2140 = vld [vmem:[%s2137 + $0x10] sm:$0xff]
      %v2141 = vld [vmem:[%s2137 + $0x18] sm:$0xff]
      %v2142 = vld [vmem:[%s2137 + $0x20] sm:$0xff]
      %v2143 = vld [vmem:[%s2137 + $0x28] sm:$0x1f]
      %v2144 = vadd.f32 %v2131, %v2138
      %v2145 = vadd.f32 %v2132, %v2139
      %v2146 = vadd.f32 %v2133, %v2140
      %v2147 = vadd.f32 %v2134, %v2141
      %v2148 = vadd.f32 %v2135, %v2142
      %v2149 = vadd.f32 %v2136, %v2143
      %s2150 = scalar_lea.vmem %s217, 1248
      %v2151 = vld [vmem:[%s2150] sm:$0xff]
      %v2152 = vld [vmem:[%s2150 + $0x8] sm:$0xff]
      %v2153 = vld [vmem:[%s2150 + $0x10] sm:$0xff]
      %v2154 = vld [vmem:[%s2150 + $0x18] sm:$0xff]
      %v2155 = vld [vmem:[%s2150 + $0x20] sm:$0xff]
      %v2156 = vld [vmem:[%s2150 + $0x28] sm:$0x1f]
      %v2157 = vadd.f32 %v2144, %v2151
      %v2158 = vadd.f32 %v2145, %v2152
      %v2159 = vadd.f32 %v2146, %v2153
      %v2160 = vadd.f32 %v2147, %v2154
      %v2161 = vadd.f32 %v2148, %v2155
      %v2162 = vadd.f32 %v2149, %v2156
      %s2163 = scalar_lea.vmem %s217, 1296
      %v2164 = vld [vmem:[%s2163] sm:$0xff]
      %v2165 = vld [vmem:[%s2163 + $0x8] sm:$0xff]
      %v2166 = vld [vmem:[%s2163 + $0x10] sm:$0xff]
      %v2167 = vld [vmem:[%s2163 + $0x18] sm:$0xff]
      %v2168 = vld [vmem:[%s2163 + $0x20] sm:$0xff]
      %v2169 = vld [vmem:[%s2163 + $0x28] sm:$0x1f]
      %v2170 = vadd.f32 %v2157, %v2164
      %v2171 = vadd.f32 %v2158, %v2165
      %v2172 = vadd.f32 %v2159, %v2166
      %v2173 = vadd.f32 %v2160, %v2167
      %v2174 = vadd.f32 %v2161, %v2168
      %v2175 = vadd.f32 %v2162, %v2169
      %v2176 = vsel %vm267, %v2170, 0.0
      %v2177 = vrot.slane %v2176, 4
      %v2178 = vadd.f32 %v2176, %v2177
      %v2179 = vrot.slane %v2178, 2
      %v2180 = vadd.f32 %v2178, %v2179
      %v2181 = vrot.slane %v2180, 1
      %v2182 = vadd.f32 %v2180, %v2181
      %v2183 = vmul.f32 %v2182, 0.015625
      %v2184 = vpack.c.bf16 %v2183, %v2183
      %s2185 = scalar_lea.vmem %s1, 576
      %v2186 = vld [vmem:[%s2185] sm:$0xf]
      %v2187 = vld [vmem:[%s2185 + $0x4] sm:$0xf]
      %v2188 = vld [vmem:[%s2185 + $0x8] sm:$0xf]
      %v2189 = vld [vmem:[%s2185 + $0xc] sm:$0xf]
      %v2190 = vld [vmem:[%s2185 + $0x10] sm:$0xf]
      %v2191 = vld [vmem:[%s2185 + $0x14] sm:$0xf]
      %v2192 = vld [vmem:[%s2185 + $0x18] sm:$0xf]
      %v2193 = vld [vmem:[%s2185 + $0x1c] sm:$0xf]
      %v2202 = vunpack.c.l.b16 %v2186
      %v2203 = vunpack.c.l.b16 %v2187
      %v2204 = vunpack.c.l.b16 %v2188
      %v2205 = vunpack.c.l.b16 %v2189
      %v2206 = vunpack.c.l.b16 %v2190
      %v2207 = vunpack.c.l.b16 %v2191
      %v2208 = vunpack.c.l.b16 %v2192
      %v2209 = vunpack.c.l.b16 %v2193
      %v2210 = vpack.c.b16 %v2203, %v2202
      %v2211 = vpack.c.b16 %v2205, %v2204
      %v2212 = vpack.c.b16 %v2207, %v2206
      %v2213 = vpack.c.b16 %v2209, %v2208
      %v2219 = vsel %vm292, %v2184, 0
      %2221 = vmatprep.subr.bf16.mxu0 0
      %2222 = vmatpush1.bf16.msra.mxu0 %v2210
      %2223 = vmatprep.subr.bf16.mxu0 0
      %2224 = vmatpush1.bf16.msra.mxu0 %v2211
      %2225 = vmatprep.subr.bf16.mxu0 0
      %2226 = vmatpush1.bf16.msra.mxu0 %v2212
      %2227 = vmatprep.subr.bf16.mxu0 0
      %2228 = vmatpush1.bf16.msra.mxu0 %v2213
      %2229 = vmatprep.subr.bf16.mxu0 0
      %2230 = vmatpush1.bf16.msra.mxu0 0
      %2231 = vmatprep.subr.bf16.mxu0 0
      %2232 = vmatpush1.bf16.msra.mxu0 0
      %2233 = vmatprep.subr.bf16.mxu0 0
      %2234 = vmatpush1.bf16.msra.mxu0 0
      %2235 = vmatprep.subr.bf16.mxu0 0
      %2236 = vmatpush1.bf16.msra.mxu0 0
      %2237 = vmatprep.subr.bf16.mxu0 0
      %2238 = vmatpush1.bf16.msra.mxu0 0
      %2239 = vmatprep.subr.bf16.mxu0 0
      %2240 = vmatpush1.bf16.msra.mxu0 0
      %2241 = vmatprep.subr.bf16.mxu0 0
      %2242 = vmatpush1.bf16.msra.mxu0 0
      %2243 = vmatprep.subr.bf16.mxu0 0
      %2244 = vmatpush1.bf16.msra.mxu0 0
      %2245 = vmatprep.subr.bf16.mxu0 0
      %2246 = vmatpush1.bf16.msra.mxu0 0
      %2247 = vmatprep.subr.bf16.mxu0 0
      %2248 = vmatpush1.bf16.msra.mxu0 0
      %2249 = vmatprep.subr.bf16.mxu0 0
      %2250 = vmatpush1.bf16.msra.mxu0 0
      %2251 = vmatprep.subr.bf16.mxu0 0
      %2252 = vmatpush1.bf16.msra.mxu0 0
      %2253 = vmatprep.mubr.bf16.mxu0 0
      %2254 = vmatmul.mubr.bf16.gmra.mrb[0].mxu0 %v2219
      %v2255 = vpop.f32.mrb[0].mxu0
      %v2256 = vadd.f32 0.0, %v2255
      %v2257 = vpop.f32.mrb[0].mxu0
      %v2258 = vpop.f32.mrb[0].mxu0
      %v2259 = vpop.f32.mrb[0].mxu0
      %2260 = vdwg.mxu0
      %v2261 = vadd.f32 %v2077, %v2256
      %v2264 = vrot.slane %v2170, 6
      %v2265 = vrot.slane %v2171, 6
      %v2266 = vsel %vm287, %v2264, %v2265
      %v2268 = vsel %vm292, %v2266, 0.0
      %v2269 = vrot.slane %v2268, 4
      %v2270 = vadd.f32 %v2268, %v2269
      %v2271 = vrot.slane %v2270, 2
      %v2272 = vadd.f32 %v2270, %v2271
      %v2273 = vrot.slane %v2272, 1
      %v2274 = vadd.f32 %v2272, %v2273
      %v2275 = vmul.f32 %v2274, 0.015625
      %v2276 = vpack.c.bf16 %v2275, %v2275
      %s2277 = scalar_lea.vmem %s1, 608
      %v2278 = vld [vmem:[%s2277] sm:$0xf]
      %v2279 = vld [vmem:[%s2277 + $0x4] sm:$0xf]
      %v2280 = vld [vmem:[%s2277 + $0x8] sm:$0xf]
      %v2281 = vld [vmem:[%s2277 + $0xc] sm:$0xf]
      %v2282 = vld [vmem:[%s2277 + $0x10] sm:$0xf]
      %v2283 = vld [vmem:[%s2277 + $0x14] sm:$0xf]
      %v2284 = vld [vmem:[%s2277 + $0x18] sm:$0xf]
      %v2285 = vld [vmem:[%s2277 + $0x1c] sm:$0xf]
      %v2294 = vunpack.c.l.b16 %v2278
      %v2295 = vunpack.c.l.b16 %v2279
      %v2296 = vunpack.c.l.b16 %v2280
      %v2297 = vunpack.c.l.b16 %v2281
      %v2298 = vunpack.c.l.b16 %v2282
      %v2299 = vunpack.c.l.b16 %v2283
      %v2300 = vunpack.c.l.b16 %v2284
      %v2301 = vunpack.c.l.b16 %v2285
      %v2302 = vpack.c.b16 %v2295, %v2294
      %v2303 = vpack.c.b16 %v2297, %v2296
      %v2304 = vpack.c.b16 %v2299, %v2298
      %v2305 = vpack.c.b16 %v2301, %v2300
      %v2311 = vsel %vm292, %v2276, 0
      %2313 = vmatprep.subr.bf16.mxu0 0
      %2314 = vmatpush1.bf16.msra.mxu0 %v2302
      %2315 = vmatprep.subr.bf16.mxu0 0
      %2316 = vmatpush1.bf16.msra.mxu0 %v2303
      %2317 = vmatprep.subr.bf16.mxu0 0
      %2318 = vmatpush1.bf16.msra.mxu0 %v2304
      %2319 = vmatprep.subr.bf16.mxu0 0
      %2320 = vmatpush1.bf16.msra.mxu0 %v2305
      %2321 = vmatprep.subr.bf16.mxu0 0
      %2322 = vmatpush1.bf16.msra.mxu0 0
      %2323 = vmatprep.subr.bf16.mxu0 0
      %2324 = vmatpush1.bf16.msra.mxu0 0
      %2325 = vmatprep.subr.bf16.mxu0 0
      %2326 = vmatpush1.bf16.msra.mxu0 0
      %2327 = vmatprep.subr.bf16.mxu0 0
      %2328 = vmatpush1.bf16.msra.mxu0 0
      %2329 = vmatprep.subr.bf16.mxu0 0
      %2330 = vmatpush1.bf16.msra.mxu0 0
      %2331 = vmatprep.subr.bf16.mxu0 0
      %2332 = vmatpush1.bf16.msra.mxu0 0
      %2333 = vmatprep.subr.bf16.mxu0 0
      %2334 = vmatpush1.bf16.msra.mxu0 0
      %2335 = vmatprep.subr.bf16.mxu0 0
      %2336 = vmatpush1.bf16.msra.mxu0 0
      %2337 = vmatprep.subr.bf16.mxu0 0
      %2338 = vmatpush1.bf16.msra.mxu0 0
      %2339 = vmatprep.subr.bf16.mxu0 0
      %2340 = vmatpush1.bf16.msra.mxu0 0
      %2341 = vmatprep.subr.bf16.mxu0 0
      %2342 = vmatpush1.bf16.msra.mxu0 0
      %2343 = vmatprep.subr.bf16.mxu0 0
      %2344 = vmatpush1.bf16.msra.mxu0 0
      %2345 = vmatprep.mubr.bf16.mxu0 0
      %2346 = vmatmul.mubr.bf16.gmra.mrb[0].mxu0 %v2311
      %v2347 = vpop.f32.mrb[0].mxu0
      %v2348 = vadd.f32 0.0, %v2347
      %v2349 = vpop.f32.mrb[0].mxu0
      %v2350 = vpop.f32.mrb[0].mxu0
      %v2351 = vpop.f32.mrb[0].mxu0
      %2352 = vdwg.mxu0
      %v2353 = vadd.f32 %v2261, %v2348
      %v2355 = vrot.slane %v2172, 6
      %v2356 = vsel %vm287, %v2265, %v2355
      %v2358 = vsel %vm292, %v2356, 0.0
      %v2359 = vrot.slane %v2358, 4
      %v2360 = vadd.f32 %v2358, %v2359
      %v2361 = vrot.slane %v2360, 2
      %v2362 = vadd.f32 %v2360, %v2361
      %v2363 = vrot.slane %v2362, 1
      %v2364 = vadd.f32 %v2362, %v2363
      %v2365 = vmul.f32 %v2364, 0.015625
      %v2366 = vpack.c.bf16 %v2365, %v2365
      %s2367 = scalar_lea.vmem %s1, 640
      %v2368 = vld [vmem:[%s2367] sm:$0xf]
      %v2369 = vld [vmem:[%s2367 + $0x4] sm:$0xf]
      %v2370 = vld [vmem:[%s2367 + $0x8] sm:$0xf]
      %v2371 = vld [vmem:[%s2367 + $0xc] sm:$0xf]
      %v2372 = vld [vmem:[%s2367 + $0x10] sm:$0xf]
      %v2373 = vld [vmem:[%s2367 + $0x14] sm:$0xf]
      %v2374 = vld [vmem:[%s2367 + $0x18] sm:$0xf]
      %v2375 = vld [vmem:[%s2367 + $0x1c] sm:$0xf]
      %v2384 = vunpack.c.l.b16 %v2368
      %v2385 = vunpack.c.l.b16 %v2369
      %v2386 = vunpack.c.l.b16 %v2370
      %v2387 = vunpack.c.l.b16 %v2371
      %v2388 = vunpack.c.l.b16 %v2372
      %v2389 = vunpack.c.l.b16 %v2373
      %v2390 = vunpack.c.l.b16 %v2374
      %v2391 = vunpack.c.l.b16 %v2375
      %v2392 = vpack.c.b16 %v2385, %v2384
      %v2393 = vpack.c.b16 %v2387, %v2386
      %v2394 = vpack.c.b16 %v2389, %v2388
      %v2395 = vpack.c.b16 %v2391, %v2390
      %v2401 = vsel %vm292, %v2366, 0
      %2403 = vmatprep.subr.bf16.mxu0 0
      %2404 = vmatpush1.bf16.msra.mxu0 %v2392
      %2405 = vmatprep.subr.bf16.mxu0 0
      %2406 = vmatpush1.bf16.msra.mxu0 %v2393
      %2407 = vmatprep.subr.bf16.mxu0 0
      %2408 = vmatpush1.bf16.msra.mxu0 %v2394
      %2409 = vmatprep.subr.bf16.mxu0 0
      %2410 = vmatpush1.bf16.msra.mxu0 %v2395
      %2411 = vmatprep.subr.bf16.mxu0 0
      %2412 = vmatpush1.bf16.msra.mxu0 0
      %2413 = vmatprep.subr.bf16.mxu0 0
      %2414 = vmatpush1.bf16.msra.mxu0 0
      %2415 = vmatprep.subr.bf16.mxu0 0
      %2416 = vmatpush1.bf16.msra.mxu0 0
      %2417 = vmatprep.subr.bf16.mxu0 0
      %2418 = vmatpush1.bf16.msra.mxu0 0
      %2419 = vmatprep.subr.bf16.mxu0 0
      %2420 = vmatpush1.bf16.msra.mxu0 0
      %2421 = vmatprep.subr.bf16.mxu0 0
      %2422 = vmatpush1.bf16.msra.mxu0 0
      %2423 = vmatprep.subr.bf16.mxu0 0
      %2424 = vmatpush1.bf16.msra.mxu0 0
      %2425 = vmatprep.subr.bf16.mxu0 0
      %2426 = vmatpush1.bf16.msra.mxu0 0
      %2427 = vmatprep.subr.bf16.mxu0 0
      %2428 = vmatpush1.bf16.msra.mxu0 0
      %2429 = vmatprep.subr.bf16.mxu0 0
      %2430 = vmatpush1.bf16.msra.mxu0 0
      %2431 = vmatprep.subr.bf16.mxu0 0
      %2432 = vmatpush1.bf16.msra.mxu0 0
      %2433 = vmatprep.subr.bf16.mxu0 0
      %2434 = vmatpush1.bf16.msra.mxu0 0
      %2435 = vmatprep.mubr.bf16.mxu0 0
      %2436 = vmatmul.mubr.bf16.gmra.mrb[0].mxu0 %v2401
      %v2437 = vpop.f32.mrb[0].mxu0
      %v2438 = vadd.f32 0.0, %v2437
      %v2439 = vpop.f32.mrb[0].mxu0
      %v2440 = vpop.f32.mrb[0].mxu0
      %v2441 = vpop.f32.mrb[0].mxu0
      %2442 = vdwg.mxu0
      %v2443 = vadd.f32 %v2353, %v2438
      %v2445 = vrot.slane %v2173, 6
      %v2446 = vsel %vm287, %v2355, %v2445
      %v2448 = vsel %vm292, %v2446, 0.0
      %v2449 = vrot.slane %v2448, 4
      %v2450 = vadd.f32 %v2448, %v2449
      %v2451 = vrot.slane %v2450, 2
      %v2452 = vadd.f32 %v2450, %v2451
      %v2453 = vrot.slane %v2452, 1
      %v2454 = vadd.f32 %v2452, %v2453
      %v2455 = vmul.f32 %v2454, 0.015625
      %v2456 = vpack.c.bf16 %v2455, %v2455
      %s2457 = scalar_lea.vmem %s1, 672
      %v2458 = vld [vmem:[%s2457] sm:$0xf]
      %v2459 = vld [vmem:[%s2457 + $0x4] sm:$0xf]
      %v2460 = vld [vmem:[%s2457 + $0x8] sm:$0xf]
      %v2461 = vld [vmem:[%s2457 + $0xc] sm:$0xf]
      %v2462 = vld [vmem:[%s2457 + $0x10] sm:$0xf]
      %v2463 = vld [vmem:[%s2457 + $0x14] sm:$0xf]
      %v2464 = vld [vmem:[%s2457 + $0x18] sm:$0xf]
      %v2465 = vld [vmem:[%s2457 + $0x1c] sm:$0xf]
      %v2474 = vunpack.c.l.b16 %v2458
      %v2475 = vunpack.c.l.b16 %v2459
      %v2476 = vunpack.c.l.b16 %v2460
      %v2477 = vunpack.c.l.b16 %v2461
      %v2478 = vunpack.c.l.b16 %v2462
      %v2479 = vunpack.c.l.b16 %v2463
      %v2480 = vunpack.c.l.b16 %v2464
      %v2481 = vunpack.c.l.b16 %v2465
      %v2482 = vpack.c.b16 %v2475, %v2474
      %v2483 = vpack.c.b16 %v2477, %v2476
      %v2484 = vpack.c.b16 %v2479, %v2478
      %v2485 = vpack.c.b16 %v2481, %v2480
      %v2491 = vsel %vm292, %v2456, 0
      %2493 = vmatprep.subr.bf16.mxu0 0
      %2494 = vmatpush1.bf16.msra.mxu0 %v2482
      %2495 = vmatprep.subr.bf16.mxu0 0
      %2496 = vmatpush1.bf16.msra.mxu0 %v2483
      %2497 = vmatprep.subr.bf16.mxu0 0
      %2498 = vmatpush1.bf16.msra.mxu0 %v2484
      %2499 = vmatprep.subr.bf16.mxu0 0
      %2500 = vmatpush1.bf16.msra.mxu0 %v2485
      %2501 = vmatprep.subr.bf16.mxu0 0
      %2502 = vmatpush1.bf16.msra.mxu0 0
      %2503 = vmatprep.subr.bf16.mxu0 0
      %2504 = vmatpush1.bf16.msra.mxu0 0
      %2505 = vmatprep.subr.bf16.mxu0 0
      %2506 = vmatpush1.bf16.msra.mxu0 0
      %2507 = vmatprep.subr.bf16.mxu0 0
      %2508 = vmatpush1.bf16.msra.mxu0 0
      %2509 = vmatprep.subr.bf16.mxu0 0
      %2510 = vmatpush1.bf16.msra.mxu0 0
      %2511 = vmatprep.subr.bf16.mxu0 0
      %2512 = vmatpush1.bf16.msra.mxu0 0
      %2513 = vmatprep.subr.bf16.mxu0 0
      %2514 = vmatpush1.bf16.msra.mxu0 0
      %2515 = vmatprep.subr.bf16.mxu0 0
      %2516 = vmatpush1.bf16.msra.mxu0 0
      %2517 = vmatprep.subr.bf16.mxu0 0
      %2518 = vmatpush1.bf16.msra.mxu0 0
      %2519 = vmatprep.subr.bf16.mxu0 0
      %2520 = vmatpush1.bf16.msra.mxu0 0
      %2521 = vmatprep.subr.bf16.mxu0 0
      %2522 = vmatpush1.bf16.msra.mxu0 0
      %2523 = vmatprep.subr.bf16.mxu0 0
      %2524 = vmatpush1.bf16.msra.mxu0 0
      %2525 = vmatprep.mubr.bf16.mxu0 0
      %2526 = vmatmul.mubr.bf16.gmra.mrb[0].mxu0 %v2491
      %v2527 = vpop.f32.mrb[0].mxu0
      %v2528 = vadd.f32 0.0, %v2527
      %v2529 = vpop.f32.mrb[0].mxu0
      %v2530 = vpop.f32.mrb[0].mxu0
      %v2531 = vpop.f32.mrb[0].mxu0
      %2532 = vdwg.mxu0
      %v2533 = vadd.f32 %v2443, %v2528
      %v2535 = vrot.slane %v2174, 6
      %v2536 = vsel %vm287, %v2445, %v2535
      %v2538 = vsel %vm292, %v2536, 0.0
      %v2539 = vrot.slane %v2538, 4
      %v2540 = vadd.f32 %v2538, %v2539
      %v2541 = vrot.slane %v2540, 2
      %v2542 = vadd.f32 %v2540, %v2541
      %v2543 = vrot.slane %v2542, 1
      %v2544 = vadd.f32 %v2542, %v2543
      %v2545 = vmul.f32 %v2544, 0.015625
      %v2546 = vpack.c.bf16 %v2545, %v2545
      %s2547 = scalar_lea.vmem %s1, 704
      %v2548 = vld [vmem:[%s2547] sm:$0xf]
      %v2549 = vld [vmem:[%s2547 + $0x4] sm:$0xf]
      %v2550 = vld [vmem:[%s2547 + $0x8] sm:$0xf]
      %v2551 = vld [vmem:[%s2547 + $0xc] sm:$0xf]
      %v2552 = vld [vmem:[%s2547 + $0x10] sm:$0xf]
      %v2553 = vld [vmem:[%s2547 + $0x14] sm:$0xf]
      %v2554 = vld [vmem:[%s2547 + $0x18] sm:$0xf]
      %v2555 = vld [vmem:[%s2547 + $0x1c] sm:$0xf]
      %v2564 = vunpack.c.l.b16 %v2548
      %v2565 = vunpack.c.l.b16 %v2549
      %v2566 = vunpack.c.l.b16 %v2550
      %v2567 = vunpack.c.l.b16 %v2551
      %v2568 = vunpack.c.l.b16 %v2552
      %v2569 = vunpack.c.l.b16 %v2553
      %v2570 = vunpack.c.l.b16 %v2554
      %v2571 = vunpack.c.l.b16 %v2555
      %v2572 = vpack.c.b16 %v2565, %v2564
      %v2573 = vpack.c.b16 %v2567, %v2566
      %v2574 = vpack.c.b16 %v2569, %v2568
      %v2575 = vpack.c.b16 %v2571, %v2570
      %v2581 = vsel %vm292, %v2546, 0
      %2583 = vmatprep.subr.bf16.mxu0 0
      %2584 = vmatpush1.bf16.msra.mxu0 %v2572
      %2585 = vmatprep.subr.bf16.mxu0 0
      %2586 = vmatpush1.bf16.msra.mxu0 %v2573
      %2587 = vmatprep.subr.bf16.mxu0 0
      %2588 = vmatpush1.bf16.msra.mxu0 %v2574
      %2589 = vmatprep.subr.bf16.mxu0 0
      %2590 = vmatpush1.bf16.msra.mxu0 %v2575
      %2591 = vmatprep.subr.bf16.mxu0 0
      %2592 = vmatpush1.bf16.msra.mxu0 0
      %2593 = vmatprep.subr.bf16.mxu0 0
      %2594 = vmatpush1.bf16.msra.mxu0 0
      %2595 = vmatprep.subr.bf16.mxu0 0
      %2596 = vmatpush1.bf16.msra.mxu0 0
      %2597 = vmatprep.subr.bf16.mxu0 0
      %2598 = vmatpush1.bf16.msra.mxu0 0
      %2599 = vmatprep.subr.bf16.mxu0 0
      %2600 = vmatpush1.bf16.msra.mxu0 0
      %2601 = vmatprep.subr.bf16.mxu0 0
      %2602 = vmatpush1.bf16.msra.mxu0 0
      %2603 = vmatprep.subr.bf16.mxu0 0
      %2604 = vmatpush1.bf16.msra.mxu0 0
      %2605 = vmatprep.subr.bf16.mxu0 0
      %2606 = vmatpush1.bf16.msra.mxu0 0
      %2607 = vmatprep.subr.bf16.mxu0 0
      %2608 = vmatpush1.bf16.msra.mxu0 0
      %2609 = vmatprep.subr.bf16.mxu0 0
      %2610 = vmatpush1.bf16.msra.mxu0 0
      %2611 = vmatprep.subr.bf16.mxu0 0
      %2612 = vmatpush1.bf16.msra.mxu0 0
      %2613 = vmatprep.subr.bf16.mxu0 0
      %2614 = vmatpush1.bf16.msra.mxu0 0
      %2615 = vmatprep.mubr.bf16.mxu0 0
      %2616 = vmatmul.mubr.bf16.gmra.mrb[0].mxu0 %v2581
      %v2617 = vpop.f32.mrb[0].mxu0
      %v2618 = vadd.f32 0.0, %v2617
      %v2619 = vpop.f32.mrb[0].mxu0
      %v2620 = vpop.f32.mrb[0].mxu0
      %v2621 = vpop.f32.mrb[0].mxu0
      %2622 = vdwg.mxu0
      %v2623 = vadd.f32 %v2533, %v2618
      %v2625 = vrot.slane %v2175, 6
      %v2626 = vsel %vm287, %v2535, %v2625
      %v2628 = vsel %vm719, %v2626, 0.0
      %v2629 = vrot.slane %v2628, 4
      %v2630 = vadd.f32 %v2628, %v2629
      %v2631 = vrot.slane %v2630, 2
      %v2632 = vadd.f32 %v2630, %v2631
      %v2633 = vrot.slane %v2632, 1
      %v2634 = vadd.f32 %v2632, %v2633
      %v2635 = vmul.f32 %v2634, 0.015625
      %v2636 = vpack.c.bf16 %v2635, %v2635
      %s2637 = scalar_lea.vmem %s1, 736
      %v2638 = vld [vmem:[%s2637] sm:$0xf]
      %v2639 = vld [vmem:[%s2637 + $0x4] sm:$0xf]
      %v2640 = vld [vmem:[%s2637 + $0x8] sm:$0xf]
      %v2641 = vld [vmem:[%s2637 + $0xc] sm:$0xf]
      %v2642 = vld [vmem:[%s2637 + $0x10] sm:$0xf]
      %v2643 = vld [vmem:[%s2637 + $0x14] sm:$0xf]
      %v2644 = vld [vmem:[%s2637 + $0x18] sm:$0xf]
      %v2645 = vld [vmem:[%s2637 + $0x1c] sm:$0xf]
      %v2654 = vunpack.c.l.b16 %v2638
      %v2655 = vunpack.c.l.b16 %v2639
      %v2656 = vunpack.c.l.b16 %v2640
      %v2657 = vunpack.c.l.b16 %v2641
      %v2658 = vunpack.c.l.b16 %v2642
      %v2659 = vunpack.c.l.b16 %v2643
      %v2660 = vunpack.c.l.b16 %v2644
      %v2661 = vunpack.c.l.b16 %v2645
      %v2662 = vpack.c.b16 %v2655, %v2654
      %v2663 = vpack.c.b16 %v2657, %v2656
      %v2664 = vpack.c.b16 %v2659, %v2658
      %v2665 = vpack.c.b16 %v2661, %v2660
      %v2671 = vsel %vm292, %v2636, 0
      %2673 = vmatprep.subr.bf16.mxu0 0
      %2674 = vmatpush1.bf16.msra.mxu0 %v2662
      %2675 = vmatprep.subr.bf16.mxu0 0
      %2676 = vmatpush1.bf16.msra.mxu0 %v2663
      %2677 = vmatprep.subr.bf16.mxu0 0
      %2678 = vmatpush1.bf16.msra.mxu0 %v2664
      %2679 = vmatprep.subr.bf16.mxu0 0
      %2680 = vmatpush1.bf16.msra.mxu0 %v2665
      %2681 = vmatprep.subr.bf16.mxu0 0
      %2682 = vmatpush1.bf16.msra.mxu0 0
      %2683 = vmatprep.subr.bf16.mxu0 0
      %2684 = vmatpush1.bf16.msra.mxu0 0
      %2685 = vmatprep.subr.bf16.mxu0 0
      %2686 = vmatpush1.bf16.msra.mxu0 0
      %2687 = vmatprep.subr.bf16.mxu0 0
      %2688 = vmatpush1.bf16.msra.mxu0 0
      %2689 = vmatprep.subr.bf16.mxu0 0
      %2690 = vmatpush1.bf16.msra.mxu0 0
      %2691 = vmatprep.subr.bf16.mxu0 0
      %2692 = vmatpush1.bf16.msra.mxu0 0
      %2693 = vmatprep.subr.bf16.mxu0 0
      %2694 = vmatpush1.bf16.msra.mxu0 0
      %2695 = vmatprep.subr.bf16.mxu0 0
      %2696 = vmatpush1.bf16.msra.mxu0 0
      %2697 = vmatprep.subr.bf16.mxu0 0
      %2698 = vmatpush1.bf16.msra.mxu0 0
      %2699 = vmatprep.subr.bf16.mxu0 0
      %2700 = vmatpush1.bf16.msra.mxu0 0
      %2701 = vmatprep.subr.bf16.mxu0 0
      %2702 = vmatpush1.bf16.msra.mxu0 0
      %2703 = vmatprep.subr.bf16.mxu0 0
      %2704 = vmatpush1.bf16.msra.mxu0 0
      %2705 = vmatprep.mubr.bf16.mxu0 0
      %2706 = vmatmul.mubr.bf16.gmra.mrb[0].mxu0 %v2671
      %v2707 = vpop.f32.mrb[0].mxu0
      %v2708 = vadd.f32 0.0, %v2707
      %v2709 = vpop.f32.mrb[0].mxu0
      %v2710 = vpop.f32.mrb[0].mxu0
      %v2711 = vpop.f32.mrb[0].mxu0
      %2712 = vdwg.mxu0
      %v2713 = vadd.f32 %v2623, %v2708
      %s2714 = scalar_lea.vmem %s217, 1344
      %v2715 = vld [vmem:[%s2714] sm:$0xff]
      %v2716 = vld [vmem:[%s2714 + $0x8] sm:$0xff]
      %v2717 = vld [vmem:[%s2714 + $0x10] sm:$0xff]
      %v2718 = vld [vmem:[%s2714 + $0x18] sm:$0xff]
      %v2719 = vld [vmem:[%s2714 + $0x20] sm:$0xff]
      %v2720 = vld [vmem:[%s2714 + $0x28] sm:$0x1f]
      %s2721 = scalar_lea.vmem %s217, 1392
      %v2722 = vld [vmem:[%s2721] sm:$0xff]
      %v2723 = vld [vmem:[%s2721 + $0x8] sm:$0xff]
      %v2724 = vld [vmem:[%s2721 + $0x10] sm:$0xff]
      %v2725 = vld [vmem:[%s2721 + $0x18] sm:$0xff]
      %v2726 = vld [vmem:[%s2721 + $0x20] sm:$0xff]
      %v2727 = vld [vmem:[%s2721 + $0x28] sm:$0x1f]
      %v2728 = vadd.f32 %v2715, %v2722
      %v2729 = vadd.f32 %v2716, %v2723
      %v2730 = vadd.f32 %v2717, %v2724
      %v2731 = vadd.f32 %v2718, %v2725
      %v2732 = vadd.f32 %v2719, %v2726
      %v2733 = vadd.f32 %v2720, %v2727
      %s2734 = scalar_lea.vmem %s217, 1440
      %v2735 = vld [vmem:[%s2734] sm:$0xff]
      %v2736 = vld [vmem:[%s2734 + $0x8] sm:$0xff]
      %v2737 = vld [vmem:[%s2734 + $0x10] sm:$0xff]
      %v2738 = vld [vmem:[%s2734 + $0x18] sm:$0xff]
      %v2739 = vld [vmem:[%s2734 + $0x20] sm:$0xff]
      %v2740 = vld [vmem:[%s2734 + $0x28] sm:$0x1f]
      %v2741 = vadd.f32 %v2728, %v2735
      %v2742 = vadd.f32 %v2729, %v2736
      %v2743 = vadd.f32 %v2730, %v2737
      %v2744 = vadd.f32 %v2731, %v2738
      %v2745 = vadd.f32 %v2732, %v2739
      %v2746 = vadd.f32 %v2733, %v2740
      %s2747 = scalar_lea.vmem %s217, 1488
      %v2748 = vld [vmem:[%s2747] sm:$0xff]
      %v2749 = vld [vmem:[%s2747 + $0x8] sm:$0xff]
      %v2750 = vld [vmem:[%s2747 + $0x10] sm:$0xff]
      %v2751 = vld [vmem:[%s2747 + $0x18] sm:$0xff]
      %v2752 = vld [vmem:[%s2747 + $0x20] sm:$0xff]
      %v2753 = vld [vmem:[%s2747 + $0x28] sm:$0x1f]
      %v2754 = vadd.f32 %v2741, %v2748
      %v2755 = vadd.f32 %v2742, %v2749
      %v2756 = vadd.f32 %v2743, %v2750
      %v2757 = vadd.f32 %v2744, %v2751
      %v2758 = vadd.f32 %v2745, %v2752
      %v2759 = vadd.f32 %v2746, %v2753
      %s2760 = scalar_lea.vmem %s217, 1536
      %v2761 = vld [vmem:[%s2760] sm:$0xff]
      %v2762 = vld [vmem:[%s2760 + $0x8] sm:$0xff]
      %v2763 = vld [vmem:[%s2760 + $0x10] sm:$0xff]
      %v2764 = vld [vmem:[%s2760 + $0x18] sm:$0xff]
      %v2765 = vld [vmem:[%s2760 + $0x20] sm:$0xff]
      %v2766 = vld [vmem:[%s2760 + $0x28] sm:$0x1f]
      %v2767 = vadd.f32 %v2754, %v2761
      %v2768 = vadd.f32 %v2755, %v2762
      %v2769 = vadd.f32 %v2756, %v2763
      %v2770 = vadd.f32 %v2757, %v2764
      %v2771 = vadd.f32 %v2758, %v2765
      %v2772 = vadd.f32 %v2759, %v2766
      %v2773 = vsel %vm267, %v2767, 0.0
      %v2774 = vrot.slane %v2773, 4
      %v2775 = vadd.f32 %v2773, %v2774
      %v2776 = vrot.slane %v2775, 2
      %v2777 = vadd.f32 %v2775, %v2776
      %v2778 = vrot.slane %v2777, 1
      %v2779 = vadd.f32 %v2777, %v2778
      %v2780 = vmul.f32 %v2779, 0.015625
      %v2781 = vpack.c.bf16 %v2780, %v2780
      %s2782 = scalar_lea.vmem %s1, 768
      %v2783 = vld [vmem:[%s2782] sm:$0xf]
      %v2784 = vld [vmem:[%s2782 + $0x4] sm:$0xf]
      %v2785 = vld [vmem:[%s2782 + $0x8] sm:$0xf]
      %v2786 = vld [vmem:[%s2782 + $0xc] sm:$0xf]
      %v2787 = vld [vmem:[%s2782 + $0x10] sm:$0xf]
      %v2788 = vld [vmem:[%s2782 + $0x14] sm:$0xf]
      %v2789 = vld [vmem:[%s2782 + $0x18] sm:$0xf]
      %v2790 = vld [vmem:[%s2782 + $0x1c] sm:$0xf]
      %v2799 = vunpack.c.l.b16 %v2783
      %v2800 = vunpack.c.l.b16 %v2784
      %v2801 = vunpack.c.l.b16 %v2785
      %v2802 = vunpack.c.l.b16 %v2786
      %v2803 = vunpack.c.l.b16 %v2787
      %v2804 = vunpack.c.l.b16 %v2788
      %v2805 = vunpack.c.l.b16 %v2789
      %v2806 = vunpack.c.l.b16 %v2790
      %v2807 = vpack.c.b16 %v2800, %v2799
      %v2808 = vpack.c.b16 %v2802, %v2801
      %v2809 = vpack.c.b16 %v2804, %v2803
      %v2810 = vpack.c.b16 %v2806, %v2805
      %v2816 = vsel %vm292, %v2781, 0
      %2818 = vmatprep.subr.bf16.mxu0 0
      %2819 = vmatpush1.bf16.msra.mxu0 %v2807
      %2820 = vmatprep.subr.bf16.mxu0 0
      %2821 = vmatpush1.bf16.msra.mxu0 %v2808
      %2822 = vmatprep.subr.bf16.mxu0 0
      %2823 = vmatpush1.bf16.msra.mxu0 %v2809
      %2824 = vmatprep.subr.bf16.mxu0 0
      %2825 = vmatpush1.bf16.msra.mxu0 %v2810
      %2826 = vmatprep.subr.bf16.mxu0 0
      %2827 = vmatpush1.bf16.msra.mxu0 0
      %2828 = vmatprep.subr.bf16.mxu0 0
      %2829 = vmatpush1.bf16.msra.mxu0 0
      %2830 = vmatprep.subr.bf16.mxu0 0
      %2831 = vmatpush1.bf16.msra.mxu0 0
      %2832 = vmatprep.subr.bf16.mxu0 0
      %2833 = vmatpush1.bf16.msra.mxu0 0
      %2834 = vmatprep.subr.bf16.mxu0 0
      %2835 = vmatpush1.bf16.msra.mxu0 0
      %2836 = vmatprep.subr.bf16.mxu0 0
      %2837 = vmatpush1.bf16.msra.mxu0 0
      %2838 = vmatprep.subr.bf16.mxu0 0
      %2839 = vmatpush1.bf16.msra.mxu0 0
      %2840 = vmatprep.subr.bf16.mxu0 0
      %2841 = vmatpush1.bf16.msra.mxu0 0
      %2842 = vmatprep.subr.bf16.mxu0 0
      %2843 = vmatpush1.bf16.msra.mxu0 0
      %2844 = vmatprep.subr.bf16.mxu0 0
      %2845 = vmatpush1.bf16.msra.mxu0 0
      %2846 = vmatprep.subr.bf16.mxu0 0
      %2847 = vmatpush1.bf16.msra.mxu0 0
      %2848 = vmatprep.subr.bf16.mxu0 0
      %2849 = vmatpush1.bf16.msra.mxu0 0
      %2850 = vmatprep.mubr.bf16.mxu0 0
      %2851 = vmatmul.mubr.bf16.gmra.mrb[0].mxu0 %v2816
      %v2852 = vpop.f32.mrb[0].mxu0
      %v2853 = vadd.f32 0.0, %v2852
      %v2854 = vpop.f32.mrb[0].mxu0
      %v2855 = vpop.f32.mrb[0].mxu0
      %v2856 = vpop.f32.mrb[0].mxu0
      %2857 = vdwg.mxu0
      %v2858 = vadd.f32 %v2713, %v2853
      %v2861 = vrot.slane %v2767, 6
      %v2862 = vrot.slane %v2768, 6
      %v2863 = vsel %vm287, %v2861, %v2862
      %v2865 = vsel %vm292, %v2863, 0.0
      %v2866 = vrot.slane %v2865, 4
      %v2867 = vadd.f32 %v2865, %v2866
      %v2868 = vrot.slane %v2867, 2
      %v2869 = vadd.f32 %v2867, %v2868
      %v2870 = vrot.slane %v2869, 1
      %v2871 = vadd.f32 %v2869, %v2870
      %v2872 = vmul.f32 %v2871, 0.015625
      %v2873 = vpack.c.bf16 %v2872, %v2872
      %s2874 = scalar_lea.vmem %s1, 800
      %v2875 = vld [vmem:[%s2874] sm:$0xf]
      %v2876 = vld [vmem:[%s2874 + $0x4] sm:$0xf]
      %v2877 = vld [vmem:[%s2874 + $0x8] sm:$0xf]
      %v2878 = vld [vmem:[%s2874 + $0xc] sm:$0xf]
      %v2879 = vld [vmem:[%s2874 + $0x10] sm:$0xf]
      %v2880 = vld [vmem:[%s2874 + $0x14] sm:$0xf]
      %v2881 = vld [vmem:[%s2874 + $0x18] sm:$0xf]
      %v2882 = vld [vmem:[%s2874 + $0x1c] sm:$0xf]
      %v2891 = vunpack.c.l.b16 %v2875
      %v2892 = vunpack.c.l.b16 %v2876
      %v2893 = vunpack.c.l.b16 %v2877
      %v2894 = vunpack.c.l.b16 %v2878
      %v2895 = vunpack.c.l.b16 %v2879
      %v2896 = vunpack.c.l.b16 %v2880
      %v2897 = vunpack.c.l.b16 %v2881
      %v2898 = vunpack.c.l.b16 %v2882
      %v2899 = vpack.c.b16 %v2892, %v2891
      %v2900 = vpack.c.b16 %v2894, %v2893
      %v2901 = vpack.c.b16 %v2896, %v2895
      %v2902 = vpack.c.b16 %v2898, %v2897
      %v2908 = vsel %vm292, %v2873, 0
      %2910 = vmatprep.subr.bf16.mxu0 0
      %2911 = vmatpush1.bf16.msra.mxu0 %v2899
      %2912 = vmatprep.subr.bf16.mxu0 0
      %2913 = vmatpush1.bf16.msra.mxu0 %v2900
      %2914 = vmatprep.subr.bf16.mxu0 0
      %2915 = vmatpush1.bf16.msra.mxu0 %v2901
      %2916 = vmatprep.subr.bf16.mxu0 0
      %2917 = vmatpush1.bf16.msra.mxu0 %v2902
      %2918 = vmatprep.subr.bf16.mxu0 0
      %2919 = vmatpush1.bf16.msra.mxu0 0
      %2920 = vmatprep.subr.bf16.mxu0 0
      %2921 = vmatpush1.bf16.msra.mxu0 0
      %2922 = vmatprep.subr.bf16.mxu0 0
      %2923 = vmatpush1.bf16.msra.mxu0 0
      %2924 = vmatprep.subr.bf16.mxu0 0
      %2925 = vmatpush1.bf16.msra.mxu0 0
      %2926 = vmatprep.subr.bf16.mxu0 0
      %2927 = vmatpush1.bf16.msra.mxu0 0
      %2928 = vmatprep.subr.bf16.mxu0 0
      %2929 = vmatpush1.bf16.msra.mxu0 0
      %2930 = vmatprep.subr.bf16.mxu0 0
      %2931 = vmatpush1.bf16.msra.mxu0 0
      %2932 = vmatprep.subr.bf16.mxu0 0
      %2933 = vmatpush1.bf16.msra.mxu0 0
      %2934 = vmatprep.subr.bf16.mxu0 0
      %2935 = vmatpush1.bf16.msra.mxu0 0
      %2936 = vmatprep.subr.bf16.mxu0 0
      %2937 = vmatpush1.bf16.msra.mxu0 0
      %2938 = vmatprep.subr.bf16.mxu0 0
      %2939 = vmatpush1.bf16.msra.mxu0 0
      %2940 = vmatprep.subr.bf16.mxu0 0
      %2941 = vmatpush1.bf16.msra.mxu0 0
      %2942 = vmatprep.mubr.bf16.mxu0 0
      %2943 = vmatmul.mubr.bf16.gmra.mrb[0].mxu0 %v2908
      %v2944 = vpop.f32.mrb[0].mxu0
      %v2945 = vadd.f32 0.0, %v2944
      %v2946 = vpop.f32.mrb[0].mxu0
      %v2947 = vpop.f32.mrb[0].mxu0
      %v2948 = vpop.f32.mrb[0].mxu0
      %2949 = vdwg.mxu0
      %v2950 = vadd.f32 %v2858, %v2945
      %v2952 = vrot.slane %v2769, 6
      %v2953 = vsel %vm287, %v2862, %v2952
      %v2955 = vsel %vm292, %v2953, 0.0
      %v2956 = vrot.slane %v2955, 4
      %v2957 = vadd.f32 %v2955, %v2956
      %v2958 = vrot.slane %v2957, 2
      %v2959 = vadd.f32 %v2957, %v2958
      %v2960 = vrot.slane %v2959, 1
      %v2961 = vadd.f32 %v2959, %v2960
      %v2962 = vmul.f32 %v2961, 0.015625
      %v2963 = vpack.c.bf16 %v2962, %v2962
      %s2964 = scalar_lea.vmem %s1, 832
      %v2965 = vld [vmem:[%s2964] sm:$0xf]
      %v2966 = vld [vmem:[%s2964 + $0x4] sm:$0xf]
      %v2967 = vld [vmem:[%s2964 + $0x8] sm:$0xf]
      %v2968 = vld [vmem:[%s2964 + $0xc] sm:$0xf]
      %v2969 = vld [vmem:[%s2964 + $0x10] sm:$0xf]
      %v2970 = vld [vmem:[%s2964 + $0x14] sm:$0xf]
      %v2971 = vld [vmem:[%s2964 + $0x18] sm:$0xf]
      %v2972 = vld [vmem:[%s2964 + $0x1c] sm:$0xf]
      %v2981 = vunpack.c.l.b16 %v2965
      %v2982 = vunpack.c.l.b16 %v2966
      %v2983 = vunpack.c.l.b16 %v2967
      %v2984 = vunpack.c.l.b16 %v2968
      %v2985 = vunpack.c.l.b16 %v2969
      %v2986 = vunpack.c.l.b16 %v2970
      %v2987 = vunpack.c.l.b16 %v2971
      %v2988 = vunpack.c.l.b16 %v2972
      %v2989 = vpack.c.b16 %v2982, %v2981
      %v2990 = vpack.c.b16 %v2984, %v2983
      %v2991 = vpack.c.b16 %v2986, %v2985
      %v2992 = vpack.c.b16 %v2988, %v2987
      %v2998 = vsel %vm292, %v2963, 0
      %3000 = vmatprep.subr.bf16.mxu0 0
      %3001 = vmatpush1.bf16.msra.mxu0 %v2989
      %3002 = vmatprep.subr.bf16.mxu0 0
      %3003 = vmatpush1.bf16.msra.mxu0 %v2990
      %3004 = vmatprep.subr.bf16.mxu0 0
      %3005 = vmatpush1.bf16.msra.mxu0 %v2991
      %3006 = vmatprep.subr.bf16.mxu0 0
      %3007 = vmatpush1.bf16.msra.mxu0 %v2992
      %3008 = vmatprep.subr.bf16.mxu0 0
      %3009 = vmatpush1.bf16.msra.mxu0 0
      %3010 = vmatprep.subr.bf16.mxu0 0
      %3011 = vmatpush1.bf16.msra.mxu0 0
      %3012 = vmatprep.subr.bf16.mxu0 0
      %3013 = vmatpush1.bf16.msra.mxu0 0
      %3014 = vmatprep.subr.bf16.mxu0 0
      %3015 = vmatpush1.bf16.msra.mxu0 0
      %3016 = vmatprep.subr.bf16.mxu0 0
      %3017 = vmatpush1.bf16.msra.mxu0 0
      %3018 = vmatprep.subr.bf16.mxu0 0
      %3019 = vmatpush1.bf16.msra.mxu0 0
      %3020 = vmatprep.subr.bf16.mxu0 0
      %3021 = vmatpush1.bf16.msra.mxu0 0
      %3022 = vmatprep.subr.bf16.mxu0 0
      %3023 = vmatpush1.bf16.msra.mxu0 0
      %3024 = vmatprep.subr.bf16.mxu0 0
      %3025 = vmatpush1.bf16.msra.mxu0 0
      %3026 = vmatprep.subr.bf16.mxu0 0
      %3027 = vmatpush1.bf16.msra.mxu0 0
      %3028 = vmatprep.subr.bf16.mxu0 0
      %3029 = vmatpush1.bf16.msra.mxu0 0
      %3030 = vmatprep.subr.bf16.mxu0 0
      %3031 = vmatpush1.bf16.msra.mxu0 0
      %3032 = vmatprep.mubr.bf16.mxu0 0
      %3033 = vmatmul.mubr.bf16.gmra.mrb[0].mxu0 %v2998
      %v3034 = vpop.f32.mrb[0].mxu0
      %v3035 = vadd.f32 0.0, %v3034
      %v3036 = vpop.f32.mrb[0].mxu0
      %v3037 = vpop.f32.mrb[0].mxu0
      %v3038 = vpop.f32.mrb[0].mxu0
      %3039 = vdwg.mxu0
      %v3040 = vadd.f32 %v2950, %v3035
      %v3042 = vrot.slane %v2770, 6
      %v3043 = vsel %vm287, %v2952, %v3042
      %v3045 = vsel %vm292, %v3043, 0.0
      %v3046 = vrot.slane %v3045, 4
      %v3047 = vadd.f32 %v3045, %v3046
      %v3048 = vrot.slane %v3047, 2
      %v3049 = vadd.f32 %v3047, %v3048
      %v3050 = vrot.slane %v3049, 1
      %v3051 = vadd.f32 %v3049, %v3050
      %v3052 = vmul.f32 %v3051, 0.015625
      %v3053 = vpack.c.bf16 %v3052, %v3052
      %s3054 = scalar_lea.vmem %s1, 864
      %v3055 = vld [vmem:[%s3054] sm:$0xf]
      %v3056 = vld [vmem:[%s3054 + $0x4] sm:$0xf]
      %v3057 = vld [vmem:[%s3054 + $0x8] sm:$0xf]
      %v3058 = vld [vmem:[%s3054 + $0xc] sm:$0xf]
      %v3059 = vld [vmem:[%s3054 + $0x10] sm:$0xf]
      %v3060 = vld [vmem:[%s3054 + $0x14] sm:$0xf]
      %v3061 = vld [vmem:[%s3054 + $0x18] sm:$0xf]
      %v3062 = vld [vmem:[%s3054 + $0x1c] sm:$0xf]
      %v3071 = vunpack.c.l.b16 %v3055
      %v3072 = vunpack.c.l.b16 %v3056
      %v3073 = vunpack.c.l.b16 %v3057
      %v3074 = vunpack.c.l.b16 %v3058
      %v3075 = vunpack.c.l.b16 %v3059
      %v3076 = vunpack.c.l.b16 %v3060
      %v3077 = vunpack.c.l.b16 %v3061
      %v3078 = vunpack.c.l.b16 %v3062
      %v3079 = vpack.c.b16 %v3072, %v3071
      %v3080 = vpack.c.b16 %v3074, %v3073
      %v3081 = vpack.c.b16 %v3076, %v3075
      %v3082 = vpack.c.b16 %v3078, %v3077
      %v3088 = vsel %vm292, %v3053, 0
      %3090 = vmatprep.subr.bf16.mxu0 0
      %3091 = vmatpush1.bf16.msra.mxu0 %v3079
      %3092 = vmatprep.subr.bf16.mxu0 0
      %3093 = vmatpush1.bf16.msra.mxu0 %v3080
      %3094 = vmatprep.subr.bf16.mxu0 0
      %3095 = vmatpush1.bf16.msra.mxu0 %v3081
      %3096 = vmatprep.subr.bf16.mxu0 0
      %3097 = vmatpush1.bf16.msra.mxu0 %v3082
      %3098 = vmatprep.subr.bf16.mxu0 0
      %3099 = vmatpush1.bf16.msra.mxu0 0
      %3100 = vmatprep.subr.bf16.mxu0 0
      %3101 = vmatpush1.bf16.msra.mxu0 0
      %3102 = vmatprep.subr.bf16.mxu0 0
      %3103 = vmatpush1.bf16.msra.mxu0 0
      %3104 = vmatprep.subr.bf16.mxu0 0
      %3105 = vmatpush1.bf16.msra.mxu0 0
      %3106 = vmatprep.subr.bf16.mxu0 0
      %3107 = vmatpush1.bf16.msra.mxu0 0
      %3108 = vmatprep.subr.bf16.mxu0 0
      %3109 = vmatpush1.bf16.msra.mxu0 0
      %3110 = vmatprep.subr.bf16.mxu0 0
      %3111 = vmatpush1.bf16.msra.mxu0 0
      %3112 = vmatprep.subr.bf16.mxu0 0
      %3113 = vmatpush1.bf16.msra.mxu0 0
      %3114 = vmatprep.subr.bf16.mxu0 0
      %3115 = vmatpush1.bf16.msra.mxu0 0
      %3116 = vmatprep.subr.bf16.mxu0 0
      %3117 = vmatpush1.bf16.msra.mxu0 0
      %3118 = vmatprep.subr.bf16.mxu0 0
      %3119 = vmatpush1.bf16.msra.mxu0 0
      %3120 = vmatprep.subr.bf16.mxu0 0
      %3121 = vmatpush1.bf16.msra.mxu0 0
      %3122 = vmatprep.mubr.bf16.mxu0 0
      %3123 = vmatmul.mubr.bf16.gmra.mrb[0].mxu0 %v3088
      %v3124 = vpop.f32.mrb[0].mxu0
      %v3125 = vadd.f32 0.0, %v3124
      %v3126 = vpop.f32.mrb[0].mxu0
      %v3127 = vpop.f32.mrb[0].mxu0
      %v3128 = vpop.f32.mrb[0].mxu0
      %3129 = vdwg.mxu0
      %v3130 = vadd.f32 %v3040, %v3125
      %v3132 = vrot.slane %v2771, 6
      %v3133 = vsel %vm287, %v3042, %v3132
      %v3135 = vsel %vm292, %v3133, 0.0
      %v3136 = vrot.slane %v3135, 4
      %v3137 = vadd.f32 %v3135, %v3136
      %v3138 = vrot.slane %v3137, 2
      %v3139 = vadd.f32 %v3137, %v3138
      %v3140 = vrot.slane %v3139, 1
      %v3141 = vadd.f32 %v3139, %v3140
      %v3142 = vmul.f32 %v3141, 0.015625
      %v3143 = vpack.c.bf16 %v3142, %v3142
      %s3144 = scalar_lea.vmem %s1, 896
      %v3145 = vld [vmem:[%s3144] sm:$0xf]
      %v3146 = vld [vmem:[%s3144 + $0x4] sm:$0xf]
      %v3147 = vld [vmem:[%s3144 + $0x8] sm:$0xf]
      %v3148 = vld [vmem:[%s3144 + $0xc] sm:$0xf]
      %v3149 = vld [vmem:[%s3144 + $0x10] sm:$0xf]
      %v3150 = vld [vmem:[%s3144 + $0x14] sm:$0xf]
      %v3151 = vld [vmem:[%s3144 + $0x18] sm:$0xf]
      %v3152 = vld [vmem:[%s3144 + $0x1c] sm:$0xf]
      %v3161 = vunpack.c.l.b16 %v3145
      %v3162 = vunpack.c.l.b16 %v3146
      %v3163 = vunpack.c.l.b16 %v3147
      %v3164 = vunpack.c.l.b16 %v3148
      %v3165 = vunpack.c.l.b16 %v3149
      %v3166 = vunpack.c.l.b16 %v3150
      %v3167 = vunpack.c.l.b16 %v3151
      %v3168 = vunpack.c.l.b16 %v3152
      %v3169 = vpack.c.b16 %v3162, %v3161
      %v3170 = vpack.c.b16 %v3164, %v3163
      %v3171 = vpack.c.b16 %v3166, %v3165
      %v3172 = vpack.c.b16 %v3168, %v3167
      %v3178 = vsel %vm292, %v3143, 0
      %3180 = vmatprep.subr.bf16.mxu0 0
      %3181 = vmatpush1.bf16.msra.mxu0 %v3169
      %3182 = vmatprep.subr.bf16.mxu0 0
      %3183 = vmatpush1.bf16.msra.mxu0 %v3170
      %3184 = vmatprep.subr.bf16.mxu0 0
      %3185 = vmatpush1.bf16.msra.mxu0 %v3171
      %3186 = vmatprep.subr.bf16.mxu0 0
      %3187 = vmatpush1.bf16.msra.mxu0 %v3172
      %3188 = vmatprep.subr.bf16.mxu0 0
      %3189 = vmatpush1.bf16.msra.mxu0 0
      %3190 = vmatprep.subr.bf16.mxu0 0
      %3191 = vmatpush1.bf16.msra.mxu0 0
      %3192 = vmatprep.subr.bf16.mxu0 0
      %3193 = vmatpush1.bf16.msra.mxu0 0
      %3194 = vmatprep.subr.bf16.mxu0 0
      %3195 = vmatpush1.bf16.msra.mxu0 0
      %3196 = vmatprep.subr.bf16.mxu0 0
      %3197 = vmatpush1.bf16.msra.mxu0 0
      %3198 = vmatprep.subr.bf16.mxu0 0
      %3199 = vmatpush1.bf16.msra.mxu0 0
      %3200 = vmatprep.subr.bf16.mxu0 0
      %3201 = vmatpush1.bf16.msra.mxu0 0
      %3202 = vmatprep.subr.bf16.mxu0 0
      %3203 = vmatpush1.bf16.msra.mxu0 0
      %3204 = vmatprep.subr.bf16.mxu0 0
      %3205 = vmatpush1.bf16.msra.mxu0 0
      %3206 = vmatprep.subr.bf16.mxu0 0
      %3207 = vmatpush1.bf16.msra.mxu0 0
      %3208 = vmatprep.subr.bf16.mxu0 0
      %3209 = vmatpush1.bf16.msra.mxu0 0
      %3210 = vmatprep.subr.bf16.mxu0 0
      %3211 = vmatpush1.bf16.msra.mxu0 0
      %3212 = vmatprep.mubr.bf16.mxu0 0
      %3213 = vmatmul.mubr.bf16.gmra.mrb[0].mxu0 %v3178
      %v3214 = vpop.f32.mrb[0].mxu0
      %v3215 = vadd.f32 0.0, %v3214
      %v3216 = vpop.f32.mrb[0].mxu0
      %v3217 = vpop.f32.mrb[0].mxu0
      %v3218 = vpop.f32.mrb[0].mxu0
      %3219 = vdwg.mxu0
      %v3220 = vadd.f32 %v3130, %v3215
      %v3222 = vrot.slane %v2772, 6
      %v3223 = vsel %vm287, %v3132, %v3222
      %v3225 = vsel %vm719, %v3223, 0.0
      %v3226 = vrot.slane %v3225, 4
      %v3227 = vadd.f32 %v3225, %v3226
      %v3228 = vrot.slane %v3227, 2
      %v3229 = vadd.f32 %v3227, %v3228
      %v3230 = vrot.slane %v3229, 1
      %v3231 = vadd.f32 %v3229, %v3230
      %v3232 = vmul.f32 %v3231, 0.015625
      %v3233 = vpack.c.bf16 %v3232, %v3232
      %s3234 = scalar_lea.vmem %s1, 928
      %v3235 = vld [vmem:[%s3234] sm:$0xf]
      %v3236 = vld [vmem:[%s3234 + $0x4] sm:$0xf]
      %v3237 = vld [vmem:[%s3234 + $0x8] sm:$0xf]
      %v3238 = vld [vmem:[%s3234 + $0xc] sm:$0xf]
      %v3239 = vld [vmem:[%s3234 + $0x10] sm:$0xf]
      %v3240 = vld [vmem:[%s3234 + $0x14] sm:$0xf]
      %v3241 = vld [vmem:[%s3234 + $0x18] sm:$0xf]
      %v3242 = vld [vmem:[%s3234 + $0x1c] sm:$0xf]
      %v3251 = vunpack.c.l.b16 %v3235
      %v3252 = vunpack.c.l.b16 %v3236
      %v3253 = vunpack.c.l.b16 %v3237
      %v3254 = vunpack.c.l.b16 %v3238
      %v3255 = vunpack.c.l.b16 %v3239
      %v3256 = vunpack.c.l.b16 %v3240
      %v3257 = vunpack.c.l.b16 %v3241
      %v3258 = vunpack.c.l.b16 %v3242
      %v3259 = vpack.c.b16 %v3252, %v3251
      %v3260 = vpack.c.b16 %v3254, %v3253
      %v3261 = vpack.c.b16 %v3256, %v3255
      %v3262 = vpack.c.b16 %v3258, %v3257
      %v3268 = vsel %vm292, %v3233, 0
      %3270 = vmatprep.subr.bf16.mxu0 0
      %3271 = vmatpush1.bf16.msra.mxu0 %v3259
      %3272 = vmatprep.subr.bf16.mxu0 0
      %3273 = vmatpush1.bf16.msra.mxu0 %v3260
      %3274 = vmatprep.subr.bf16.mxu0 0
      %3275 = vmatpush1.bf16.msra.mxu0 %v3261
      %3276 = vmatprep.subr.bf16.mxu0 0
      %3277 = vmatpush1.bf16.msra.mxu0 %v3262
      %3278 = vmatprep.subr.bf16.mxu0 0
      %3279 = vmatpush1.bf16.msra.mxu0 0
      %3280 = vmatprep.subr.bf16.mxu0 0
      %3281 = vmatpush1.bf16.msra.mxu0 0
      %3282 = vmatprep.subr.bf16.mxu0 0
      %3283 = vmatpush1.bf16.msra.mxu0 0
      %3284 = vmatprep.subr.bf16.mxu0 0
      %3285 = vmatpush1.bf16.msra.mxu0 0
      %3286 = vmatprep.subr.bf16.mxu0 0
      %3287 = vmatpush1.bf16.msra.mxu0 0
      %3288 = vmatprep.subr.bf16.mxu0 0
      %3289 = vmatpush1.bf16.msra.mxu0 0
      %3290 = vmatprep.subr.bf16.mxu0 0
      %3291 = vmatpush1.bf16.msra.mxu0 0
      %3292 = vmatprep.subr.bf16.mxu0 0
      %3293 = vmatpush1.bf16.msra.mxu0 0
      %3294 = vmatprep.subr.bf16.mxu0 0
      %3295 = vmatpush1.bf16.msra.mxu0 0
      %3296 = vmatprep.subr.bf16.mxu0 0
      %3297 = vmatpush1.bf16.msra.mxu0 0
      %3298 = vmatprep.subr.bf16.mxu0 0
      %3299 = vmatpush1.bf16.msra.mxu0 0
      %3300 = vmatprep.subr.bf16.mxu0 0
      %3301 = vmatpush1.bf16.msra.mxu0 0
      %3302 = vmatprep.mubr.bf16.mxu0 0
      %3303 = vmatmul.mubr.bf16.gmra.mrb[0].mxu0 %v3268
      %v3304 = vpop.f32.mrb[0].mxu0
      %v3305 = vadd.f32 0.0, %v3304
      %v3306 = vpop.f32.mrb[0].mxu0
      %v3307 = vpop.f32.mrb[0].mxu0
      %v3308 = vpop.f32.mrb[0].mxu0
      %3309 = vdwg.mxu0
      %v3310 = vadd.f32 %v3220, %v3305
      %v3311 = vld [vmem:[%s2] sm:$0x1]
      %v3312 = vadd.f32 %v3310, %v3311
      %v3313 = vmax.f32 %v3312, 0.0
      %v3314 = vpack.c.bf16 %v3313, %v3313
      %v3315 = vld [vmem:[%s3] sm:$0xf]
      %v3316 = vld [vmem:[%s3 + $0x4] sm:$0xf]
      %v3317 = vld [vmem:[%s3 + $0x8] sm:$0xf]
      %v3318 = vld [vmem:[%s3 + $0xc] sm:$0xf]
      %v3319 = vld [vmem:[%s3 + $0x10] sm:$0xf]
      %v3320 = vld [vmem:[%s3 + $0x14] sm:$0xf]
      %v3321 = vld [vmem:[%s3 + $0x18] sm:$0xf]
      %v3322 = vld [vmem:[%s3 + $0x1c] sm:$0xf]
      %v3323 = vld [vmem:[%s3 + $0x20] sm:$0xf]
      %v3324 = vld [vmem:[%s3 + $0x24] sm:$0xf]
      %v3325 = vld [vmem:[%s3 + $0x28] sm:$0xf]
      %v3326 = vld [vmem:[%s3 + $0x2c] sm:$0xf]
      %v3327 = vld [vmem:[%s3 + $0x30] sm:$0xf]
      %v3328 = vld [vmem:[%s3 + $0x34] sm:$0xf]
      %v3329 = vld [vmem:[%s3 + $0x38] sm:$0xf]
      %v3330 = vld [vmem:[%s3 + $0x3c] sm:$0xf]
      %v3331 = vld [vmem:[%s4] sm:$0x1]
      %v3348 = vunpack.c.l.b16 %v3315
      %v3349 = vunpack.c.l.b16 %v3316
      %v3350 = vunpack.c.l.b16 %v3317
      %v3351 = vunpack.c.l.b16 %v3318
      %v3352 = vunpack.c.l.b16 %v3319
      %v3353 = vunpack.c.l.b16 %v3320
      %v3354 = vunpack.c.l.b16 %v3321
      %v3355 = vunpack.c.l.b16 %v3322
      %v3356 = vunpack.c.l.b16 %v3323
      %v3357 = vunpack.c.l.b16 %v3324
      %v3358 = vunpack.c.l.b16 %v3325
      %v3359 = vunpack.c.l.b16 %v3326
      %v3360 = vunpack.c.l.b16 %v3327
      %v3361 = vunpack.c.l.b16 %v3328
      %v3362 = vunpack.c.l.b16 %v3329
      %v3363 = vunpack.c.l.b16 %v3330
      %v3364 = vpack.c.b16 %v3349, %v3348
      %v3365 = vpack.c.b16 %v3351, %v3350
      %v3366 = vpack.c.b16 %v3353, %v3352
      %v3367 = vpack.c.b16 %v3355, %v3354
      %v3368 = vpack.c.b16 %v3357, %v3356
      %v3369 = vpack.c.b16 %v3359, %v3358
      %v3370 = vpack.c.b16 %v3361, %v3360
      %v3371 = vpack.c.b16 %v3363, %v3362
      %3380 = vmatprep.subr.bf16.mxu0 0
      %3381 = vmatpush1.bf16.msra.mxu0 %v3364
      %3382 = vmatprep.subr.bf16.mxu0 0
      %3383 = vmatpush1.bf16.msra.mxu0 %v3365
      %3384 = vmatprep.subr.bf16.mxu0 0
      %3385 = vmatpush1.bf16.msra.mxu0 %v3366
      %3386 = vmatprep.subr.bf16.mxu0 0
      %3387 = vmatpush1.bf16.msra.mxu0 %v3367
      %3388 = vmatprep.subr.bf16.mxu0 0
      %3389 = vmatpush1.bf16.msra.mxu0 %v3368
      %3390 = vmatprep.subr.bf16.mxu0 0
      %3391 = vmatpush1.bf16.msra.mxu0 %v3369
      %3392 = vmatprep.subr.bf16.mxu0 0
      %3393 = vmatpush1.bf16.msra.mxu0 %v3370
      %3394 = vmatprep.subr.bf16.mxu0 0
      %3395 = vmatpush1.bf16.msra.mxu0 %v3371
      %3396 = vmatprep.subr.bf16.mxu0 0
      %3397 = vmatpush1.bf16.msra.mxu0 0
      %3398 = vmatprep.subr.bf16.mxu0 0
      %3399 = vmatpush1.bf16.msra.mxu0 0
      %3400 = vmatprep.subr.bf16.mxu0 0
      %3401 = vmatpush1.bf16.msra.mxu0 0
      %3402 = vmatprep.subr.bf16.mxu0 0
      %3403 = vmatpush1.bf16.msra.mxu0 0
      %3404 = vmatprep.subr.bf16.mxu0 0
      %3405 = vmatpush1.bf16.msra.mxu0 0
      %3406 = vmatprep.subr.bf16.mxu0 0
      %3407 = vmatpush1.bf16.msra.mxu0 0
      %3408 = vmatprep.subr.bf16.mxu0 0
      %3409 = vmatpush1.bf16.msra.mxu0 0
      %3410 = vmatprep.subr.bf16.mxu0 0
      %3411 = vmatpush1.bf16.msra.mxu0 0
      %3412 = vmatprep.mubr.bf16.mxu0 0
      %3413 = vmatmul.mubr.bf16.gmra.mrb[0].mxu0 %v3314
      %v3414 = vpop.f32.mrb[0].mxu0
      %v3415 = vadd.f32 %v3331, %v3414
      %v3416 = vpop.f32.mrb[0].mxu0
      %v3417 = vpop.f32.mrb[0].mxu0
      %v3418 = vpop.f32.mrb[0].mxu0
      %3419 = vdwg.mxu0
      %3420 = vst [vmem:[%s220] sm:$0x1] %v3415
      %p3421 = scmp.lt.s32.totalorder %s16, 1
      %s3422 = scalar_select %p3421, %s16, 1
      %s3423 = scalar_lea.vmem %s5, %s3422
      // Predicated region
      $region41: #{full_image_encoder.1} parent=39 // pred_check
        %p3424 = pneg %p144
      $region42: #{full_image_encoder.1} parent=39 // pred_check_branch
        %3426 = sbr.rel (%p3424) target = $region44
      $region43: #{full_image_encoder.1} parent=39 // pred_region
        _
      $region44: #{full_image_encoder.1} parent=39 // pred_fallthru
        _
    $region40: #{full_image_encoder.1} parent=5 // pred_fallthru
      _
    %p3427 = scmp.le.s32.totalorder 2, %s11
    // Predicated region
    $region45: #{full_image_encoder.1} parent=5 // pred_check
      %p3428 = pneg %p3427
    $region46: #{full_image_encoder.1} parent=5 // pred_check_branch
      %3430 = sbr.rel (%p3428) target = $region48
    $region47: #{full_image_encoder.1} parent=5 // pred_region
      %s3431 = ssub.s32 %s11, 2
      // Predicated region
      $region49: #{full_image_encoder.1} parent=47 // pred_check
        %p3432 = pneg %p150
      $region50: #{full_image_encoder.1} parent=47 // pred_check_branch
        %3434 = sbr.rel (%p3432) target = $region52
      $region51: #{full_image_encoder.1} parent=47 // pred_region
        %p3435 = scmp.lt.s32.totalorder %s17, 1
        %s3436 = scalar_select %p3435, %s17, 1
        %s3437 = scalar_lea.vmem %s5, %s3436
      $region52: #{full_image_encoder.1} parent=47 // pred_fallthru
        _
    $region48: #{full_image_encoder.1} parent=5 // pred_fallthru
      _
  $region6: #{full_image_encoder.1} parent=0 // loop_footer
    %s15 = sadd.s32 1, %s11
  $region7: #{full_image_encoder.1} parent=0 // loop_footer_branch
    %10 = sbr.rel target = $region3
  $region8: #{full_image_encoder.1} parent=0 // loop_exit
    _

</llo_original>
